<compile_context>
chip_gen: v7x
topology: tpu7x:2x2x1
jax: 0.10.0
libtpu: 0.0.40
codegen_flags: <defaults>
</compile_context>

<pallas_src>
import jax
import jax.numpy as jnp
from jax.experimental import pallas as pl
from jax.experimental.pallas import tpu as pltpu

EPS_RMS = 1e-6


# --------------------------------------------------------------------------
# Small helpers
# --------------------------------------------------------------------------

def _bytes(shape, dtype):
    n = 1
    for d in shape:
        n *= int(d)
    return n * jnp.dtype(dtype).itemsize


def _mosaic_params(dimension_semantics, vmem_need_bytes):
    """CompilerParams with an explicit scoped-VMEM budget.

    The budget is sized from the actual block + scratch + double-buffer
    footprint (review item), with a 32 MiB floor (== v6e/v7x default) so the
    small test shapes stay on the default budget.
    NOTE: on v7x (64 MiB physical VMEM/TC) re-derive tile sizes if this value
    approaches ~56 MiB instead of just raising it.
    """
    limit = int(max(vmem_need_bytes + (8 << 20), 32 << 20))
    return pltpu.CompilerParams(dimension_semantics=dimension_semantics,
                                vmem_limit_bytes=limit)


def _rope_apply(x, cos, sin_fwd, sin_bwd):
    """Interleaved-pair RoPE on a [T, W] f32 tile (W = heads_per_group * Dh).

    out[2i]   = x[2i]   * cos_i - x[2i+1] * sin_i
    out[2i+1] = x[2i+1] * cos_i + x[2i]   * sin_i
    sin_fwd / sin_bwd are pre-signed and parity-masked in the wrapper, so the
    kernel needs no iota / mod / select: two XLU lane rotations + FMAs.
    """
    w = x.shape[-1]
    fwd = pltpu.roll(x, w - 1, 1)   # fwd[j] = x[(j + 1) % w]
    bwd = pltpu.roll(x, 1, 1)       # bwd[j] = x[(j - 1) % w]
    return x * cos + fwd * sin_fwd + bwd * sin_bwd


# --------------------------------------------------------------------------
# Kernel 1: sa_norm + grouped-head QKV projection + RoPE
# grid = (B, S//ts, G); G (head groups of N>=256) innermost so the normed
# activation scratch is computed once per token tile and reused.
# --------------------------------------------------------------------------

def _qkv_rope_kernel(x_ref, gw_ref, wq_ref, wk_ref, wv_ref,
                     cos_ref, sfw_ref, sbw_ref, q_ref, k_ref, v_ref, xn_sc):
    g = pl.program_id(2)

    @pl.when(g == 0)
    def _():
        x = x_ref[0]                                        # [ts, D] f32
        ms = jnp.mean(x * x, axis=-1, keepdims=True)
        xn = x * jax.lax.rsqrt(ms + EPS_RMS) * gw_ref[...]  # RMSNorm in f32
        xn_sc[...] = xn.astype(jnp.bfloat16)

    xn = xn_sc[...]                                         # [ts, D] bf16
    cos = cos_ref[...]                                      # [ts, ng] f32
    sfw = sfw_ref[...]
    sbw = sbw_ref[...]
    q = jnp.dot(xn, wq_ref[...], preferred_element_type=jnp.float32)
    k = jnp.dot(xn, wk_ref[...], preferred_element_type=jnp.float32)
    v = jnp.dot(xn, wv_ref[...], preferred_element_type=jnp.float32)
    q_ref[0] = _rope_apply(q, cos, sfw, sbw).astype(jnp.bfloat16)
    k_ref[0] = _rope_apply(k, cos, sfw, sbw).astype(jnp.bfloat16)
    v_ref[0] = v.astype(jnp.bfloat16)


def fused_rmsnorm_qkv_rope(x, sa_norm_w, wq, wk, wv, cos, sin_fwd, sin_bwd,
                           head_dim, *, seq_tile=512, min_n=256):
    B, S, D = x.shape
    HD = wq.shape[1]
    H = HD // head_dim
    ts = min(S, seq_tile)
    assert S % ts == 0, "seq_len must be divisible by the seq tile"
    # Group heads so each MXU matmul has N >= 256 (v6e/v7x 256-wide MXU).
    hg = max(1, min(H, min_n // head_dim))
    while H % hg:
        hg -= 1
    ng = hg * head_dim
    G = HD // ng

    out_sd = jax.ShapeDtypeStruct((B, S, HD), jnp.bfloat16)
    qkv_spec = pl.BlockSpec((1, ts, ng), lambda b, si, g: (b, si, g))
    rope_spec = pl.BlockSpec((ts, ng), lambda b, si, g: (si, g))
    w_spec = pl.BlockSpec((D, ng), lambda b, si, g: (0, g))

    vmem_need = (2 * _bytes((ts, D), jnp.float32)
                 + 2 * _bytes((1, D), jnp.float32)
                 + 6 * _bytes((D, ng), jnp.bfloat16)
                 + 6 * _bytes((ts, ng), jnp.float32)     # cos / sin tables
                 + 6 * _bytes((ts, ng), jnp.bfloat16)    # q/k/v out blocks
                 + _bytes((ts, D), jnp.bfloat16))        # xn scratch
    return pl.pallas_call(
        _qkv_rope_kernel,
        out_shape=(out_sd, out_sd, out_sd),
        grid_spec=pltpu.PrefetchScalarGridSpec(
            num_scalar_prefetch=0,
            grid=(B, S // ts, G),
            in_specs=[
                pl.BlockSpec((1, ts, D), lambda b, si, g: (b, si, 0)),
                pl.BlockSpec((1, D), lambda b, si, g: (0, 0)),
                w_spec, w_spec, w_spec,
                rope_spec, rope_spec, rope_spec,
            ],
            out_specs=(qkv_spec, qkv_spec, qkv_spec),
            scratch_shapes=[pltpu.VMEM((ts, D), jnp.bfloat16)],
        ),
        compiler_params=_mosaic_params(("parallel", "parallel", "arbitrary"),
                                       vmem_need),
    )(x, sa_norm_w.reshape(1, D), wq, wk, wv, cos, sin_fwd, sin_bwd)


# --------------------------------------------------------------------------
# Kernel 2: flash causal attention (no Wo) -> lane-dense [B, S, H*Dh] bf16
# grid = (B, nq, H, nk); only the kv axis carries online-softmax state.
# --------------------------------------------------------------------------

def _flash_attn_kernel(q_ref, k_ref, v_ref, o_ref, m_sc, l_sc, acc_sc):
    qi = pl.program_id(1)
    ki = pl.program_id(3)
    nk = pl.num_programs(3)
    tq, dh = q_ref.shape[1], q_ref.shape[2]
    tk = k_ref.shape[1]
    scale = dh ** -0.5

    @pl.when(ki == 0)
    def _():
        m_sc[...] = jnp.full_like(m_sc, -1e30)
        l_sc[...] = jnp.zeros_like(l_sc)
        acc_sc[...] = jnp.zeros_like(acc_sc)

    def scores():
        return jax.lax.dot_general(
            q_ref[0], k_ref[0], (((1,), (1,)), ((), ())),
            preferred_element_type=jnp.float32) * scale

    def online_softmax_update(s):
        # m_sc / l_sc are lane-dense [tq, dh] (lane-replicated), so the
        # per-step scratch stores are full-width vst, not masked 1-lane stores.
        m_prev = m_sc[...]
        m_new = jnp.maximum(m_prev, jnp.max(s, axis=-1, keepdims=True))
        alpha = jnp.exp(m_prev - m_new)
        p = jnp.exp(s - m_new[:, :1])
        l_sc[...] = alpha * l_sc[...] + jnp.sum(p, axis=-1, keepdims=True)
        acc_sc[...] = alpha * acc_sc[...] + jnp.dot(
            p.astype(v_ref.dtype), v_ref[0], preferred_element_type=jnp.float32)
        m_sc[...] = m_new

    row0 = qi * tq
    col0 = ki * tk
    fully_visible = col0 + tk <= row0 + 1            # tile entirely below diag
    not_fully_masked = col0 < row0 + tq
    straddles = jnp.logical_and(not_fully_masked,
                                jnp.logical_not(fully_visible))

    @pl.when(fully_visible)                          # mask-free fast path
    def _():
        online_softmax_update(scores())

    @pl.when(straddles)                              # diagonal tile: apply mask
    def _():
        s = scores()
        row = row0 + jax.lax.broadcasted_iota(jnp.int32, (tq, tk), 0)
        col = col0 + jax.lax.broadcasted_iota(jnp.int32, (tq, tk), 1)
        online_softmax_update(jnp.where(col <= row, s, -1e30))

    @pl.when(ki == nk - 1)
    def _():
        o_ref[0] = (acc_sc[...] *
                    pl.reciprocal(l_sc[...], approx=True)).astype(o_ref.dtype)


def flash_attention(q, k, v, num_heads, head_dim, *, q_tile=256, kv_tile=256):
    B, S, HD = q.shape
    tq = min(S, q_tile)
    tk = min(S, kv_tile)
    assert S % tq == 0 and S % tk == 0, "seq_len must divide attention tiles"
    nq, nk = S // tq, S // tk

    def kv_index(b, qi, h, ki):
        # Clamp fully-masked (future) KV tiles to the last needed block so the
        # pipeline does not re-fetch them (same block index => no DMA).
        last_needed = ((qi + 1) * tq - 1) // tk
        return (b, jnp.minimum(ki, last_needed), h)

    vmem_need = (4 * _bytes((tq, head_dim), jnp.bfloat16)    # q in + out blocks
                 + 4 * _bytes((tk, head_dim), jnp.bfloat16)  # k, v blocks
                 + 3 * _bytes((tq, head_dim), jnp.float32))  # m, l, acc scratch
    return pl.pallas_call(
        _flash_attn_kernel,
        out_shape=jax.ShapeDtypeStruct((B, S, HD), jnp.bfloat16),
        grid_spec=pltpu.PrefetchScalarGridSpec(
            num_scalar_prefetch=0,
            grid=(B, nq, num_heads, nk),
            in_specs=[
                pl.BlockSpec((1, tq, head_dim), lambda b, qi, h, ki: (b, qi, h)),
                pl.BlockSpec((1, tk, head_dim), kv_index),
                pl.BlockSpec((1, tk, head_dim), kv_index),
            ],
            out_specs=pl.BlockSpec((1, tq, head_dim),
                                   lambda b, qi, h, ki: (b, qi, h)),
            scratch_shapes=[pltpu.VMEM((tq, head_dim), jnp.float32),
                            pltpu.VMEM((tq, head_dim), jnp.float32),
                            pltpu.VMEM((tq, head_dim), jnp.float32)],
        ),
        compiler_params=_mosaic_params(
            ("parallel", "parallel", "parallel", "arbitrary"), vmem_need),
    )(q, k, v)


# --------------------------------------------------------------------------
# Kernel 3: Wo projection + attention residual + mlp_norm + SwiGLU + residual
# grid = (T//tm, F//tf); Wo has a constant index map (resident in VMEM).
# --------------------------------------------------------------------------

def _wo_residual_mlp_kernel(x_ref, attn_ref, wo_ref, gw_ref, w1_ref, w3_ref,
                            w2_ref, o_ref, h_sc, xn_sc, acc_sc):
    fi = pl.program_id(1)

    @pl.when(fi == 0)
    def _():
        # Output projection (large-K matmul) + attention residual, done once
        # per token tile; Wo stays resident (constant block index).
        h = x_ref[...] + jnp.dot(attn_ref[...], wo_ref[...],
                                 preferred_element_type=jnp.float32)
        h_sc[...] = h
        ms = jnp.mean(h * h, axis=-1, keepdims=True)
        xn_sc[...] = (h * jax.lax.rsqrt(ms + EPS_RMS) * gw_ref[...]).astype(jnp.bfloat16)
        acc_sc[...] = jnp.zeros_like(acc_sc)

    xn = xn_sc[...]
    g = jnp.dot(xn, w1_ref[...], preferred_element_type=jnp.float32)
    u = jnp.dot(xn, w3_ref[...], preferred_element_type=jnp.float32)
    a = (jax.nn.silu(g) * u).astype(jnp.bfloat16)
    acc_sc[...] += jnp.dot(a, w2_ref[...], preferred_element_type=jnp.float32)

    @pl.when(fi == pl.num_programs(1) - 1)
    def _():
        o_ref[...] = (h_sc[...] + acc_sc[...]).astype(o_ref.dtype)


def fused_wo_residual_mlp(x2d, attn2d, wo, norm_w, w1, w3, w2, *,
                          m_tile=512, f_tile=512):
    T, D = x2d.shape
    HD = attn2d.shape[1]
    F = w1.shape[1]
    tm = min(T, m_tile)
    tf = min(F, f_tile)
    assert T % tm == 0 and F % tf == 0, "tokens/hidden must divide MLP tiles"

    vmem_need = (2 * _bytes((tm, D), jnp.float32)        # x blocks
                 + 2 * _bytes((tm, HD), jnp.bfloat16)    # attn blocks
                 + 2 * _bytes((HD, D), jnp.bfloat16)     # wo (resident)
                 + 4 * _bytes((D, tf), jnp.bfloat16)     # w1/w3 blocks
                 + 2 * _bytes((tf, D), jnp.bfloat16)     # w2 blocks
                 + 2 * _bytes((tm, D), jnp.float32)      # output blocks
                 + 2 * _bytes((tm, D), jnp.float32)      # h_sc + acc_sc
                 + _bytes((tm, D), jnp.bfloat16))        # xn_sc
    return pl.pallas_call(
        _wo_residual_mlp_kernel,
        out_shape=jax.ShapeDtypeStruct((T, D), x2d.dtype),
        grid_spec=pltpu.PrefetchScalarGridSpec(
            num_scalar_prefetch=0,
            grid=(T // tm, F // tf),
            in_specs=[
                pl.BlockSpec((tm, D), lambda mi, fi: (mi, 0)),
                pl.BlockSpec((tm, HD), lambda mi, fi: (mi, 0)),
                pl.BlockSpec((HD, D), lambda mi, fi: (0, 0)),
                pl.BlockSpec((1, D), lambda mi, fi: (0, 0)),
                pl.BlockSpec((D, tf), lambda mi, fi: (0, fi)),
                pl.BlockSpec((D, tf), lambda mi, fi: (0, fi)),
                pl.BlockSpec((tf, D), lambda mi, fi: (fi, 0)),
            ],
            out_specs=pl.BlockSpec((tm, D), lambda mi, fi: (mi, 0)),
            scratch_shapes=[pltpu.VMEM((tm, D), jnp.float32),
                            pltpu.VMEM((tm, D), jnp.bfloat16),
                            pltpu.VMEM((tm, D), jnp.float32)],
        ),
        compiler_params=_mosaic_params(("parallel", "arbitrary"), vmem_need),
    )(x2d, attn2d, wo, norm_w.reshape(1, D), w1, w3, w2)


# --------------------------------------------------------------------------
# Kernel 4: final RMSNorm + LM head (output cast to f32, matching .float())
# grid = (T//tm, V//tv)
# --------------------------------------------------------------------------

def _norm_head_kernel(x_ref, gw_ref, w_ref, o_ref, xn_sc):
    vi = pl.program_id(1)

    @pl.when(vi == 0)
    def _():
        x = x_ref[...]
        ms = jnp.mean(x * x, axis=-1, keepdims=True)
        xn = x * jax.lax.rsqrt(ms + EPS_RMS) * gw_ref[...]
        xn_sc[...] = xn.astype(jnp.bfloat16)

    o_ref[...] = jnp.dot(xn_sc[...], w_ref[...],
                         preferred_element_type=jnp.float32)


def fused_norm_head(x2d, norm_w, w_out, *, m_tile=512, n_tile=512):
    T, D = x2d.shape
    V = w_out.shape[1]
    tm = min(T, m_tile)
    tv = min(V, n_tile)
    assert T % tm == 0 and V % tv == 0, "tokens/vocab must divide head tiles"
    vmem_need = (2 * _bytes((tm, D), jnp.float32)
                 + 2 * _bytes((1, D), jnp.float32)
                 + 2 * _bytes((D, tv), jnp.bfloat16)
                 + 2 * _bytes((tm, tv), jnp.float32)
                 + _bytes((tm, D), jnp.bfloat16))
    return pl.pallas_call(
        _norm_head_kernel,
        out_shape=jax.ShapeDtypeStruct((T, V), jnp.float32),
        grid_spec=pltpu.PrefetchScalarGridSpec(
            num_scalar_prefetch=0,
            grid=(T // tm, V // tv),
            in_specs=[
                pl.BlockSpec((tm, D), lambda mi, vi: (mi, 0)),
                pl.BlockSpec((1, D), lambda mi, vi: (0, 0)),
                pl.BlockSpec((D, tv), lambda mi, vi: (0, vi)),
            ],
            out_specs=pl.BlockSpec((tm, tv), lambda mi, vi: (mi, vi)),
            scratch_shapes=[pltpu.VMEM((tm, D), jnp.bfloat16)],
        ),
        compiler_params=_mosaic_params(("parallel", "arbitrary"), vmem_need),
    )(x2d, norm_w.reshape(1, D), w_out)


# --------------------------------------------------------------------------
# JAX glue
# --------------------------------------------------------------------------

def rope_tables(seq_len, head_dim, num_heads, base=10000.0):
    """cos / pre-signed parity-masked sin tables, tiled per head -> [S, H*Dh].

    out = x * cos + x_shift(+1) * sin_fwd + x_shift(-1) * sin_bwd reproduces
    the interleaved-pair rotation: sin_fwd is -sin on even lanes (0 on odd),
    sin_bwd is +sin on odd lanes (0 on even).
    """
    freqs = 1.0 / (base ** (jnp.arange(0, head_dim, 2, dtype=jnp.float32) / head_dim))
    pos = jnp.arange(seq_len, dtype=jnp.float32)
    ang = pos[:, None] * freqs[None, :]                    # [S, Dh//2]
    cos = jnp.repeat(jnp.cos(ang), 2, axis=-1)             # [S, Dh]
    sin = jnp.repeat(jnp.sin(ang), 2, axis=-1)             # [S, Dh]
    even = (jnp.arange(head_dim) % 2 == 0)
    sin_fwd = jnp.where(even, -sin, 0.0)
    sin_bwd = jnp.where(even, 0.0, sin)
    tile = lambda t: jnp.tile(t, (1, num_heads))
    return tile(cos), tile(sin_fwd), tile(sin_bwd)


def cosine_sim(a, b, eps=1e-8):
    na = jnp.maximum(jnp.linalg.norm(a, axis=-1), eps)
    nb = jnp.maximum(jnp.linalg.norm(b, axis=-1), eps)
    return jnp.sum(a * b, axis=-1) / (na * nb)


def decoder_forward(tokens, params, bi_scores_logger):
    B, S = tokens.shape
    D = params["embed_dim"]
    H = params["num_heads"]
    Dh = params["head_dim"]

    h = params["tok_embeddings"][tokens]                   # embedding gather (glue)
    cos, sin_fwd, sin_bwd = rope_tables(S, Dh, H)

    for lid, lp in enumerate(params["layers"]):
        x = h
        q, k, v = fused_rmsnorm_qkv_rope(
            x, lp["sa_norm"], lp["wq"], lp["wk"], lp["wv"],
            cos, sin_fwd, sin_bwd, Dh)
        attn = flash_attention(q, k, v, H, Dh)             # [B, S, H*Dh] bf16
        h = fused_wo_residual_mlp(
            x.reshape(B * S, D), attn.reshape(B * S, H * Dh),
            lp["wo"], lp["mlp_norm"], lp["w1"], lp["w3"], lp["w2"],
        ).reshape(B, S, D)
        # mirrors TransformerDecoder.bi_scores_logger (Python-side logging; this
        # side effect only works un-jitted — keep decoder_forward out of jax.jit)
        bi_scores_logger.setdefault(lid, []).append(cosine_sim(x[0], h[0]))

    logits = fused_norm_head(h.reshape(B * S, D), params["norm"], params["output"])
    return logits.reshape(B, S, -1)


def init_params(key, vocab, D, H, Dh, hidden, num_layers):
    def nrm(k, shape):
        return 0.02 * jax.random.normal(k, shape, jnp.float32)

    k_emb, k_layer, k_out = jax.random.split(key, 3)
    ks = jax.random.split(k_layer, 7)
    layer = dict(
        sa_norm=jnp.ones((D,), jnp.float32),
        mlp_norm=jnp.ones((D,), jnp.float32),
        # Linear weights stored [in, out] (transpose of nn.Linear's [out, in]).
        wq=nrm(ks[0], (D, H * Dh)).astype(jnp.bfloat16),
        wk=nrm(ks[1], (D, H * Dh)).astype(jnp.bfloat16),
        wv=nrm(ks[2], (D, H * Dh)).astype(jnp.bfloat16),
        wo=nrm(ks[3], (H * Dh, D)).astype(jnp.bfloat16),
        w1=nrm(ks[4], (D, hidden)).astype(jnp.bfloat16),
        w3=nrm(ks[5], (D, hidden)).astype(jnp.bfloat16),
        w2=nrm(ks[6], (hidden, D)).astype(jnp.bfloat16),
    )
    # _get_clones deep-copies one layer -> all layers share identical init values
    layers = [layer for _ in range(num_layers)]
    return dict(
        tok_embeddings=nrm(k_emb, (vocab, D)),
        layers=layers,
        norm=jnp.ones((D,), jnp.float32),
        output=nrm(k_out, (D, vocab)).astype(jnp.bfloat16),
        embed_dim=D, num_heads=H, head_dim=Dh,
    )


# --------------------------------------------------------------------------
# Plain-JAX f32 reference (same bf16 weights) for a loose parity check.
# --------------------------------------------------------------------------

def _ref_rope(x, S, H, Dh, base=10000.0):
    B = x.shape[0]
    freqs = 1.0 / (base ** (jnp.arange(0, Dh, 2, dtype=jnp.float32) / Dh))
    ang = jnp.arange(S, dtype=jnp.float32)[:, None] * freqs[None, :]
    cos = jnp.cos(ang)[None, :, None, :]
    sin = jnp.sin(ang)[None, :, None, :]
    xr = x.reshape(B, S, H, Dh // 2, 2)
    x1, x2 = xr[..., 0], xr[..., 1]
    return jnp.stack([x1 * cos - x2 * sin, x2 * cos + x1 * sin],
                     axis=-1).reshape(B, S, H * Dh)


def _reference_forward(tokens, params):
    B, S = tokens.shape
    D, H, Dh = params["embed_dim"], params["num_heads"], params["head_dim"]
    f32 = lambda w: w.astype(jnp.float32)

    def rms(x, w):
        return x * jax.lax.rsqrt(jnp.mean(x * x, -1, keepdims=True) + EPS_RMS) * w

    h = params["tok_embeddings"][tokens]
    mask = jnp.tril(jnp.ones((S, S), bool))
    for lp in params["layers"]:
        x = h
        xn = rms(x, lp["sa_norm"])
        q = _ref_rope(xn @ f32(lp["wq"]), S, H, Dh)
        k = _ref_rope(xn @ f32(lp["wk"]), S, H, Dh)
        v = xn @ f32(lp["wv"])
        qh = q.reshape(B, S, H, Dh).transpose(0, 2, 1, 3)
        kh = k.reshape(B, S, H, Dh).transpose(0, 2, 1, 3)
        vh = v.reshape(B, S, H, Dh).transpose(0, 2, 1, 3)
        s = jnp.einsum("bhqd,bhkd->bhqk", qh, kh) * (Dh ** -0.5)
        s = jnp.where(mask[None, None], s, -jnp.inf)
        p = jax.nn.softmax(s, axis=-1)
        ah = jnp.einsum("bhqk,bhkd->bhqd", p, vh)
        attn = ah.transpose(0, 2, 1, 3).reshape(B, S, H * Dh)
        hh = x + attn @ f32(lp["wo"])
        xm = rms(hh, lp["mlp_norm"])
        mlp = (jax.nn.silu(xm @ f32(lp["w1"])) * (xm @ f32(lp["w3"]))) @ f32(lp["w2"])
        h = hh + mlp
    hn = rms(h, params["norm"])
    return hn @ f32(params["output"])


# TODO(synk): KV-cache inference path (setup_caches / input_pos-indexed causal
# mask / external boolean mask) is not implemented; only the default
# training/prefill path is covered.

if __name__ == "__main__":
    B, S = 2, 128
    vocab, D, H, Dh, hidden, num_layers = 512, 256, 2, 128, 512, 2

    key = jax.random.PRNGKey(0)
    k_params, k_tok = jax.random.split(key)
    params = init_params(k_params, vocab, D, H, Dh, hidden, num_layers)
    tokens = jax.random.randint(k_tok, (B, S), 0, vocab, dtype=jnp.int32)

    bi_scores_logger = {}
    out = decoder_forward(tokens, params, bi_scores_logger)
    out = jax.block_until_ready(out)

    assert out.shape == (B, S, vocab) and out.dtype == jnp.float32
    assert bool(jnp.all(jnp.isfinite(out)))
    assert len(bi_scores_logger) == num_layers

    # Loose parity check against a plain-JAX f32 reference (bf16 activations /
    # approx reciprocal in the kernel => generous tolerance).
    ref = _reference_forward(tokens, params)
    rel = float(jnp.max(jnp.abs(out - ref)) / (jnp.max(jnp.abs(ref)) + 1e-6))
    assert rel < 0.1, f"kernel/reference mismatch: rel={rel}"

    print("KERNEL_OK")
</pallas_src>

<mosaic_0001>
module attributes {stable_mosaic.version = 11 : i64} {
  func.func @_qkv_rope_kernel(%arg0: i32, %arg1: i32, %arg2: i32, %arg3: memref<1x128x256xf32, #tpu.memory_space<vmem>>, %arg4: memref<1x256xf32, #tpu.memory_space<vmem>>, %arg5: memref<256x256xbf16, #tpu.memory_space<vmem>>, %arg6: memref<256x256xbf16, #tpu.memory_space<vmem>>, %arg7: memref<256x256xbf16, #tpu.memory_space<vmem>>, %arg8: memref<128x256xf32, #tpu.memory_space<vmem>>, %arg9: memref<128x256xf32, #tpu.memory_space<vmem>>, %arg10: memref<128x256xf32, #tpu.memory_space<vmem>>, %arg11: memref<1x128x256xbf16, #tpu.memory_space<vmem>>, %arg12: memref<1x128x256xbf16, #tpu.memory_space<vmem>>, %arg13: memref<1x128x256xbf16, #tpu.memory_space<vmem>>, %arg14: memref<128x256xbf16, #tpu.memory_space<vmem>>) attributes {dimension_semantics = [#tpu.dimension_semantics<parallel>, #tpu.dimension_semantics<parallel>, #tpu.dimension_semantics<arbitrary>], iteration_bounds = array<i64: 2, 1, 1>, scalar_prefetch = 0 : i64, scratch_operands = 1 : i64, tpu.core_type = #tpu.core_type<tc>, window_params = [{transform_indices = @transform_0, window_bounds = array<i64: 1, 128, 256>}, {pipeline_mode = #tpu.pipeline_mode<synchronous>, transform_indices = @transform_1, window_bounds = array<i64: 1, 256>}, {transform_indices = @transform_2, window_bounds = array<i64: 256, 256>}, {transform_indices = @transform_3, window_bounds = array<i64: 256, 256>}, {transform_indices = @transform_4, window_bounds = array<i64: 256, 256>}, {transform_indices = @transform_5, window_bounds = array<i64: 128, 256>}, {transform_indices = @transform_6, window_bounds = array<i64: 128, 256>}, {transform_indices = @transform_7, window_bounds = array<i64: 128, 256>}, {transform_indices = @transform_8, window_bounds = array<i64: 1, 128, 256>}, {transform_indices = @transform_9, window_bounds = array<i64: 1, 128, 256>}, {transform_indices = @transform_10, window_bounds = array<i64: 1, 128, 256>}]} {
    %c0_i32 = arith.constant 0 : i32
    %0 = arith.cmpi eq, %arg2, %c0_i32 : i32
    %1 = arith.extui %0 : i1 to i32
    %c0_i32_0 = arith.constant 0 : i32
    %2 = arith.cmpi ne, %1, %c0_i32_0 : i32
    scf.if %2 {
      %c0_27 = arith.constant 0 : index
      %c0_28 = arith.constant 0 : index
      %c0_29 = arith.constant 0 : index
      %39 = vector.load %arg3[%c0_27, %c0_28, %c0_29] : memref<1x128x256xf32, #tpu.memory_space<vmem>>, vector<1x128x256xf32>
      %40 = vector.shape_cast %39 : vector<1x128x256xf32> to vector<128x256xf32>
      %41 = arith.mulf %40, %40 : vector<128x256xf32>
      %cst_30 = arith.constant dense<0.000000e+00> : vector<128xf32>
      %42 = vector.multi_reduction <add>, %41, %cst_30 [1] : vector<128x256xf32> to vector<128xf32>
      %43 = vector.shape_cast %42 : vector<128xf32> to vector<128x1xf32>
      %cst_31 = arith.constant 2.560000e+02 : f32
      %44 = vector.broadcast %cst_31 : f32 to vector<128x1xf32>
      %45 = arith.divf %43, %44 : vector<128x1xf32>
      %cst_32 = arith.constant 9.99999997E-7 : f32
      %46 = vector.broadcast %cst_32 : f32 to vector<128x1xf32>
      %47 = arith.addf %45, %46 : vector<128x1xf32>
      %48 = math.rsqrt %47 : vector<128x1xf32>
      %49 = vector.broadcast %48 : vector<128x1xf32> to vector<128x256xf32>
      %50 = arith.mulf %40, %49 : vector<128x256xf32>
      %c0_33 = arith.constant 0 : index
      %c0_34 = arith.constant 0 : index
      %51 = vector.load %arg4[%c0_33, %c0_34] : memref<1x256xf32, #tpu.memory_space<vmem>>, vector<1x256xf32>
      %52 = vector.broadcast %51 : vector<1x256xf32> to vector<128x256xf32>
      %53 = arith.mulf %50, %52 : vector<128x256xf32>
      %54 = arith.truncf %53 : vector<128x256xf32> to vector<128x256xbf16>
      %c0_35 = arith.constant 0 : index
      %c0_36 = arith.constant 0 : index
      %55 = vector.load %arg14[%c0_35, %c0_36] : memref<128x256xbf16, #tpu.memory_space<vmem>>, vector<128x256xbf16>
      tpu.vector_store %arg14[%c0_35, %c0_36], %54 {strides = array<i32>} : memref<128x256xbf16, #tpu.memory_space<vmem>>, vector<128x256xbf16>,
    } else {
    }
    %c0 = arith.constant 0 : index
    %c0_1 = arith.constant 0 : index
    %3 = vector.load %arg14[%c0, %c0_1] : memref<128x256xbf16, #tpu.memory_space<vmem>>, vector<128x256xbf16>
    %c0_2 = arith.constant 0 : index
    %c0_3 = arith.constant 0 : index
    %4 = vector.load %arg8[%c0_2, %c0_3] : memref<128x256xf32, #tpu.memory_space<vmem>>, vector<128x256xf32>
    %c0_4 = arith.constant 0 : index
    %c0_5 = arith.constant 0 : index
    %5 = vector.load %arg9[%c0_4, %c0_5] : memref<128x256xf32, #tpu.memory_space<vmem>>, vector<128x256xf32>
    %c0_6 = arith.constant 0 : index
    %c0_7 = arith.constant 0 : index
    %6 = vector.load %arg10[%c0_6, %c0_7] : memref<128x256xf32, #tpu.memory_space<vmem>>, vector<128x256xf32>
    %c0_8 = arith.constant 0 : index
    %c0_9 = arith.constant 0 : index
    %7 = vector.load %arg5[%c0_8, %c0_9] : memref<256x256xbf16, #tpu.memory_space<vmem>>, vector<256x256xbf16>
    %cst = arith.constant dense<0.000000e+00> : vector<128x256xf32>
    %8 = tpu.matmul %3, %7, %cst {dimension_numbers = #tpu.dot_dimension_numbers<[1], [0], [0], [1], [0, 0, 1, 1], [], []>} : vector<128x256xbf16>, vector<256x256xbf16>, vector<128x256xf32> -> vector<128x256xf32>
    %c0_10 = arith.constant 0 : index
    %c0_11 = arith.constant 0 : index
    %9 = vector.load %arg6[%c0_10, %c0_11] : memref<256x256xbf16, #tpu.memory_space<vmem>>, vector<256x256xbf16>
    %cst_12 = arith.constant dense<0.000000e+00> : vector<128x256xf32>
    %10 = tpu.matmul %3, %9, %cst_12 {dimension_numbers = #tpu.dot_dimension_numbers<[1], [0], [0], [1], [0, 0, 1, 1], [], []>} : vector<128x256xbf16>, vector<256x256xbf16>, vector<128x256xf32> -> vector<128x256xf32>
    %c0_13 = arith.constant 0 : index
    %c0_14 = arith.constant 0 : index
    %11 = vector.load %arg7[%c0_13, %c0_14] : memref<256x256xbf16, #tpu.memory_space<vmem>>, vector<256x256xbf16>
    %cst_15 = arith.constant dense<0.000000e+00> : vector<128x256xf32>
    %12 = tpu.matmul %3, %11, %cst_15 {dimension_numbers = #tpu.dot_dimension_numbers<[1], [0], [0], [1], [0, 0, 1, 1], [], []>} : vector<128x256xbf16>, vector<256x256xbf16>, vector<128x256xf32> -> vector<128x256xf32>
    %c255_i32 = arith.constant 255 : i32
    %13 = tpu.dynamic_rotate %8 by %c255_i32 dim 1 : vector<128x256xf32>, i32 -> vector<128x256xf32>
    %c1_i32 = arith.constant 1 : i32
    %14 = tpu.dynamic_rotate %8 by %c1_i32 dim 1 : vector<128x256xf32>, i32 -> vector<128x256xf32>
    %15 = arith.mulf %8, %4 : vector<128x256xf32>
    %16 = arith.mulf %13, %5 : vector<128x256xf32>
    %17 = arith.addf %15, %16 : vector<128x256xf32>
    %18 = arith.mulf %14, %6 : vector<128x256xf32>
    %19 = arith.addf %17, %18 : vector<128x256xf32>
    %20 = arith.truncf %19 : vector<128x256xf32> to vector<128x256xbf16>
    %c0_16 = arith.constant 0 : index
    %c0_17 = arith.constant 0 : index
    %c0_18 = arith.constant 0 : index
    %21 = vector.load %arg11[%c0_16, %c0_17, %c0_18] : memref<1x128x256xbf16, #tpu.memory_space<vmem>>, vector<1x128x256xbf16>
    %22 = vector.shape_cast %21 : vector<1x128x256xbf16> to vector<128x256xbf16>
    %23 = vector.shape_cast %20 : vector<128x256xbf16> to vector<1x128x256xbf16>
    tpu.vector_store %arg11[%c0_16, %c0_17, %c0_18], %23 {strides = array<i32>} : memref<1x128x256xbf16, #tpu.memory_space<vmem>>, vector<1x128x256xbf16>,
    %c255_i32_19 = arith.constant 255 : i32
    %24 = tpu.dynamic_rotate %10 by %c255_i32_19 dim 1 : vector<128x256xf32>, i32 -> vector<128x256xf32>
    %c1_i32_20 = arith.constant 1 : i32
    %25 = tpu.dynamic_rotate %10 by %c1_i32_20 dim 1 : vector<128x256xf32>, i32 -> vector<128x256xf32>
    %26 = arith.mulf %10, %4 : vector<128x256xf32>
    %27 = arith.mulf %24, %5 : vector<128x256xf32>
    %28 = arith.addf %26, %27 : vector<128x256xf32>
    %29 = arith.mulf %25, %6 : vector<128x256xf32>
    %30 = arith.addf %28, %29 : vector<128x256xf32>
    %31 = arith.truncf %30 : vector<128x256xf32> to vector<128x256xbf16>
    %c0_21 = arith.constant 0 : index
    %c0_22 = arith.constant 0 : index
    %c0_23 = arith.constant 0 : index
    %32 = vector.load %arg12[%c0_21, %c0_22, %c0_23] : memref<1x128x256xbf16, #tpu.memory_space<vmem>>, vector<1x128x256xbf16>
    %33 = vector.shape_cast %32 : vector<1x128x256xbf16> to vector<128x256xbf16>
    %34 = vector.shape_cast %31 : vector<128x256xbf16> to vector<1x128x256xbf16>
    tpu.vector_store %arg12[%c0_21, %c0_22, %c0_23], %34 {strides = array<i32>} : memref<1x128x256xbf16, #tpu.memory_space<vmem>>, vector<1x128x256xbf16>,
    %35 = arith.truncf %12 : vector<128x256xf32> to vector<128x256xbf16>
    %c0_24 = arith.constant 0 : index
    %c0_25 = arith.constant 0 : index
    %c0_26 = arith.constant 0 : index
    %36 = vector.load %arg13[%c0_24, %c0_25, %c0_26] : memref<1x128x256xbf16, #tpu.memory_space<vmem>>, vector<1x128x256xbf16>
    %37 = vector.shape_cast %36 : vector<1x128x256xbf16> to vector<128x256xbf16>
    %38 = vector.shape_cast %35 : vector<128x256xbf16> to vector<1x128x256xbf16>
    tpu.vector_store %arg13[%c0_24, %c0_25, %c0_26], %38 {strides = array<i32>} : memref<1x128x256xbf16, #tpu.memory_space<vmem>>, vector<1x128x256xbf16>,
    return
  }
  func.func @transform_0(%arg0: i32, %arg1: i32, %arg2: i32) -> (i32, i32, i32) {
    %c0_i32 = arith.constant 0 : i32
    %c0_i32_0 = arith.constant 0 : i32
    return %arg0, %arg1, %c0_i32 : i32, i32, i32
  }
  func.func @transform_1(%arg0: i32, %arg1: i32, %arg2: i32) -> (i32, i32) {
    %c0_i32 = arith.constant 0 : i32
    %c0_i32_0 = arith.constant 0 : i32
    %c0_i32_1 = arith.constant 0 : i32
    return %c0_i32, %c0_i32_0 : i32, i32
  }
  func.func @transform_2(%arg0: i32, %arg1: i32, %arg2: i32) -> (i32, i32) {
    %c0_i32 = arith.constant 0 : i32
    %c0_i32_0 = arith.constant 0 : i32
    return %c0_i32, %arg2 : i32, i32
  }
  func.func @transform_3(%arg0: i32, %arg1: i32, %arg2: i32) -> (i32, i32) {
    %c0_i32 = arith.constant 0 : i32
    %c0_i32_0 = arith.constant 0 : i32
    return %c0_i32, %arg2 : i32, i32
  }
  func.func @transform_4(%arg0: i32, %arg1: i32, %arg2: i32) -> (i32, i32) {
    %c0_i32 = arith.constant 0 : i32
    %c0_i32_0 = arith.constant 0 : i32
    return %c0_i32, %arg2 : i32, i32
  }
  func.func @transform_5(%arg0: i32, %arg1: i32, %arg2: i32) -> (i32, i32) {
    %c0_i32 = arith.constant 0 : i32
    return %arg1, %arg2 : i32, i32
  }
  func.func @transform_6(%arg0: i32, %arg1: i32, %arg2: i32) -> (i32, i32) {
    %c0_i32 = arith.constant 0 : i32
    return %arg1, %arg2 : i32, i32
  }
  func.func @transform_7(%arg0: i32, %arg1: i32, %arg2: i32) -> (i32, i32) {
    %c0_i32 = arith.constant 0 : i32
    return %arg1, %arg2 : i32, i32
  }
  func.func @transform_8(%arg0: i32, %arg1: i32, %arg2: i32) -> (i32, i32, i32) {
    %c0_i32 = arith.constant 0 : i32
    return %arg0, %arg1, %arg2 : i32, i32, i32
  }
  func.func @transform_9(%arg0: i32, %arg1: i32, %arg2: i32) -> (i32, i32, i32) {
    %c0_i32 = arith.constant 0 : i32
    return %arg0, %arg1, %arg2 : i32, i32, i32
  }
  func.func @transform_10(%arg0: i32, %arg1: i32, %arg2: i32) -> (i32, i32, i32) {
    %c0_i32 = arith.constant 0 : i32
    return %arg0, %arg1, %arg2 : i32, i32, i32
  }
}

</mosaic_0001>

<llo_original>
// kernel: tpu_custom_call.1
$region0: #{tpu_custom_call.1}
  #allocation0 [shape = 'u32[]', space=smem, size = 0x4, offset = 0x4, fixed_abs, tag = 'smem constant byte address 0x4 - core index']
  #allocation1 [shape = 'u32[144,128]{1,0:T(1,128)}', space=vmem, size = 0x12000, scoped, tag = 'internal scratch']
  #allocation2 [shape = 'bf16[128,256]{1,0:T(16,128)(2,1)}', space=vmem, size = 0x10000, scoped, tag = 'scratch operand']
  %s0 = inlined_call_operand.hbm [shape: f32[2,128,256], index: 0, kind: input, shape index: {}]
  %s1 = inlined_call_operand.vmem [shape: f32[1,256], index: 1, kind: input, shape index: {}]
  %s2 = inlined_call_operand.hbm [shape: bf16[256,256], index: 2, kind: input, shape index: {}]
  %s3 = inlined_call_operand.hbm [shape: bf16[256,256], index: 3, kind: input, shape index: {}]
  %s4 = inlined_call_operand.hbm [shape: bf16[256,256], index: 4, kind: input, shape index: {}]
  %s5 = inlined_call_operand.hbm [shape: f32[128,256], index: 5, kind: input, shape index: {}]
  %s6 = inlined_call_operand.hbm [shape: f32[128,256], index: 6, kind: input, shape index: {}]
  %s7 = inlined_call_operand.hbm [shape: f32[128,256], index: 7, kind: input, shape index: {}]
  %s8 = inlined_call_operand.hbm [shape: bf16[2,128,256], index: 8, kind: output, shape index: {0}]
  %s9 = inlined_call_operand.hbm [shape: bf16[2,128,256], index: 9, kind: output, shape index: {1}]
  %s10 = inlined_call_operand.hbm [shape: bf16[2,128,256], index: 10, kind: output, shape index: {2}]
  %11 = xla_tuple %s8, %s9, %s10
  %s12 = sld [smem:[#allocation0]]
  $region113: #{tpu_custom_call.1} parent=0
    _
  %s14 = ssub.s32 1, %s12
  %s15 = scalar_select 0, %s14, %s12
  $region1: #{tpu_custom_call.1} parent=0
    #allocation3 [shape = 'u8[262144]{0}', space=vmem, size = 0x40000, scoped, tag = 'input window, operand 0']
    #allocation4 [shape = 's32[2]{0}', space=sflag, size = 0x8, scoped, tag = 'scoped memory for tpu_custom_call.1']
    #allocation5 [shape = 's32[2]{0}', space=sflag, size = 0x8, scoped, tag = 'scoped memory for tpu_custom_call.1']
    #allocation6 [shape = 'u8[131072]{0}', space=vmem, size = 0x20000, scoped, tag = 'input window, operand 2, single buffered']
    #allocation7 [shape = 's32[1]{0}', space=sflag, size = 0x4, scoped, tag = 'scoped memory for tpu_custom_call.1']
    #allocation8 [shape = 'u8[131072]{0}', space=vmem, size = 0x20000, scoped, tag = 'input window, operand 3, single buffered']
    #allocation9 [shape = 'u8[131072]{0}', space=vmem, size = 0x20000, scoped, tag = 'input window, operand 4, single buffered']
    #allocation10 [shape = 's32[1]{0}', space=sflag, size = 0x4, scoped, tag = 'scoped memory for tpu_custom_call.1']
    #allocation11 [shape = 'u8[131072]{0}', space=vmem, size = 0x20000, scoped, tag = 'input window, operand 5, single buffered']
    #allocation12 [shape = 'u8[131072]{0}', space=vmem, size = 0x20000, scoped, tag = 'input window, operand 6, single buffered']
    #allocation13 [shape = 's32[1]{0}', space=sflag, size = 0x4, scoped, tag = 'scoped memory for tpu_custom_call.1']
    #allocation14 [shape = 'u8[131072]{0}', space=vmem, size = 0x20000, scoped, tag = 'input window, operand 7, single buffered']
    #allocation15 [shape = 'u8[131072]{0}', space=vmem, size = 0x20000, scoped, tag = 'output window, operand 0']
    #allocation16 [shape = 'u8[131072]{0}', space=vmem, size = 0x20000, scoped, tag = 'output window, operand 1']
    #allocation17 [shape = 's32[2]{0}', space=sflag, size = 0x8, scoped, tag = 'scoped memory for tpu_custom_call.1']
    #allocation18 [shape = 'u8[131072]{0}', space=vmem, size = 0x20000, scoped, tag = 'output window, operand 2']
    %16 = vsyncpa [#allocation4], 0
    %s17 = scalar_lea.sflag [#allocation4], 1
    %18 = vsyncpa %s17, 0
    %19 = vsyncpa [#allocation7], 0
    %20 = vsyncpa [#allocation10], 0
    %21 = vsyncpa [#allocation13], 0
    %22 = vsyncpa [#allocation5], 0
    %s23 = scalar_lea.sflag [#allocation5], 1
    %24 = vsyncpa %s23, 0
    %25 = vsyncpa [#allocation17], 0
    %s26 = scalar_lea.sflag [#allocation17], 1
    %27 = vsyncpa %s26, 0
    loop: start=0, step=1, limit=4
    $region2: #{tpu_custom_call.1} parent=1 // loop_pre_header
      _
    $region3: #{tpu_custom_call.1} parent=1 // loop_header
      %s29 = sphi 0, %s33
      %p30 = scmp.ge.s32.totalorder %s29, 4
      %s36 = sphi 0, %s55
      %s37 = sphi 0, %s51
      %s38 = sphi 0, %s47
      %s39 = sphi 0, %s36
      %s40 = sphi 0, %s37
      %s41 = sphi 0, %s38
      %s42 = sphi 0, %s39
      %s43 = sphi 0, %s40
      %s44 = sphi 0, %s41
      %s60 = sphi 0, %s62
      %s63 = sphi 0, %s60
      %s64 = sphi 0, %s63
      %s80 = sphi 0, %s64
      %s84 = sphi 0, %s84
      %s86 = sphi 0, %s84
      %s87 = sphi 0, %s86
      %s101 = sphi 0, %s87
      %s107 = sphi 0, %s109
      %s110 = sphi 0, %s107
      %s111 = sphi 0, %s110
      %s127 = sphi 0, %s111
      %s133 = sphi 0, %s135
      %s136 = sphi 0, %s133
      %s137 = sphi 0, %s136
      %s153 = sphi 0, %s137
      %s159 = sphi 0, %s161
      %s162 = sphi 0, %s159
      %s163 = sphi 0, %s162
      %s179 = sphi 0, %s163
      %s187 = sphi 0, %s189
      %s190 = sphi 0, %s187
      %s191 = sphi 0, %s190
      %s207 = sphi 0, %s191
      %s215 = sphi 0, %s217
      %s218 = sphi 0, %s215
      %s219 = sphi 0, %s218
      %s235 = sphi 0, %s219
      %s243 = sphi 0, %s245
      %s246 = sphi 0, %s243
      %s247 = sphi 0, %s246
      %s263 = sphi 0, %s247
      %s273 = sphi 0, %s275
      %s276 = sphi 0, %s273
      %s277 = sphi 0, %s276
      %s293 = sphi 0, %s277
      %s303 = sphi 0, %s305
      %s306 = sphi 0, %s303
      %s307 = sphi 0, %s306
      %s323 = sphi 0, %s307
      %s333 = sphi 0, %s335
      %s336 = sphi 0, %s333
      %s337 = sphi 0, %s336
      %s353 = sphi 0, %s337
    $region4: #{tpu_custom_call.1} parent=1 // loop_header_branch
      %32 = sbr.rel (%p30) target = $region8
    $region5: #{tpu_custom_call.1} parent=1 // loop_body
      %s34 = ssub.s32 %s29, 1
      %s35 = ssub.s32 %s29, 2
      %s45 = sadd.s32 1, %s38
      %p46 = scmp.ge.s32.totalorder %s45, 1
      %s47 = scalar_select %p46, 0, %s45
      %s48 = sadd.s32 1, %s37
      %s49 = scalar_select %p46, %s48, %s37
      %p50 = scmp.ge.s32.totalorder %s49, 1
      %s51 = scalar_select %p50, 0, %s49
      %s52 = sadd.s32 1, %s36
      %s53 = scalar_select %p50, %s52, %s36
      %p54 = scmp.ge.s32.totalorder %s53, 2
      %s55 = scalar_select %p54, 0, %s53
      %s56 = ssub.s32 %s36, %s55
      %s57 = ssub.s32 %s37, %s51
      %s58 = sor.u32 %s56, %s57
      %p59 = scmp.eq.s32.totalorder %s58, 0
      %s61 = sadd.s32 %s60, 1
      %s62 = scalar_select %p59, %s60, %s61
      %p65 = pneg %p59
      %p66 = scmp.eq.s32.totalorder %s29, 1
      %p67 = por %p65, %p66
      %p68 = scmp.ne.s32.totalorder %s60, %s63
      %p69 = scmp.eq.s32.totalorder %s29, 0
      %p70 = por %p68, %p69
      %p71 = scmp.ne.s32.totalorder %s60, %s63
      %p72 = scmp.eq.s32.totalorder %s34, 1
      %p73 = por %p71, %p72
      %p74 = scmp.ne.s32.totalorder %s63, %s64
      %p75 = scmp.eq.s32.totalorder %s34, 0
      %p76 = por %p74, %p75
      %p77 = scmp.ne.s32.totalorder %s63, %s64
      %p78 = scmp.eq.s32.totalorder %s35, 1
      %p79 = por %p77, %p78
      %p81 = scmp.ne.s32.totalorder %s64, %s80
      %p82 = scmp.eq.s32.totalorder %s35, 0
      %p83 = por %p81, %p82
      %s85 = sadd.s32 %s84, 1
      %p88 = scmp.eq.s32.totalorder %s29, 1
      %p89 = scmp.ne.s32.totalorder %s84, %s86
      %p90 = scmp.eq.s32.totalorder %s29, 0
      %p91 = por %p89, %p90
      %p92 = scmp.ne.s32.totalorder %s84, %s86
      %p93 = scmp.eq.s32.totalorder %s34, 1
      %p94 = por %p92, %p93
      %p95 = scmp.ne.s32.totalorder %s86, %s87
      %p96 = scmp.eq.s32.totalorder %s34, 0
      %p97 = por %p95, %p96
      %p98 = scmp.ne.s32.totalorder %s86, %s87
      %p99 = scmp.eq.s32.totalorder %s35, 1
      %p100 = por %p98, %p99
      %p102 = scmp.ne.s32.totalorder %s87, %s101
      %p103 = scmp.eq.s32.totalorder %s35, 0
      %p104 = por %p102, %p103
      %s105 = ssub.s32 %s38, %s47
      %p106 = scmp.eq.s32.totalorder %s105, 0
      %s108 = sadd.s32 %s107, 1
      %s109 = scalar_select %p106, %s107, %s108
      %p112 = pneg %p106
      %p113 = scmp.eq.s32.totalorder %s29, 1
      %p114 = por %p112, %p113
      %p115 = scmp.ne.s32.totalorder %s107, %s110
      %p116 = scmp.eq.s32.totalorder %s29, 0
      %p117 = por %p115, %p116
      %p118 = scmp.ne.s32.totalorder %s107, %s110
      %p119 = scmp.eq.s32.totalorder %s34, 1
      %p120 = por %p118, %p119
      %p121 = scmp.ne.s32.totalorder %s110, %s111
      %p122 = scmp.eq.s32.totalorder %s34, 0
      %p123 = por %p121, %p122
      %p124 = scmp.ne.s32.totalorder %s110, %s111
      %p125 = scmp.eq.s32.totalorder %s35, 1
      %p126 = por %p124, %p125
      %p128 = scmp.ne.s32.totalorder %s111, %s127
      %p129 = scmp.eq.s32.totalorder %s35, 0
      %p130 = por %p128, %p129
      %s131 = ssub.s32 %s38, %s47
      %p132 = scmp.eq.s32.totalorder %s131, 0
      %s134 = sadd.s32 %s133, 1
      %s135 = scalar_select %p132, %s133, %s134
      %p138 = pneg %p132
      %p139 = scmp.eq.s32.totalorder %s29, 1
      %p140 = por %p138, %p139
      %p141 = scmp.ne.s32.totalorder %s133, %s136
      %p142 = scmp.eq.s32.totalorder %s29, 0
      %p143 = por %p141, %p142
      %p144 = scmp.ne.s32.totalorder %s133, %s136
      %p145 = scmp.eq.s32.totalorder %s34, 1
      %p146 = por %p144, %p145
      %p147 = scmp.ne.s32.totalorder %s136, %s137
      %p148 = scmp.eq.s32.totalorder %s34, 0
      %p149 = por %p147, %p148
      %p150 = scmp.ne.s32.totalorder %s136, %s137
      %p151 = scmp.eq.s32.totalorder %s35, 1
      %p152 = por %p150, %p151
      %p154 = scmp.ne.s32.totalorder %s137, %s153
      %p155 = scmp.eq.s32.totalorder %s35, 0
      %p156 = por %p154, %p155
      %s157 = ssub.s32 %s38, %s47
      %p158 = scmp.eq.s32.totalorder %s157, 0
      %s160 = sadd.s32 %s159, 1
      %s161 = scalar_select %p158, %s159, %s160
      %p164 = pneg %p158
      %p165 = scmp.eq.s32.totalorder %s29, 1
      %p166 = por %p164, %p165
      %p167 = scmp.ne.s32.totalorder %s159, %s162
      %p168 = scmp.eq.s32.totalorder %s29, 0
      %p169 = por %p167, %p168
      %p170 = scmp.ne.s32.totalorder %s159, %s162
      %p171 = scmp.eq.s32.totalorder %s34, 1
      %p172 = por %p170, %p171
      %p173 = scmp.ne.s32.totalorder %s162, %s163
      %p174 = scmp.eq.s32.totalorder %s34, 0
      %p175 = por %p173, %p174
      %p176 = scmp.ne.s32.totalorder %s162, %s163
      %p177 = scmp.eq.s32.totalorder %s35, 1
      %p178 = por %p176, %p177
      %p180 = scmp.ne.s32.totalorder %s163, %s179
      %p181 = scmp.eq.s32.totalorder %s35, 0
      %p182 = por %p180, %p181
      %s183 = ssub.s32 %s37, %s51
      %s184 = ssub.s32 %s38, %s47
      %s185 = sor.u32 %s183, %s184
      %p186 = scmp.eq.s32.totalorder %s185, 0
      %s188 = sadd.s32 %s187, 1
      %s189 = scalar_select %p186, %s187, %s188
      %p192 = pneg %p186
      %p193 = scmp.eq.s32.totalorder %s29, 1
      %p194 = por %p192, %p193
      %p195 = scmp.ne.s32.totalorder %s187, %s190
      %p196 = scmp.eq.s32.totalorder %s29, 0
      %p197 = por %p195, %p196
      %p198 = scmp.ne.s32.totalorder %s187, %s190
      %p199 = scmp.eq.s32.totalorder %s34, 1
      %p200 = por %p198, %p199
      %p201 = scmp.ne.s32.totalorder %s190, %s191
      %p202 = scmp.eq.s32.totalorder %s34, 0
      %p203 = por %p201, %p202
      %p204 = scmp.ne.s32.totalorder %s190, %s191
      %p205 = scmp.eq.s32.totalorder %s35, 1
      %p206 = por %p204, %p205
      %p208 = scmp.ne.s32.totalorder %s191, %s207
      %p209 = scmp.eq.s32.totalorder %s35, 0
      %p210 = por %p208, %p209
      %s211 = ssub.s32 %s37, %s51
      %s212 = ssub.s32 %s38, %s47
      %s213 = sor.u32 %s211, %s212
      %p214 = scmp.eq.s32.totalorder %s213, 0
      %s216 = sadd.s32 %s215, 1
      %s217 = scalar_select %p214, %s215, %s216
      %p220 = pneg %p214
      %p221 = scmp.eq.s32.totalorder %s29, 1
      %p222 = por %p220, %p221
      %p223 = scmp.ne.s32.totalorder %s215, %s218
      %p224 = scmp.eq.s32.totalorder %s29, 0
      %p225 = por %p223, %p224
      %p226 = scmp.ne.s32.totalorder %s215, %s218
      %p227 = scmp.eq.s32.totalorder %s34, 1
      %p228 = por %p226, %p227
      %p229 = scmp.ne.s32.totalorder %s218, %s219
      %p230 = scmp.eq.s32.totalorder %s34, 0
      %p231 = por %p229, %p230
      %p232 = scmp.ne.s32.totalorder %s218, %s219
      %p233 = scmp.eq.s32.totalorder %s35, 1
      %p234 = por %p232, %p233
      %p236 = scmp.ne.s32.totalorder %s219, %s235
      %p237 = scmp.eq.s32.totalorder %s35, 0
      %p238 = por %p236, %p237
      %s239 = ssub.s32 %s37, %s51
      %s240 = ssub.s32 %s38, %s47
      %s241 = sor.u32 %s239, %s240
      %p242 = scmp.eq.s32.totalorder %s241, 0
      %s244 = sadd.s32 %s243, 1
      %s245 = scalar_select %p242, %s243, %s244
      %p248 = pneg %p242
      %p249 = scmp.eq.s32.totalorder %s29, 1
      %p250 = por %p248, %p249
      %p251 = scmp.ne.s32.totalorder %s243, %s246
      %p252 = scmp.eq.s32.totalorder %s29, 0
      %p253 = por %p251, %p252
      %p254 = scmp.ne.s32.totalorder %s243, %s246
      %p255 = scmp.eq.s32.totalorder %s34, 1
      %p256 = por %p254, %p255
      %p257 = scmp.ne.s32.totalorder %s246, %s247
      %p258 = scmp.eq.s32.totalorder %s34, 0
      %p259 = por %p257, %p258
      %p260 = scmp.ne.s32.totalorder %s246, %s247
      %p261 = scmp.eq.s32.totalorder %s35, 1
      %p262 = por %p260, %p261
      %p264 = scmp.ne.s32.totalorder %s247, %s263
      %p265 = scmp.eq.s32.totalorder %s35, 0
      %p266 = por %p264, %p265
      %s267 = ssub.s32 %s36, %s55
      %s268 = ssub.s32 %s37, %s51
      %s269 = sor.u32 %s267, %s268
      %s270 = ssub.s32 %s38, %s47
      %s271 = sor.u32 %s269, %s270
      %p272 = scmp.eq.s32.totalorder %s271, 0
      %s274 = sadd.s32 %s273, 1
      %s275 = scalar_select %p272, %s273, %s274
      %p278 = pneg %p272
      %p279 = scmp.eq.s32.totalorder %s29, 1
      %p280 = por %p278, %p279
      %p281 = scmp.ne.s32.totalorder %s273, %s276
      %p282 = scmp.eq.s32.totalorder %s29, 0
      %p283 = por %p281, %p282
      %p284 = scmp.ne.s32.totalorder %s273, %s276
      %p285 = scmp.eq.s32.totalorder %s34, 1
      %p286 = por %p284, %p285
      %p287 = scmp.ne.s32.totalorder %s276, %s277
      %p288 = scmp.eq.s32.totalorder %s34, 0
      %p289 = por %p287, %p288
      %p290 = scmp.ne.s32.totalorder %s276, %s277
      %p291 = scmp.eq.s32.totalorder %s35, 1
      %p292 = por %p290, %p291
      %p294 = scmp.ne.s32.totalorder %s277, %s293
      %p295 = scmp.eq.s32.totalorder %s35, 0
      %p296 = por %p294, %p295
      %s297 = ssub.s32 %s36, %s55
      %s298 = ssub.s32 %s37, %s51
      %s299 = sor.u32 %s297, %s298
      %s300 = ssub.s32 %s38, %s47
      %s301 = sor.u32 %s299, %s300
      %p302 = scmp.eq.s32.totalorder %s301, 0
      %s304 = sadd.s32 %s303, 1
      %s305 = scalar_select %p302, %s303, %s304
      %p308 = pneg %p302
      %p309 = scmp.eq.s32.totalorder %s29, 1
      %p310 = por %p308, %p309
      %p311 = scmp.ne.s32.totalorder %s303, %s306
      %p312 = scmp.eq.s32.totalorder %s29, 0
      %p313 = por %p311, %p312
      %p314 = scmp.ne.s32.totalorder %s303, %s306
      %p315 = scmp.eq.s32.totalorder %s34, 1
      %p316 = por %p314, %p315
      %p317 = scmp.ne.s32.totalorder %s306, %s307
      %p318 = scmp.eq.s32.totalorder %s34, 0
      %p319 = por %p317, %p318
      %p320 = scmp.ne.s32.totalorder %s306, %s307
      %p321 = scmp.eq.s32.totalorder %s35, 1
      %p322 = por %p320, %p321
      %p324 = scmp.ne.s32.totalorder %s307, %s323
      %p325 = scmp.eq.s32.totalorder %s35, 0
      %p326 = por %p324, %p325
      %s327 = ssub.s32 %s36, %s55
      %s328 = ssub.s32 %s37, %s51
      %s329 = sor.u32 %s327, %s328
      %s330 = ssub.s32 %s38, %s47
      %s331 = sor.u32 %s329, %s330
      %p332 = scmp.eq.s32.totalorder %s331, 0
      %s334 = sadd.s32 %s333, 1
      %s335 = scalar_select %p332, %s333, %s334
      %p338 = pneg %p332
      %p339 = scmp.eq.s32.totalorder %s29, 1
      %p340 = por %p338, %p339
      %p341 = scmp.ne.s32.totalorder %s333, %s336
      %p342 = scmp.eq.s32.totalorder %s29, 0
      %p343 = por %p341, %p342
      %p344 = scmp.ne.s32.totalorder %s333, %s336
      %p345 = scmp.eq.s32.totalorder %s34, 1
      %p346 = por %p344, %p345
      %p347 = scmp.ne.s32.totalorder %s336, %s337
      %p348 = scmp.eq.s32.totalorder %s34, 0
      %p349 = por %p347, %p348
      %p350 = scmp.ne.s32.totalorder %s336, %s337
      %p351 = scmp.eq.s32.totalorder %s35, 1
      %p352 = por %p350, %p351
      %p354 = scmp.ne.s32.totalorder %s337, %s353
      %p355 = scmp.eq.s32.totalorder %s35, 0
      %p356 = por %p354, %p355
      %p357 = scmp.le.s32.totalorder 1, %s29
      %p358 = scmp.lt.s32.totalorder %s29, 3
      %p359 = pnand %p357, %p358
      %p360 = pneg %p359
      // Predicated region
      $region9: #{tpu_custom_call.1} parent=5 // pred_check
        _
      $region10: #{tpu_custom_call.1} parent=5 // pred_check_branch
        %362 = sbr.rel (%p359) target = $region12
      $region11: #{tpu_custom_call.1} parent=5 // pred_region
        %s363 = ssub.s32 %s29, 1
        // Predicated region
        $region13: #{tpu_custom_call.1} parent=11 // pred_check
          %p364 = pneg %p97
        $region14: #{tpu_custom_call.1} parent=11 // pred_check_branch
          %366 = sbr.rel (%p364) target = $region16
        $region15: #{tpu_custom_call.1} parent=11 // pred_region
          _
        $region16: #{tpu_custom_call.1} parent=11 // pred_fallthru
          _
        // Predicated region
        $region17: #{tpu_custom_call.1} parent=11 // pred_check
          %p367 = pneg %p123
        $region18: #{tpu_custom_call.1} parent=11 // pred_check_branch
          %369 = sbr.rel (%p367) target = $region20
        $region19: #{tpu_custom_call.1} parent=11 // pred_region
          %s370 = smul.u32 2, %s41
          %s372 = ssub.s32 4096, 4096
          %373 = vsyncadd [#allocation7], %s372
          %s374 = smul.addr %s370, 64
          %s375 = scalar_lea.hbm %s2, %s374
          %s376 = sshll.u32 [#allocation6], 4
          %s377 = int_to_ptr.vmem [resolvable:$true] %s376
          %382 = dma.hbm_to_vmem [thread:$0]  %s375, 4096, %s377, [#allocation7], 128, 128, 8
        $region20: #{tpu_custom_call.1} parent=11 // pred_fallthru
          _
        // Predicated region
        $region21: #{tpu_custom_call.1} parent=11 // pred_check
          %p383 = pneg %p149
        $region22: #{tpu_custom_call.1} parent=11 // pred_check_branch
          %385 = sbr.rel (%p383) target = $region24
        $region23: #{tpu_custom_call.1} parent=11 // pred_region
          %s386 = smul.u32 2, %s41
          %s388 = ssub.s32 4096, 4096
          %389 = vsyncadd [#allocation7], %s388
          %s390 = smul.addr %s386, 64
          %s391 = scalar_lea.hbm %s3, %s390
          %s392 = sshll.u32 [#allocation8], 4
          %s393 = int_to_ptr.vmem [resolvable:$true] %s392
          %398 = dma.hbm_to_vmem [thread:$0]  %s391, 4096, %s393, [#allocation7], 128, 128, 8
        $region24: #{tpu_custom_call.1} parent=11 // pred_fallthru
          _
        // Predicated region
        $region25: #{tpu_custom_call.1} parent=11 // pred_check
          %p399 = pneg %p175
        $region26: #{tpu_custom_call.1} parent=11 // pred_check_branch
          %401 = sbr.rel (%p399) target = $region28
        $region27: #{tpu_custom_call.1} parent=11 // pred_region
          %s402 = smul.u32 2, %s41
          %s404 = ssub.s32 4096, 4096
          %405 = vsyncadd [#allocation10], %s404
          %s406 = smul.addr %s402, 64
          %s407 = scalar_lea.hbm %s4, %s406
          %s408 = sshll.u32 [#allocation9], 4
          %s409 = int_to_ptr.vmem [resolvable:$true] %s408
          %414 = dma.hbm_to_vmem [thread:$0]  %s407, 4096, %s409, [#allocation10], 128, 128, 8
        $region28: #{tpu_custom_call.1} parent=11 // pred_fallthru
          _
        // Predicated region
        $region29: #{tpu_custom_call.1} parent=11 // pred_check
          %p415 = pneg %p203
        $region30: #{tpu_custom_call.1} parent=11 // pred_check_branch
          %417 = sbr.rel (%p415) target = $region32
        $region31: #{tpu_custom_call.1} parent=11 // pred_region
          %s418 = smul.u32 16, %s40
          %s419 = smul.u32 2, %s41
          %s421 = ssub.s32 4096, 4096
          %422 = vsyncadd [#allocation10], %s421
          %s423 = smul.addr %s418, 2
          %s424 = sadd.s32 %s419, %s423
          %s425 = smul.addr %s424, 128
          %s426 = scalar_lea.hbm %s5, %s425
          %s427 = sshll.u32 [#allocation11], 4
          %s428 = int_to_ptr.vmem [resolvable:$true] %s427
          %433 = dma.hbm_to_vmem [thread:$0]  %s426, 4096, %s428, [#allocation10], 256, 256, 16
        $region32: #{tpu_custom_call.1} parent=11 // pred_fallthru
          _
        // Predicated region
        $region33: #{tpu_custom_call.1} parent=11 // pred_check
          %p434 = pneg %p231
        $region34: #{tpu_custom_call.1} parent=11 // pred_check_branch
          %436 = sbr.rel (%p434) target = $region36
        $region35: #{tpu_custom_call.1} parent=11 // pred_region
          %s437 = smul.u32 16, %s40
          %s438 = smul.u32 2, %s41
          %s440 = ssub.s32 4096, 4096
          %441 = vsyncadd [#allocation13], %s440
          %s442 = smul.addr %s437, 2
          %s443 = sadd.s32 %s438, %s442
          %s444 = smul.addr %s443, 128
          %s445 = scalar_lea.hbm %s6, %s444
          %s446 = sshll.u32 [#allocation12], 4
          %s447 = int_to_ptr.vmem [resolvable:$true] %s446
          %452 = dma.hbm_to_vmem [thread:$0]  %s445, 4096, %s447, [#allocation13], 256, 256, 16
        $region36: #{tpu_custom_call.1} parent=11 // pred_fallthru
          _
        // Predicated region
        $region37: #{tpu_custom_call.1} parent=11 // pred_check
          %p453 = pneg %p259
        $region38: #{tpu_custom_call.1} parent=11 // pred_check_branch
          %455 = sbr.rel (%p453) target = $region40
        $region39: #{tpu_custom_call.1} parent=11 // pred_region
          %s456 = smul.u32 16, %s40
          %s457 = smul.u32 2, %s41
          %s459 = ssub.s32 4096, 4096
          %460 = vsyncadd [#allocation13], %s459
          %s461 = smul.addr %s456, 2
          %s462 = sadd.s32 %s457, %s461
          %s463 = smul.addr %s462, 128
          %s464 = scalar_lea.hbm %s7, %s463
          %s465 = sshll.u32 [#allocation14], 4
          %s466 = int_to_ptr.vmem [resolvable:$true] %s465
          %471 = dma.hbm_to_vmem [thread:$0]  %s464, 4096, %s466, [#allocation13], 256, 256, 16
        $region40: #{tpu_custom_call.1} parent=11 // pred_fallthru
          _
      $region12: #{tpu_custom_call.1} parent=5 // pred_fallthru
        _
      %p472 = scmp.lt.s32.totalorder %s29, 2
      // Predicated region
      $region41: #{tpu_custom_call.1} parent=5 // pred_check
        %p473 = pneg %p472
      $region42: #{tpu_custom_call.1} parent=5 // pred_check_branch
        %475 = sbr.rel (%p473) target = $region44
      $region43: #{tpu_custom_call.1} parent=5 // pred_region
        // Predicated region
        $region45: #{tpu_custom_call.1} parent=43 // pred_check
          %p476 = pneg %p70
        $region46: #{tpu_custom_call.1} parent=43 // pred_check_branch
          %478 = sbr.rel (%p476) target = $region48
        $region47: #{tpu_custom_call.1} parent=43 // pred_region
          %s479 = sand.u32 %s60, 1
          %s480 = scalar_lea.sflag [#allocation4], %s479
          %s481 = sand.u32 %s60, 1
          %s482 = smul.addr %s481, 256
          %s483 = scalar_lea.vmem [#allocation3], %s482
          %s484 = smul.u32 16, %s37
          %s486 = ssub.s32 4096, 4096
          %487 = vsyncadd %s480, %s486
          %s488 = smul.addr %s484, 2
          %s489 = smul.addr %s36, 32
          %s490 = sadd.s32 %s488, %s489
          %s491 = smul.addr %s490, 128
          %s492 = scalar_lea.hbm %s0, %s491
          %s493 = sshll.u32 %s483, 4
          %s494 = int_to_ptr.vmem [resolvable:$true] %s493
          %499 = dma.hbm_to_vmem [thread:$0]  %s492, 4096, %s494, %s480, 256, 256, 16
        $region48: #{tpu_custom_call.1} parent=43 // pred_fallthru
          _
      $region44: #{tpu_custom_call.1} parent=5 // pred_fallthru
        _
      %p500 = scmp.le.s32.totalorder 1, %s29
      %p501 = scmp.lt.s32.totalorder %s29, 3
      %p502 = pnand %p500, %p501
      %p503 = pneg %p502
      // Predicated region
      $region49: #{tpu_custom_call.1} parent=5 // pred_check
        _
      $region50: #{tpu_custom_call.1} parent=5 // pred_check_branch
        %505 = sbr.rel (%p502) target = $region52
      $region51: #{tpu_custom_call.1} parent=5 // pred_region
        %s506 = ssub.s32 %s29, 1
        %s507 = sand.u32 %s63, 1
        %s508 = scalar_lea.sflag [#allocation4], %s507
        %s509 = sand.u32 %s63, 1
        %s510 = smul.addr %s509, 256
        %s511 = scalar_lea.vmem [#allocation3], %s510
        // Predicated region
        $region53: #{tpu_custom_call.1} parent=51 // pred_check
          %p512 = pneg %p76
        $region54: #{tpu_custom_call.1} parent=51 // pred_check_branch
          %514 = sbr.rel (%p512) target = $region56
        $region55: #{tpu_custom_call.1} parent=51 // pred_region
          %515 = dma.done %s508, 4096
        $region56: #{tpu_custom_call.1} parent=51 // pred_fallthru
          _
        // Predicated region
        $region57: #{tpu_custom_call.1} parent=51 // pred_check
          %p516 = pneg %p123
        $region58: #{tpu_custom_call.1} parent=51 // pred_check_branch
          %518 = sbr.rel (%p516) target = $region60
        $region59: #{tpu_custom_call.1} parent=51 // pred_region
          %519 = dma.done [#allocation7], 4096
        $region60: #{tpu_custom_call.1} parent=51 // pred_fallthru
          _
        // Predicated region
        $region61: #{tpu_custom_call.1} parent=51 // pred_check
          %p520 = pneg %p149
        $region62: #{tpu_custom_call.1} parent=51 // pred_check_branch
          %522 = sbr.rel (%p520) target = $region64
        $region63: #{tpu_custom_call.1} parent=51 // pred_region
          %523 = dma.done [#allocation7], 4096
        $region64: #{tpu_custom_call.1} parent=51 // pred_fallthru
          _
        // Predicated region
        $region65: #{tpu_custom_call.1} parent=51 // pred_check
          %p524 = pneg %p175
        $region66: #{tpu_custom_call.1} parent=51 // pred_check_branch
          %526 = sbr.rel (%p524) target = $region68
        $region67: #{tpu_custom_call.1} parent=51 // pred_region
          %527 = dma.done [#allocation10], 4096
        $region68: #{tpu_custom_call.1} parent=51 // pred_fallthru
          _
        // Predicated region
        $region69: #{tpu_custom_call.1} parent=51 // pred_check
          %p528 = pneg %p203
        $region70: #{tpu_custom_call.1} parent=51 // pred_check_branch
          %530 = sbr.rel (%p528) target = $region72
        $region71: #{tpu_custom_call.1} parent=51 // pred_region
          %531 = dma.done [#allocation10], 4096
        $region72: #{tpu_custom_call.1} parent=51 // pred_fallthru
          _
        // Predicated region
        $region73: #{tpu_custom_call.1} parent=51 // pred_check
          %p532 = pneg %p231
        $region74: #{tpu_custom_call.1} parent=51 // pred_check_branch
          %534 = sbr.rel (%p532) target = $region76
        $region75: #{tpu_custom_call.1} parent=51 // pred_region
          %535 = dma.done [#allocation13], 4096
        $region76: #{tpu_custom_call.1} parent=51 // pred_fallthru
          _
        // Predicated region
        $region77: #{tpu_custom_call.1} parent=51 // pred_check
          %p536 = pneg %p259
        $region78: #{tpu_custom_call.1} parent=51 // pred_check_branch
          %538 = sbr.rel (%p536) target = $region80
        $region79: #{tpu_custom_call.1} parent=51 // pred_region
          %539 = dma.done [#allocation13], 4096
        $region80: #{tpu_custom_call.1} parent=51 // pred_fallthru
          _
        %s540 = sand.u32 %s63, 1
        %s541 = scalar_lea.sflag [#allocation4], %s540
        %s542 = sand.u32 %s63, 1
        %s543 = smul.addr %s542, 256
        %s544 = scalar_lea.vmem [#allocation3], %s543
        %p545 = pneg %p76
        %p546 = pneg %p73
        %p547 = pneg %p97
        %p548 = pneg %p94
        %p549 = pneg %p123
        %p550 = pneg %p120
        %p551 = pneg %p149
        %p552 = pneg %p146
        %p553 = pneg %p175
        %p554 = pneg %p172
        %p555 = pneg %p203
        %p556 = pneg %p200
        %p557 = pneg %p231
        %p558 = pneg %p228
        %p559 = pneg %p259
        %p560 = pneg %p256
        %p561 = pneg %p289
        %p562 = pneg %p286
        %s563 = sand.u32 %s276, 1
        %s564 = scalar_lea.sflag [#allocation5], %s563
        %s565 = sand.u32 %s276, 1
        %s566 = smul.addr %s565, 128
        %s567 = scalar_lea.vmem [#allocation15], %s566
        %p568 = pneg %p319
        %p569 = pneg %p316
        %s570 = sand.u32 %s34, 1
        %s571 = scalar_lea.sflag [#allocation17], %s570
        %s572 = sand.u32 %s306, 1
        %s573 = smul.addr %s572, 128
        %s574 = scalar_lea.vmem [#allocation16], %s573
        %p575 = pneg %p349
        %p576 = pneg %p346
        %s577 = sand.u32 %s34, 1
        %s578 = scalar_lea.sflag [#allocation17], %s577
        %s579 = sand.u32 %s336, 1
        %s580 = smul.addr %s579, 128
        %s581 = scalar_lea.vmem [#allocation18], %s580
        %s582 = smul.u32 16, %s40
        %s583 = smul.u32 2, %s41
        %s584 = smul.u32 2, %s41
        %s585 = smul.u32 2, %s41
        %s586 = smul.u32 16, %s40
        %s587 = smul.u32 2, %s41
        %s588 = smul.u32 16, %s40
        %s589 = smul.u32 2, %s41
        %s590 = smul.u32 16, %s40
        %s591 = smul.u32 2, %s41
        %s592 = smul.u32 16, %s40
        %s593 = smul.u32 2, %s41
        %s594 = smul.u32 16, %s40
        %s595 = smul.u32 2, %s41
        %s596 = smul.u32 16, %s40
        %s597 = smul.u32 2, %s41
        %p598 = scmp.eq.s32.totalorder %s41, 0
        // Predicated region
        $region81: #{tpu_custom_call.1} parent=51 // pred_check
          %p599 = pneg %p598
        $region82: #{tpu_custom_call.1} parent=51 // pred_check_branch
          %601 = sbr.rel (%p599) target = $region84
        $region83: #{tpu_custom_call.1} parent=51 // pred_region
          %v602 = vld [vmem:[%s511] sm:$0xff]
          %v603 = vld [vmem:[%s511 + $0x8] sm:$0xff]
          %v604 = vld [vmem:[%s511 + $0x10] sm:$0xff]
          %v605 = vld [vmem:[%s511 + $0x18] sm:$0xff]
          %v606 = vld [vmem:[%s511 + $0x20] sm:$0xff]
          %v607 = vld [vmem:[%s511 + $0x28] sm:$0xff]
          %v608 = vld [vmem:[%s511 + $0x30] sm:$0xff]
          %v609 = vld [vmem:[%s511 + $0x38] sm:$0xff]
          %v610 = vld [vmem:[%s511 + $0x40] sm:$0xff]
          %v611 = vld [vmem:[%s511 + $0x48] sm:$0xff]
          %v612 = vld [vmem:[%s511 + $0x50] sm:$0xff]
          %v613 = vld [vmem:[%s511 + $0x58] sm:$0xff]
          %v614 = vld [vmem:[%s511 + $0x60] sm:$0xff]
          %v615 = vld [vmem:[%s511 + $0x68] sm:$0xff]
          %v616 = vld [vmem:[%s511 + $0x70] sm:$0xff]
          %v617 = vld [vmem:[%s511 + $0x78] sm:$0xff]
          %v618 = vld [vmem:[%s511 + $0x80] sm:$0xff]
          %v619 = vld [vmem:[%s511 + $0x88] sm:$0xff]
          %v620 = vld [vmem:[%s511 + $0x90] sm:$0xff]
          %v621 = vld [vmem:[%s511 + $0x98] sm:$0xff]
          %v622 = vld [vmem:[%s511 + $0xa0] sm:$0xff]
          %v623 = vld [vmem:[%s511 + $0xa8] sm:$0xff]
          %v624 = vld [vmem:[%s511 + $0xb0] sm:$0xff]
          %v625 = vld [vmem:[%s511 + $0xb8] sm:$0xff]
          %v626 = vld [vmem:[%s511 + $0xc0] sm:$0xff]
          %v627 = vld [vmem:[%s511 + $0xc8] sm:$0xff]
          %v628 = vld [vmem:[%s511 + $0xd0] sm:$0xff]
          %v629 = vld [vmem:[%s511 + $0xd8] sm:$0xff]
          %v630 = vld [vmem:[%s511 + $0xe0] sm:$0xff]
          %v631 = vld [vmem:[%s511 + $0xe8] sm:$0xff]
          %v632 = vld [vmem:[%s511 + $0xf0] sm:$0xff]
          %v633 = vld [vmem:[%s511 + $0xf8] sm:$0xff]
          %v634 = vmul.f32 %v602, %v602
          %v635 = vmul.f32 %v603, %v603
          %v636 = vmul.f32 %v604, %v604
          %v637 = vmul.f32 %v605, %v605
          %v638 = vmul.f32 %v606, %v606
          %v639 = vmul.f32 %v607, %v607
          %v640 = vmul.f32 %v608, %v608
          %v641 = vmul.f32 %v609, %v609
          %v642 = vmul.f32 %v610, %v610
          %v643 = vmul.f32 %v611, %v611
          %v644 = vmul.f32 %v612, %v612
          %v645 = vmul.f32 %v613, %v613
          %v646 = vmul.f32 %v614, %v614
          %v647 = vmul.f32 %v615, %v615
          %v648 = vmul.f32 %v616, %v616
          %v649 = vmul.f32 %v617, %v617
          %v650 = vmul.f32 %v618, %v618
          %v651 = vmul.f32 %v619, %v619
          %v652 = vmul.f32 %v620, %v620
          %v653 = vmul.f32 %v621, %v621
          %v654 = vmul.f32 %v622, %v622
          %v655 = vmul.f32 %v623, %v623
          %v656 = vmul.f32 %v624, %v624
          %v657 = vmul.f32 %v625, %v625
          %v658 = vmul.f32 %v626, %v626
          %v659 = vmul.f32 %v627, %v627
          %v660 = vmul.f32 %v628, %v628
          %v661 = vmul.f32 %v629, %v629
          %v662 = vmul.f32 %v630, %v630
          %v663 = vmul.f32 %v631, %v631
          %v664 = vmul.f32 %v632, %v632
          %v665 = vmul.f32 %v633, %v633
          %v666 = vadd.f32 %v634, %v635
          %667 = vadd.xlane.f32.xlu0 %v666
          %v668 = vpop.xlane.xlu0 %667
          %v669 = vadd.f32 %v636, %v637
          %670 = vadd.xlane.f32.xlu0 %v669
          %v671 = vpop.xlane.xlu0 %670
          %v672 = vadd.f32 %v638, %v639
          %673 = vadd.xlane.f32.xlu0 %v672
          %v674 = vpop.xlane.xlu0 %673
          %v675 = vadd.f32 %v640, %v641
          %676 = vadd.xlane.f32.xlu0 %v675
          %v677 = vpop.xlane.xlu0 %676
          %v678 = vadd.f32 %v642, %v643
          %679 = vadd.xlane.f32.xlu0 %v678
          %v680 = vpop.xlane.xlu0 %679
          %v681 = vadd.f32 %v644, %v645
          %682 = vadd.xlane.f32.xlu0 %v681
          %v683 = vpop.xlane.xlu0 %682
          %v684 = vadd.f32 %v646, %v647
          %685 = vadd.xlane.f32.xlu0 %v684
          %v686 = vpop.xlane.xlu0 %685
          %v687 = vadd.f32 %v648, %v649
          %688 = vadd.xlane.f32.xlu0 %v687
          %v689 = vpop.xlane.xlu0 %688
          %v690 = vadd.f32 %v650, %v651
          %691 = vadd.xlane.f32.xlu0 %v690
          %v692 = vpop.xlane.xlu0 %691
          %v693 = vadd.f32 %v652, %v653
          %694 = vadd.xlane.f32.xlu0 %v693
          %v695 = vpop.xlane.xlu0 %694
          %v696 = vadd.f32 %v654, %v655
          %697 = vadd.xlane.f32.xlu0 %v696
          %v698 = vpop.xlane.xlu0 %697
          %v699 = vadd.f32 %v656, %v657
          %700 = vadd.xlane.f32.xlu0 %v699
          %v701 = vpop.xlane.xlu0 %700
          %v702 = vadd.f32 %v658, %v659
          %703 = vadd.xlane.f32.xlu0 %v702
          %v704 = vpop.xlane.xlu0 %703
          %v705 = vadd.f32 %v660, %v661
          %706 = vadd.xlane.f32.xlu0 %v705
          %v707 = vpop.xlane.xlu0 %706
          %v708 = vadd.f32 %v662, %v663
          %709 = vadd.xlane.f32.xlu0 %v708
          %v710 = vpop.xlane.xlu0 %709
          %v711 = vadd.f32 %v664, %v665
          %712 = vadd.xlane.f32.xlu0 %v711
          %v713 = vpop.xlane.xlu0 %712
          %v714 = vrcp.pop 256.0
          %v715 = vmul.f32 %v668, %v714
          %v716 = vmul.f32 %v671, %v714
          %v717 = vmul.f32 %v674, %v714
          %v718 = vmul.f32 %v677, %v714
          %v719 = vmul.f32 %v680, %v714
          %v720 = vmul.f32 %v683, %v714
          %v721 = vmul.f32 %v686, %v714
          %v722 = vmul.f32 %v689, %v714
          %v723 = vmul.f32 %v692, %v714
          %v724 = vmul.f32 %v695, %v714
          %v725 = vmul.f32 %v698, %v714
          %v726 = vmul.f32 %v701, %v714
          %v727 = vmul.f32 %v704, %v714
          %v728 = vmul.f32 %v707, %v714
          %v729 = vmul.f32 %v710, %v714
          %v730 = vmul.f32 %v713, %v714
          %v731 = vadd.f32 %v715, 1e-06
          %v732 = vadd.f32 %v716, 1e-06
          %v733 = vadd.f32 %v717, 1e-06
          %v734 = vadd.f32 %v718, 1e-06
          %v735 = vadd.f32 %v719, 1e-06
          %v736 = vadd.f32 %v720, 1e-06
          %v737 = vadd.f32 %v721, 1e-06
          %v738 = vadd.f32 %v722, 1e-06
          %v739 = vadd.f32 %v723, 1e-06
          %v740 = vadd.f32 %v724, 1e-06
          %v741 = vadd.f32 %v725, 1e-06
          %v742 = vadd.f32 %v726, 1e-06
          %v743 = vadd.f32 %v727, 1e-06
          %v744 = vadd.f32 %v728, 1e-06
          %v745 = vadd.f32 %v729, 1e-06
          %v746 = vadd.f32 %v730, 1e-06
          %v747 = vrsqrt.pop %v731
          %v748 = vrsqrt.pop %v732
          %v749 = vrsqrt.pop %v733
          %v750 = vrsqrt.pop %v734
          %v751 = vrsqrt.pop %v735
          %v752 = vrsqrt.pop %v736
          %v753 = vrsqrt.pop %v737
          %v754 = vrsqrt.pop %v738
          %v755 = vrsqrt.pop %v739
          %v756 = vrsqrt.pop %v740
          %v757 = vrsqrt.pop %v741
          %v758 = vrsqrt.pop %v742
          %v759 = vrsqrt.pop %v743
          %v760 = vrsqrt.pop %v744
          %v761 = vrsqrt.pop %v745
          %v762 = vrsqrt.pop %v746
          %v763 = vmul.f32 %v602, %v747
          %v764 = vmul.f32 %v603, %v747
          %v765 = vmul.f32 %v604, %v748
          %v766 = vmul.f32 %v605, %v748
          %v767 = vmul.f32 %v606, %v749
          %v768 = vmul.f32 %v607, %v749
          %v769 = vmul.f32 %v608, %v750
          %v770 = vmul.f32 %v609, %v750
          %v771 = vmul.f32 %v610, %v751
          %v772 = vmul.f32 %v611, %v751
          %v773 = vmul.f32 %v612, %v752
          %v774 = vmul.f32 %v613, %v752
          %v775 = vmul.f32 %v614, %v753
          %v776 = vmul.f32 %v615, %v753
          %v777 = vmul.f32 %v616, %v754
          %v778 = vmul.f32 %v617, %v754
          %v779 = vmul.f32 %v618, %v755
          %v780 = vmul.f32 %v619, %v755
          %v781 = vmul.f32 %v620, %v756
          %v782 = vmul.f32 %v621, %v756
          %v783 = vmul.f32 %v622, %v757
          %v784 = vmul.f32 %v623, %v757
          %v785 = vmul.f32 %v624, %v758
          %v786 = vmul.f32 %v625, %v758
          %v787 = vmul.f32 %v626, %v759
          %v788 = vmul.f32 %v627, %v759
          %v789 = vmul.f32 %v628, %v760
          %v790 = vmul.f32 %v629, %v760
          %v791 = vmul.f32 %v630, %v761
          %v792 = vmul.f32 %v631, %v761
          %v793 = vmul.f32 %v632, %v762
          %v794 = vmul.f32 %v633, %v762
          %v795 = vld [vmem:[%s1] sm:$0x3]
          %v797 = vlaneseq
          %v798 = vshrl.u32 %v797, 7
          %v799 = vsub.s32 0, %v798
          %v800 = vrot.slane %v795, %v799
          %v801 = vlaneseq
          %v802 = vshrl.u32 %v801, 7
          %v803 = vsub.s32 1, %v802
          %v804 = vrot.slane %v795, %v803
          %v807 = vmul.f32 %v763, %v800
          %v808 = vmul.f32 %v764, %v804
          %v809 = vmul.f32 %v765, %v800
          %v810 = vmul.f32 %v766, %v804
          %v811 = vmul.f32 %v767, %v800
          %v812 = vmul.f32 %v768, %v804
          %v813 = vmul.f32 %v769, %v800
          %v814 = vmul.f32 %v770, %v804
          %v815 = vmul.f32 %v771, %v800
          %v816 = vmul.f32 %v772, %v804
          %v817 = vmul.f32 %v773, %v800
          %v818 = vmul.f32 %v774, %v804
          %v819 = vmul.f32 %v775, %v800
          %v820 = vmul.f32 %v776, %v804
          %v821 = vmul.f32 %v777, %v800
          %v822 = vmul.f32 %v778, %v804
          %v823 = vmul.f32 %v779, %v800
          %v824 = vmul.f32 %v780, %v804
          %v825 = vmul.f32 %v781, %v800
          %v826 = vmul.f32 %v782, %v804
          %v827 = vmul.f32 %v783, %v800
          %v828 = vmul.f32 %v784, %v804
          %v829 = vmul.f32 %v785, %v800
          %v830 = vmul.f32 %v786, %v804
          %v831 = vmul.f32 %v787, %v800
          %v832 = vmul.f32 %v788, %v804
          %v833 = vmul.f32 %v789, %v800
          %v834 = vmul.f32 %v790, %v804
          %v835 = vmul.f32 %v791, %v800
          %v836 = vmul.f32 %v792, %v804
          %v837 = vmul.f32 %v793, %v800
          %v838 = vmul.f32 %v794, %v804
          %v839 = vpack.c.bf16 %v809, %v807
          %v840 = vpack.c.bf16 %v810, %v808
          %v841 = vpack.c.bf16 %v813, %v811
          %v842 = vpack.c.bf16 %v814, %v812
          %v843 = vpack.c.bf16 %v817, %v815
          %v844 = vpack.c.bf16 %v818, %v816
          %v845 = vpack.c.bf16 %v821, %v819
          %v846 = vpack.c.bf16 %v822, %v820
          %v847 = vpack.c.bf16 %v825, %v823
          %v848 = vpack.c.bf16 %v826, %v824
          %v849 = vpack.c.bf16 %v829, %v827
          %v850 = vpack.c.bf16 %v830, %v828
          %v851 = vpack.c.bf16 %v833, %v831
          %v852 = vpack.c.bf16 %v834, %v832
          %v853 = vpack.c.bf16 %v837, %v835
          %v854 = vpack.c.bf16 %v838, %v836
          %855 = vst [vmem:[#allocation2] sm:$0xff] %v839
          %856 = vst [vmem:[#allocation2 + $0x8] sm:$0xff] %v840
          %857 = vst [vmem:[#allocation2 + $0x10] sm:$0xff] %v841
          %858 = vst [vmem:[#allocation2 + $0x18] sm:$0xff] %v842
          %859 = vst [vmem:[#allocation2 + $0x20] sm:$0xff] %v843
          %860 = vst [vmem:[#allocation2 + $0x28] sm:$0xff] %v844
          %861 = vst [vmem:[#allocation2 + $0x30] sm:$0xff] %v845
          %862 = vst [vmem:[#allocation2 + $0x38] sm:$0xff] %v846
          %863 = vst [vmem:[#allocation2 + $0x40] sm:$0xff] %v847
          %864 = vst [vmem:[#allocation2 + $0x48] sm:$0xff] %v848
          %865 = vst [vmem:[#allocation2 + $0x50] sm:$0xff] %v849
          %866 = vst [vmem:[#allocation2 + $0x58] sm:$0xff] %v850
          %867 = vst [vmem:[#allocation2 + $0x60] sm:$0xff] %v851
          %868 = vst [vmem:[#allocation2 + $0x68] sm:$0xff] %v852
          %869 = vst [vmem:[#allocation2 + $0x70] sm:$0xff] %v853
          %870 = vst [vmem:[#allocation2 + $0x78] sm:$0xff] %v854
        $region84: #{tpu_custom_call.1} parent=51 // pred_fallthru
          _
        %v871 = vld [vmem:[#allocation2] sm:$0xff]
        %v872 = vld [vmem:[#allocation2 + $0x8] sm:$0xff]
        %v873 = vld [vmem:[#allocation2 + $0x10] sm:$0xff]
        %v874 = vld [vmem:[#allocation2 + $0x18] sm:$0xff]
        %v875 = vld [vmem:[#allocation2 + $0x20] sm:$0xff]
        %v876 = vld [vmem:[#allocation2 + $0x28] sm:$0xff]
        %v877 = vld [vmem:[#allocation2 + $0x30] sm:$0xff]
        %v878 = vld [vmem:[#allocation2 + $0x38] sm:$0xff]
        %v879 = vld [vmem:[#allocation2 + $0x40] sm:$0xff]
        %v880 = vld [vmem:[#allocation2 + $0x48] sm:$0xff]
        %v881 = vld [vmem:[#allocation2 + $0x50] sm:$0xff]
        %v882 = vld [vmem:[#allocation2 + $0x58] sm:$0xff]
        %v883 = vld [vmem:[#allocation2 + $0x60] sm:$0xff]
        %v884 = vld [vmem:[#allocation2 + $0x68] sm:$0xff]
        %v885 = vld [vmem:[#allocation2 + $0x70] sm:$0xff]
        %v886 = vld [vmem:[#allocation2 + $0x78] sm:$0xff]
        %v887 = vld [vmem:[#allocation11] sm:$0xff]
        %v888 = vld [vmem:[#allocation11 + $0x8] sm:$0xff]
        %v889 = vld [vmem:[#allocation11 + $0x10] sm:$0xff]
        %v890 = vld [vmem:[#allocation11 + $0x18] sm:$0xff]
        %v891 = vld [vmem:[#allocation11 + $0x20] sm:$0xff]
        %v892 = vld [vmem:[#allocation11 + $0x28] sm:$0xff]
        %v893 = vld [vmem:[#allocation11 + $0x30] sm:$0xff]
        %v894 = vld [vmem:[#allocation11 + $0x38] sm:$0xff]
        %v895 = vld [vmem:[#allocation11 + $0x40] sm:$0xff]
        %v896 = vld [vmem:[#allocation11 + $0x48] sm:$0xff]
        %v897 = vld [vmem:[#allocation11 + $0x50] sm:$0xff]
        %v898 = vld [vmem:[#allocation11 + $0x58] sm:$0xff]
        %v899 = vld [vmem:[#allocation11 + $0x60] sm:$0xff]
        %v900 = vld [vmem:[#allocation11 + $0x68] sm:$0xff]
        %v901 = vld [vmem:[#allocation11 + $0x70] sm:$0xff]
        %v902 = vld [vmem:[#allocation11 + $0x78] sm:$0xff]
        %v903 = vld [vmem:[#allocation11 + $0x80] sm:$0xff]
        %v904 = vld [vmem:[#allocation11 + $0x88] sm:$0xff]
        %v905 = vld [vmem:[#allocation11 + $0x90] sm:$0xff]
        %v906 = vld [vmem:[#allocation11 + $0x98] sm:$0xff]
        %v907 = vld [vmem:[#allocation11 + $0xa0] sm:$0xff]
        %v908 = vld [vmem:[#allocation11 + $0xa8] sm:$0xff]
        %v909 = vld [vmem:[#allocation11 + $0xb0] sm:$0xff]
        %v910 = vld [vmem:[#allocation11 + $0xb8] sm:$0xff]
        %v911 = vld [vmem:[#allocation11 + $0xc0] sm:$0xff]
        %v912 = vld [vmem:[#allocation11 + $0xc8] sm:$0xff]
        %v913 = vld [vmem:[#allocation11 + $0xd0] sm:$0xff]
        %v914 = vld [vmem:[#allocation11 + $0xd8] sm:$0xff]
        %v915 = vld [vmem:[#allocation11 + $0xe0] sm:$0xff]
        %v916 = vld [vmem:[#allocation11 + $0xe8] sm:$0xff]
        %v917 = vld [vmem:[#allocation11 + $0xf0] sm:$0xff]
        %v918 = vld [vmem:[#allocation11 + $0xf8] sm:$0xff]
        %v919 = vld [vmem:[#allocation12] sm:$0xff]
        %v920 = vld [vmem:[#allocation12 + $0x8] sm:$0xff]
        %v921 = vld [vmem:[#allocation12 + $0x10] sm:$0xff]
        %v922 = vld [vmem:[#allocation12 + $0x18] sm:$0xff]
        %v923 = vld [vmem:[#allocation12 + $0x20] sm:$0xff]
        %v924 = vld [vmem:[#allocation12 + $0x28] sm:$0xff]
        %v925 = vld [vmem:[#allocation12 + $0x30] sm:$0xff]
        %v926 = vld [vmem:[#allocation12 + $0x38] sm:$0xff]
        %v927 = vld [vmem:[#allocation12 + $0x40] sm:$0xff]
        %v928 = vld [vmem:[#allocation12 + $0x48] sm:$0xff]
        %v929 = vld [vmem:[#allocation12 + $0x50] sm:$0xff]
        %v930 = vld [vmem:[#allocation12 + $0x58] sm:$0xff]
        %v931 = vld [vmem:[#allocation12 + $0x60] sm:$0xff]
        %v932 = vld [vmem:[#allocation12 + $0x68] sm:$0xff]
        %v933 = vld [vmem:[#allocation12 + $0x70] sm:$0xff]
        %v934 = vld [vmem:[#allocation12 + $0x78] sm:$0xff]
        %v935 = vld [vmem:[#allocation12 + $0x80] sm:$0xff]
        %v936 = vld [vmem:[#allocation12 + $0x88] sm:$0xff]
        %v937 = vld [vmem:[#allocation12 + $0x90] sm:$0xff]
        %v938 = vld [vmem:[#allocation12 + $0x98] sm:$0xff]
        %v939 = vld [vmem:[#allocation12 + $0xa0] sm:$0xff]
        %v940 = vld [vmem:[#allocation12 + $0xa8] sm:$0xff]
        %v941 = vld [vmem:[#allocation12 + $0xb0] sm:$0xff]
        %v942 = vld [vmem:[#allocation12 + $0xb8] sm:$0xff]
        %v943 = vld [vmem:[#allocation12 + $0xc0] sm:$0xff]
        %v944 = vld [vmem:[#allocation12 + $0xc8] sm:$0xff]
        %v945 = vld [vmem:[#allocation12 + $0xd0] sm:$0xff]
        %v946 = vld [vmem:[#allocation12 + $0xd8] sm:$0xff]
        %v947 = vld [vmem:[#allocation12 + $0xe0] sm:$0xff]
        %v948 = vld [vmem:[#allocation12 + $0xe8] sm:$0xff]
        %v949 = vld [vmem:[#allocation12 + $0xf0] sm:$0xff]
        %v950 = vld [vmem:[#allocation12 + $0xf8] sm:$0xff]
        %v951 = vld [vmem:[#allocation14] sm:$0xff]
        %v952 = vld [vmem:[#allocation14 + $0x8] sm:$0xff]
        %v953 = vld [vmem:[#allocation14 + $0x10] sm:$0xff]
        %v954 = vld [vmem:[#allocation14 + $0x18] sm:$0xff]
        %v955 = vld [vmem:[#allocation14 + $0x20] sm:$0xff]
        %v956 = vld [vmem:[#allocation14 + $0x28] sm:$0xff]
        %v957 = vld [vmem:[#allocation14 + $0x30] sm:$0xff]
        %v958 = vld [vmem:[#allocation14 + $0x38] sm:$0xff]
        %v959 = vld [vmem:[#allocation14 + $0x40] sm:$0xff]
        %v960 = vld [vmem:[#allocation14 + $0x48] sm:$0xff]
        %v961 = vld [vmem:[#allocation14 + $0x50] sm:$0xff]
        %v962 = vld [vmem:[#allocation14 + $0x58] sm:$0xff]
        %v963 = vld [vmem:[#allocation14 + $0x60] sm:$0xff]
        %v964 = vld [vmem:[#allocation14 + $0x68] sm:$0xff]
        %v965 = vld [vmem:[#allocation14 + $0x70] sm:$0xff]
        %v966 = vld [vmem:[#allocation14 + $0x78] sm:$0xff]
        %v967 = vld [vmem:[#allocation14 + $0x80] sm:$0xff]
        %v968 = vld [vmem:[#allocation14 + $0x88] sm:$0xff]
        %v969 = vld [vmem:[#allocation14 + $0x90] sm:$0xff]
        %v970 = vld [vmem:[#allocation14 + $0x98] sm:$0xff]
        %v971 = vld [vmem:[#allocation14 + $0xa0] sm:$0xff]
        %v972 = vld [vmem:[#allocation14 + $0xa8] sm:$0xff]
        %v973 = vld [vmem:[#allocation14 + $0xb0] sm:$0xff]
        %v974 = vld [vmem:[#allocation14 + $0xb8] sm:$0xff]
        %v975 = vld [vmem:[#allocation14 + $0xc0] sm:$0xff]
        %v976 = vld [vmem:[#allocation14 + $0xc8] sm:$0xff]
        %v977 = vld [vmem:[#allocation14 + $0xd0] sm:$0xff]
        %v978 = vld [vmem:[#allocation14 + $0xd8] sm:$0xff]
        %v979 = vld [vmem:[#allocation14 + $0xe0] sm:$0xff]
        %v980 = vld [vmem:[#allocation14 + $0xe8] sm:$0xff]
        %v981 = vld [vmem:[#allocation14 + $0xf0] sm:$0xff]
        %v982 = vld [vmem:[#allocation14 + $0xf8] sm:$0xff]
        %v983 = vld [vmem:[#allocation6] sm:$0xff]
        %v984 = vld [vmem:[#allocation6 + $0x8] sm:$0xff]
        %v985 = vld [vmem:[#allocation6 + $0x10] sm:$0xff]
        %v986 = vld [vmem:[#allocation6 + $0x18] sm:$0xff]
        %v987 = vld [vmem:[#allocation6 + $0x20] sm:$0xff]
        %v988 = vld [vmem:[#allocation6 + $0x28] sm:$0xff]
        %v989 = vld [vmem:[#allocation6 + $0x30] sm:$0xff]
        %v990 = vld [vmem:[#allocation6 + $0x38] sm:$0xff]
        %v991 = vld [vmem:[#allocation6 + $0x40] sm:$0xff]
        %v992 = vld [vmem:[#allocation6 + $0x48] sm:$0xff]
        %v993 = vld [vmem:[#allocation6 + $0x50] sm:$0xff]
        %v994 = vld [vmem:[#allocation6 + $0x58] sm:$0xff]
        %v995 = vld [vmem:[#allocation6 + $0x60] sm:$0xff]
        %v996 = vld [vmem:[#allocation6 + $0x68] sm:$0xff]
        %v997 = vld [vmem:[#allocation6 + $0x70] sm:$0xff]
        %v998 = vld [vmem:[#allocation6 + $0x78] sm:$0xff]
        %v999 = vld [vmem:[#allocation6 + $0x80] sm:$0xff]
        %v1000 = vld [vmem:[#allocation6 + $0x88] sm:$0xff]
        %v1001 = vld [vmem:[#allocation6 + $0x90] sm:$0xff]
        %v1002 = vld [vmem:[#allocation6 + $0x98] sm:$0xff]
        %v1003 = vld [vmem:[#allocation6 + $0xa0] sm:$0xff]
        %v1004 = vld [vmem:[#allocation6 + $0xa8] sm:$0xff]
        %v1005 = vld [vmem:[#allocation6 + $0xb0] sm:$0xff]
        %v1006 = vld [vmem:[#allocation6 + $0xb8] sm:$0xff]
        %v1007 = vld [vmem:[#allocation6 + $0xc0] sm:$0xff]
        %v1008 = vld [vmem:[#allocation6 + $0xc8] sm:$0xff]
        %v1009 = vld [vmem:[#allocation6 + $0xd0] sm:$0xff]
        %v1010 = vld [vmem:[#allocation6 + $0xd8] sm:$0xff]
        %v1011 = vld [vmem:[#allocation6 + $0xe0] sm:$0xff]
        %v1012 = vld [vmem:[#allocation6 + $0xe8] sm:$0xff]
        %v1013 = vld [vmem:[#allocation6 + $0xf0] sm:$0xff]
        %v1014 = vld [vmem:[#allocation6 + $0xf8] sm:$0xff]
        %v1047 = vunpack.c.l.b16 %v983
        %v1048 = vunpack.c.h.b16 %v983
        %v1049 = vunpack.c.l.b16 %v984
        %v1050 = vunpack.c.h.b16 %v984
        %v1051 = vunpack.c.l.b16 %v985
        %v1052 = vunpack.c.h.b16 %v985
        %v1053 = vunpack.c.l.b16 %v986
        %v1054 = vunpack.c.h.b16 %v986
        %v1055 = vunpack.c.l.b16 %v987
        %v1056 = vunpack.c.h.b16 %v987
        %v1057 = vunpack.c.l.b16 %v988
        %v1058 = vunpack.c.h.b16 %v988
        %v1059 = vunpack.c.l.b16 %v989
        %v1060 = vunpack.c.h.b16 %v989
        %v1061 = vunpack.c.l.b16 %v990
        %v1062 = vunpack.c.h.b16 %v990
        %v1063 = vunpack.c.l.b16 %v991
        %v1064 = vunpack.c.h.b16 %v991
        %v1065 = vunpack.c.l.b16 %v992
        %v1066 = vunpack.c.h.b16 %v992
        %v1067 = vunpack.c.l.b16 %v993
        %v1068 = vunpack.c.h.b16 %v993
        %v1069 = vunpack.c.l.b16 %v994
        %v1070 = vunpack.c.h.b16 %v994
        %v1071 = vunpack.c.l.b16 %v995
        %v1072 = vunpack.c.h.b16 %v995
        %v1073 = vunpack.c.l.b16 %v996
        %v1074 = vunpack.c.h.b16 %v996
        %v1075 = vunpack.c.l.b16 %v997
        %v1076 = vunpack.c.h.b16 %v997
        %v1077 = vunpack.c.l.b16 %v998
        %v1078 = vunpack.c.h.b16 %v998
        %v1079 = vunpack.c.l.b16 %v999
        %v1080 = vunpack.c.h.b16 %v999
        %v1081 = vunpack.c.l.b16 %v1000
        %v1082 = vunpack.c.h.b16 %v1000
        %v1083 = vunpack.c.l.b16 %v1001
        %v1084 = vunpack.c.h.b16 %v1001
        %v1085 = vunpack.c.l.b16 %v1002
        %v1086 = vunpack.c.h.b16 %v1002
        %v1087 = vunpack.c.l.b16 %v1003
        %v1088 = vunpack.c.h.b16 %v1003
        %v1089 = vunpack.c.l.b16 %v1004
        %v1090 = vunpack.c.h.b16 %v1004
        %v1091 = vunpack.c.l.b16 %v1005
        %v1092 = vunpack.c.h.b16 %v1005
        %v1093 = vunpack.c.l.b16 %v1006
        %v1094 = vunpack.c.h.b16 %v1006
        %v1095 = vunpack.c.l.b16 %v1007
        %v1096 = vunpack.c.h.b16 %v1007
        %v1097 = vunpack.c.l.b16 %v1008
        %v1098 = vunpack.c.h.b16 %v1008
        %v1099 = vunpack.c.l.b16 %v1009
        %v1100 = vunpack.c.h.b16 %v1009
        %v1101 = vunpack.c.l.b16 %v1010
        %v1102 = vunpack.c.h.b16 %v1010
        %v1103 = vunpack.c.l.b16 %v1011
        %v1104 = vunpack.c.h.b16 %v1011
        %v1105 = vunpack.c.l.b16 %v1012
        %v1106 = vunpack.c.h.b16 %v1012
        %v1107 = vunpack.c.l.b16 %v1013
        %v1108 = vunpack.c.h.b16 %v1013
        %v1109 = vunpack.c.l.b16 %v1014
        %v1110 = vunpack.c.h.b16 %v1014
        %v1111 = vpack.c.b16 %v1049, %v1047
        %v1112 = vpack.c.b16 %v1050, %v1048
        %v1113 = vpack.c.b16 %v1053, %v1051
        %v1114 = vpack.c.b16 %v1054, %v1052
        %v1115 = vpack.c.b16 %v1057, %v1055
        %v1116 = vpack.c.b16 %v1058, %v1056
        %v1117 = vpack.c.b16 %v1061, %v1059
        %v1118 = vpack.c.b16 %v1062, %v1060
        %v1119 = vpack.c.b16 %v1065, %v1063
        %v1120 = vpack.c.b16 %v1066, %v1064
        %v1121 = vpack.c.b16 %v1069, %v1067
        %v1122 = vpack.c.b16 %v1070, %v1068
        %v1123 = vpack.c.b16 %v1073, %v1071
        %v1124 = vpack.c.b16 %v1074, %v1072
        %v1125 = vpack.c.b16 %v1077, %v1075
        %v1126 = vpack.c.b16 %v1078, %v1076
        %v1127 = vpack.c.b16 %v1081, %v1079
        %v1128 = vpack.c.b16 %v1082, %v1080
        %v1129 = vpack.c.b16 %v1085, %v1083
        %v1130 = vpack.c.b16 %v1086, %v1084
        %v1131 = vpack.c.b16 %v1089, %v1087
        %v1132 = vpack.c.b16 %v1090, %v1088
        %v1133 = vpack.c.b16 %v1093, %v1091
        %v1134 = vpack.c.b16 %v1094, %v1092
        %v1135 = vpack.c.b16 %v1097, %v1095
        %v1136 = vpack.c.b16 %v1098, %v1096
        %v1137 = vpack.c.b16 %v1101, %v1099
        %v1138 = vpack.c.b16 %v1102, %v1100
        %v1139 = vpack.c.b16 %v1105, %v1103
        %v1140 = vpack.c.b16 %v1106, %v1104
        %v1141 = vpack.c.b16 %v1109, %v1107
        %v1142 = vpack.c.b16 %v1110, %v1108
        %1175 = vmatprep.subr.bf16.mxu0 %v1112
        %1176 = vmatpush1.bf16.msra.mxu0 %v1111
        %1177 = vmatprep.subr.bf16.mxu0 %v1114
        %1178 = vmatpush1.bf16.msra.mxu0 %v1113
        %1179 = vmatprep.subr.bf16.mxu0 %v1116
        %1180 = vmatpush1.bf16.msra.mxu0 %v1115
        %1181 = vmatprep.subr.bf16.mxu0 %v1118
        %1182 = vmatpush1.bf16.msra.mxu0 %v1117
        %1183 = vmatprep.subr.bf16.mxu0 %v1120
        %1184 = vmatpush1.bf16.msra.mxu0 %v1119
        %1185 = vmatprep.subr.bf16.mxu0 %v1122
        %1186 = vmatpush1.bf16.msra.mxu0 %v1121
        %1187 = vmatprep.subr.bf16.mxu0 %v1124
        %1188 = vmatpush1.bf16.msra.mxu0 %v1123
        %1189 = vmatprep.subr.bf16.mxu0 %v1126
        %1190 = vmatpush1.bf16.msra.mxu0 %v1125
        %1191 = vmatprep.subr.bf16.mxu0 %v1128
        %1192 = vmatpush1.bf16.msra.mxu0 %v1127
        %1193 = vmatprep.subr.bf16.mxu0 %v1130
        %1194 = vmatpush1.bf16.msra.mxu0 %v1129
        %1195 = vmatprep.subr.bf16.mxu0 %v1132
        %1196 = vmatpush1.bf16.msra.mxu0 %v1131
        %1197 = vmatprep.subr.bf16.mxu0 %v1134
        %1198 = vmatpush1.bf16.msra.mxu0 %v1133
        %1199 = vmatprep.subr.bf16.mxu0 %v1136
        %1200 = vmatpush1.bf16.msra.mxu0 %v1135
        %1201 = vmatprep.subr.bf16.mxu0 %v1138
        %1202 = vmatpush1.bf16.msra.mxu0 %v1137
        %1203 = vmatprep.subr.bf16.mxu0 %v1140
        %1204 = vmatpush1.bf16.msra.mxu0 %v1139
        %1205 = vmatprep.subr.bf16.mxu0 %v1142
        %1206 = vmatpush1.bf16.msra.mxu0 %v1141
        %1207 = vmatprep.mubr.bf16.mxu0 %v872
        %1208 = vmatmul.mubr.bf16.gmra.mrb[0].mxu0 %v871
        %v1209 = vpop.f32.mrb[0].mxu0
        %v1210 = vadd.f32 0.0, %v1209
        %v1211 = vpop.f32.mrb[0].mxu0
        %v1212 = vadd.f32 0.0, %v1211
        %v1213 = vpop.f32.mrb[0].mxu0
        %v1214 = vadd.f32 0.0, %v1213
        %v1215 = vpop.f32.mrb[0].mxu0
        %v1216 = vadd.f32 0.0, %v1215
        %1217 = vmatprep.mubr.bf16.mxu0 %v874
        %1218 = vmatmul.mubr.bf16.gmra.mrb[0].mxu0 %v873
        %v1219 = vpop.f32.mrb[0].mxu0
        %v1220 = vadd.f32 0.0, %v1219
        %v1221 = vpop.f32.mrb[0].mxu0
        %v1222 = vadd.f32 0.0, %v1221
        %v1223 = vpop.f32.mrb[0].mxu0
        %v1224 = vadd.f32 0.0, %v1223
        %v1225 = vpop.f32.mrb[0].mxu0
        %v1226 = vadd.f32 0.0, %v1225
        %1227 = vmatprep.mubr.bf16.mxu0 %v876
        %1228 = vmatmul.mubr.bf16.gmra.mrb[0].mxu0 %v875
        %v1229 = vpop.f32.mrb[0].mxu0
        %v1230 = vadd.f32 0.0, %v1229
        %v1231 = vpop.f32.mrb[0].mxu0
        %v1232 = vadd.f32 0.0, %v1231
        %v1233 = vpop.f32.mrb[0].mxu0
        %v1234 = vadd.f32 0.0, %v1233
        %v1235 = vpop.f32.mrb[0].mxu0
        %v1236 = vadd.f32 0.0, %v1235
        %1237 = vmatprep.mubr.bf16.mxu0 %v878
        %1238 = vmatmul.mubr.bf16.gmra.mrb[0].mxu0 %v877
        %v1239 = vpop.f32.mrb[0].mxu0
        %v1240 = vadd.f32 0.0, %v1239
        %v1241 = vpop.f32.mrb[0].mxu0
        %v1242 = vadd.f32 0.0, %v1241
        %v1243 = vpop.f32.mrb[0].mxu0
        %v1244 = vadd.f32 0.0, %v1243
        %v1245 = vpop.f32.mrb[0].mxu0
        %v1246 = vadd.f32 0.0, %v1245
        %1247 = vmatprep.mubr.bf16.mxu0 %v880
        %1248 = vmatmul.mubr.bf16.gmra.mrb[0].mxu0 %v879
        %v1249 = vpop.f32.mrb[0].mxu0
        %v1250 = vadd.f32 0.0, %v1249
        %v1251 = vpop.f32.mrb[0].mxu0
        %v1252 = vadd.f32 0.0, %v1251
        %v1253 = vpop.f32.mrb[0].mxu0
        %v1254 = vadd.f32 0.0, %v1253
        %v1255 = vpop.f32.mrb[0].mxu0
        %v1256 = vadd.f32 0.0, %v1255
        %1257 = vmatprep.mubr.bf16.mxu0 %v882
        %1258 = vmatmul.mubr.bf16.gmra.mrb[0].mxu0 %v881
        %v1259 = vpop.f32.mrb[0].mxu0
        %v1260 = vadd.f32 0.0, %v1259
        %v1261 = vpop.f32.mrb[0].mxu0
        %v1262 = vadd.f32 0.0, %v1261
        %v1263 = vpop.f32.mrb[0].mxu0
        %v1264 = vadd.f32 0.0, %v1263
        %v1265 = vpop.f32.mrb[0].mxu0
        %v1266 = vadd.f32 0.0, %v1265
        %1267 = vmatprep.mubr.bf16.mxu0 %v884
        %1268 = vmatmul.mubr.bf16.gmra.mrb[0].mxu0 %v883
        %v1269 = vpop.f32.mrb[0].mxu0
        %v1270 = vadd.f32 0.0, %v1269
        %v1271 = vpop.f32.mrb[0].mxu0
        %v1272 = vadd.f32 0.0, %v1271
        %v1273 = vpop.f32.mrb[0].mxu0
        %v1274 = vadd.f32 0.0, %v1273
        %v1275 = vpop.f32.mrb[0].mxu0
        %v1276 = vadd.f32 0.0, %v1275
        %1277 = vmatprep.mubr.bf16.mxu0 %v886
        %1278 = vmatmul.mubr.bf16.gmra.mrb[0].mxu0 %v885
        %v1279 = vpop.f32.mrb[0].mxu0
        %v1280 = vadd.f32 0.0, %v1279
        %v1281 = vpop.f32.mrb[0].mxu0
        %v1282 = vadd.f32 0.0, %v1281
        %v1283 = vpop.f32.mrb[0].mxu0
        %v1284 = vadd.f32 0.0, %v1283
        %v1285 = vpop.f32.mrb[0].mxu0
        %v1286 = vadd.f32 0.0, %v1285
        %1287 = vdwg.mxu0
        %v1288 = vld [vmem:[#allocation8] sm:$0xff]
        %v1289 = vld [vmem:[#allocation8 + $0x8] sm:$0xff]
        %v1290 = vld [vmem:[#allocation8 + $0x10] sm:$0xff]
        %v1291 = vld [vmem:[#allocation8 + $0x18] sm:$0xff]
        %v1292 = vld [vmem:[#allocation8 + $0x20] sm:$0xff]
        %v1293 = vld [vmem:[#allocation8 + $0x28] sm:$0xff]
        %v1294 = vld [vmem:[#allocation8 + $0x30] sm:$0xff]
        %v1295 = vld [vmem:[#allocation8 + $0x38] sm:$0xff]
        %v1296 = vld [vmem:[#allocation8 + $0x40] sm:$0xff]
        %v1297 = vld [vmem:[#allocation8 + $0x48] sm:$0xff]
        %v1298 = vld [vmem:[#allocation8 + $0x50] sm:$0xff]
        %v1299 = vld [vmem:[#allocation8 + $0x58] sm:$0xff]
        %v1300 = vld [vmem:[#allocation8 + $0x60] sm:$0xff]
        %v1301 = vld [vmem:[#allocation8 + $0x68] sm:$0xff]
        %v1302 = vld [vmem:[#allocation8 + $0x70] sm:$0xff]
        %v1303 = vld [vmem:[#allocation8 + $0x78] sm:$0xff]
        %v1304 = vld [vmem:[#allocation8 + $0x80] sm:$0xff]
        %v1305 = vld [vmem:[#allocation8 + $0x88] sm:$0xff]
        %v1306 = vld [vmem:[#allocation8 + $0x90] sm:$0xff]
        %v1307 = vld [vmem:[#allocation8 + $0x98] sm:$0xff]
        %v1308 = vld [vmem:[#allocation8 + $0xa0] sm:$0xff]
        %v1309 = vld [vmem:[#allocation8 + $0xa8] sm:$0xff]
        %v1310 = vld [vmem:[#allocation8 + $0xb0] sm:$0xff]
        %v1311 = vld [vmem:[#allocation8 + $0xb8] sm:$0xff]
        %v1312 = vld [vmem:[#allocation8 + $0xc0] sm:$0xff]
        %v1313 = vld [vmem:[#allocation8 + $0xc8] sm:$0xff]
        %v1314 = vld [vmem:[#allocation8 + $0xd0] sm:$0xff]
        %v1315 = vld [vmem:[#allocation8 + $0xd8] sm:$0xff]
        %v1316 = vld [vmem:[#allocation8 + $0xe0] sm:$0xff]
        %v1317 = vld [vmem:[#allocation8 + $0xe8] sm:$0xff]
        %v1318 = vld [vmem:[#allocation8 + $0xf0] sm:$0xff]
        %v1319 = vld [vmem:[#allocation8 + $0xf8] sm:$0xff]
        %v1352 = vunpack.c.l.b16 %v1288
        %v1353 = vunpack.c.h.b16 %v1288
        %v1354 = vunpack.c.l.b16 %v1289
        %v1355 = vunpack.c.h.b16 %v1289
        %v1356 = vunpack.c.l.b16 %v1290
        %v1357 = vunpack.c.h.b16 %v1290
        %v1358 = vunpack.c.l.b16 %v1291
        %v1359 = vunpack.c.h.b16 %v1291
        %v1360 = vunpack.c.l.b16 %v1292
        %v1361 = vunpack.c.h.b16 %v1292
        %v1362 = vunpack.c.l.b16 %v1293
        %v1363 = vunpack.c.h.b16 %v1293
        %v1364 = vunpack.c.l.b16 %v1294
        %v1365 = vunpack.c.h.b16 %v1294
        %v1366 = vunpack.c.l.b16 %v1295
        %v1367 = vunpack.c.h.b16 %v1295
        %v1368 = vunpack.c.l.b16 %v1296
        %v1369 = vunpack.c.h.b16 %v1296
        %v1370 = vunpack.c.l.b16 %v1297
        %v1371 = vunpack.c.h.b16 %v1297
        %v1372 = vunpack.c.l.b16 %v1298
        %v1373 = vunpack.c.h.b16 %v1298
        %v1374 = vunpack.c.l.b16 %v1299
        %v1375 = vunpack.c.h.b16 %v1299
        %v1376 = vunpack.c.l.b16 %v1300
        %v1377 = vunpack.c.h.b16 %v1300
        %v1378 = vunpack.c.l.b16 %v1301
        %v1379 = vunpack.c.h.b16 %v1301
        %v1380 = vunpack.c.l.b16 %v1302
        %v1381 = vunpack.c.h.b16 %v1302
        %v1382 = vunpack.c.l.b16 %v1303
        %v1383 = vunpack.c.h.b16 %v1303
        %v1384 = vunpack.c.l.b16 %v1304
        %v1385 = vunpack.c.h.b16 %v1304
        %v1386 = vunpack.c.l.b16 %v1305
        %v1387 = vunpack.c.h.b16 %v1305
        %v1388 = vunpack.c.l.b16 %v1306
        %v1389 = vunpack.c.h.b16 %v1306
        %v1390 = vunpack.c.l.b16 %v1307
        %v1391 = vunpack.c.h.b16 %v1307
        %v1392 = vunpack.c.l.b16 %v1308
        %v1393 = vunpack.c.h.b16 %v1308
        %v1394 = vunpack.c.l.b16 %v1309
        %v1395 = vunpack.c.h.b16 %v1309
        %v1396 = vunpack.c.l.b16 %v1310
        %v1397 = vunpack.c.h.b16 %v1310
        %v1398 = vunpack.c.l.b16 %v1311
        %v1399 = vunpack.c.h.b16 %v1311
        %v1400 = vunpack.c.l.b16 %v1312
        %v1401 = vunpack.c.h.b16 %v1312
        %v1402 = vunpack.c.l.b16 %v1313
        %v1403 = vunpack.c.h.b16 %v1313
        %v1404 = vunpack.c.l.b16 %v1314
        %v1405 = vunpack.c.h.b16 %v1314
        %v1406 = vunpack.c.l.b16 %v1315
        %v1407 = vunpack.c.h.b16 %v1315
        %v1408 = vunpack.c.l.b16 %v1316
        %v1409 = vunpack.c.h.b16 %v1316
        %v1410 = vunpack.c.l.b16 %v1317
        %v1411 = vunpack.c.h.b16 %v1317
        %v1412 = vunpack.c.l.b16 %v1318
        %v1413 = vunpack.c.h.b16 %v1318
        %v1414 = vunpack.c.l.b16 %v1319
        %v1415 = vunpack.c.h.b16 %v1319
        %v1416 = vpack.c.b16 %v1354, %v1352
        %v1417 = vpack.c.b16 %v1355, %v1353
        %v1418 = vpack.c.b16 %v1358, %v1356
        %v1419 = vpack.c.b16 %v1359, %v1357
        %v1420 = vpack.c.b16 %v1362, %v1360
        %v1421 = vpack.c.b16 %v1363, %v1361
        %v1422 = vpack.c.b16 %v1366, %v1364
        %v1423 = vpack.c.b16 %v1367, %v1365
        %v1424 = vpack.c.b16 %v1370, %v1368
        %v1425 = vpack.c.b16 %v1371, %v1369
        %v1426 = vpack.c.b16 %v1374, %v1372
        %v1427 = vpack.c.b16 %v1375, %v1373
        %v1428 = vpack.c.b16 %v1378, %v1376
        %v1429 = vpack.c.b16 %v1379, %v1377
        %v1430 = vpack.c.b16 %v1382, %v1380
        %v1431 = vpack.c.b16 %v1383, %v1381
        %v1432 = vpack.c.b16 %v1386, %v1384
        %v1433 = vpack.c.b16 %v1387, %v1385
        %v1434 = vpack.c.b16 %v1390, %v1388
        %v1435 = vpack.c.b16 %v1391, %v1389
        %v1436 = vpack.c.b16 %v1394, %v1392
        %v1437 = vpack.c.b16 %v1395, %v1393
        %v1438 = vpack.c.b16 %v1398, %v1396
        %v1439 = vpack.c.b16 %v1399, %v1397
        %v1440 = vpack.c.b16 %v1402, %v1400
        %v1441 = vpack.c.b16 %v1403, %v1401
        %v1442 = vpack.c.b16 %v1406, %v1404
        %v1443 = vpack.c.b16 %v1407, %v1405
        %v1444 = vpack.c.b16 %v1410, %v1408
        %v1445 = vpack.c.b16 %v1411, %v1409
        %v1446 = vpack.c.b16 %v1414, %v1412
        %v1447 = vpack.c.b16 %v1415, %v1413
        %1480 = vmatprep.subr.bf16.mxu0 %v1417
        %1481 = vmatpush1.bf16.msra.mxu0 %v1416
        %1482 = vmatprep.subr.bf16.mxu0 %v1419
        %1483 = vmatpush1.bf16.msra.mxu0 %v1418
        %1484 = vmatprep.subr.bf16.mxu0 %v1421
        %1485 = vmatpush1.bf16.msra.mxu0 %v1420
        %1486 = vmatprep.subr.bf16.mxu0 %v1423
        %1487 = vmatpush1.bf16.msra.mxu0 %v1422
        %1488 = vmatprep.subr.bf16.mxu0 %v1425
        %1489 = vmatpush1.bf16.msra.mxu0 %v1424
        %1490 = vmatprep.subr.bf16.mxu0 %v1427
        %1491 = vmatpush1.bf16.msra.mxu0 %v1426
        %1492 = vmatprep.subr.bf16.mxu0 %v1429
        %1493 = vmatpush1.bf16.msra.mxu0 %v1428
        %1494 = vmatprep.subr.bf16.mxu0 %v1431
        %1495 = vmatpush1.bf16.msra.mxu0 %v1430
        %1496 = vmatprep.subr.bf16.mxu0 %v1433
        %1497 = vmatpush1.bf16.msra.mxu0 %v1432
        %1498 = vmatprep.subr.bf16.mxu0 %v1435
        %1499 = vmatpush1.bf16.msra.mxu0 %v1434
        %1500 = vmatprep.subr.bf16.mxu0 %v1437
        %1501 = vmatpush1.bf16.msra.mxu0 %v1436
        %1502 = vmatprep.subr.bf16.mxu0 %v1439
        %1503 = vmatpush1.bf16.msra.mxu0 %v1438
        %1504 = vmatprep.subr.bf16.mxu0 %v1441
        %1505 = vmatpush1.bf16.msra.mxu0 %v1440
        %1506 = vmatprep.subr.bf16.mxu0 %v1443
        %1507 = vmatpush1.bf16.msra.mxu0 %v1442
        %1508 = vmatprep.subr.bf16.mxu0 %v1445
        %1509 = vmatpush1.bf16.msra.mxu0 %v1444
        %1510 = vmatprep.subr.bf16.mxu0 %v1447
        %1511 = vmatpush1.bf16.msra.mxu0 %v1446
        %1512 = vmatprep.mubr.bf16.mxu0 %v872
        %1513 = vmatmul.mubr.bf16.gmra.mrb[0].mxu0 %v871
        %v1514 = vpop.f32.mrb[0].mxu0
        %v1515 = vadd.f32 0.0, %v1514
        %v1516 = vpop.f32.mrb[0].mxu0
        %v1517 = vadd.f32 0.0, %v1516
        %v1518 = vpop.f32.mrb[0].mxu0
        %v1519 = vadd.f32 0.0, %v1518
        %v1520 = vpop.f32.mrb[0].mxu0
        %v1521 = vadd.f32 0.0, %v1520
        %1522 = vmatprep.mubr.bf16.mxu0 %v874
        %1523 = vmatmul.mubr.bf16.gmra.mrb[0].mxu0 %v873
        %v1524 = vpop.f32.mrb[0].mxu0
        %v1525 = vadd.f32 0.0, %v1524
        %v1526 = vpop.f32.mrb[0].mxu0
        %v1527 = vadd.f32 0.0, %v1526
        %v1528 = vpop.f32.mrb[0].mxu0
        %v1529 = vadd.f32 0.0, %v1528
        %v1530 = vpop.f32.mrb[0].mxu0
        %v1531 = vadd.f32 0.0, %v1530
        %1532 = vmatprep.mubr.bf16.mxu0 %v876
        %1533 = vmatmul.mubr.bf16.gmra.mrb[0].mxu0 %v875
        %v1534 = vpop.f32.mrb[0].mxu0
        %v1535 = vadd.f32 0.0, %v1534
        %v1536 = vpop.f32.mrb[0].mxu0
        %v1537 = vadd.f32 0.0, %v1536
        %v1538 = vpop.f32.mrb[0].mxu0
        %v1539 = vadd.f32 0.0, %v1538
        %v1540 = vpop.f32.mrb[0].mxu0
        %v1541 = vadd.f32 0.0, %v1540
        %1542 = vmatprep.mubr.bf16.mxu0 %v878
        %1543 = vmatmul.mubr.bf16.gmra.mrb[0].mxu0 %v877
        %v1544 = vpop.f32.mrb[0].mxu0
        %v1545 = vadd.f32 0.0, %v1544
        %v1546 = vpop.f32.mrb[0].mxu0
        %v1547 = vadd.f32 0.0, %v1546
        %v1548 = vpop.f32.mrb[0].mxu0
        %v1549 = vadd.f32 0.0, %v1548
        %v1550 = vpop.f32.mrb[0].mxu0
        %v1551 = vadd.f32 0.0, %v1550
        %1552 = vmatprep.mubr.bf16.mxu0 %v880
        %1553 = vmatmul.mubr.bf16.gmra.mrb[0].mxu0 %v879
        %v1554 = vpop.f32.mrb[0].mxu0
        %v1555 = vadd.f32 0.0, %v1554
        %v1556 = vpop.f32.mrb[0].mxu0
        %v1557 = vadd.f32 0.0, %v1556
        %v1558 = vpop.f32.mrb[0].mxu0
        %v1559 = vadd.f32 0.0, %v1558
        %v1560 = vpop.f32.mrb[0].mxu0
        %v1561 = vadd.f32 0.0, %v1560
        %1562 = vmatprep.mubr.bf16.mxu0 %v882
        %1563 = vmatmul.mubr.bf16.gmra.mrb[0].mxu0 %v881
        %v1564 = vpop.f32.mrb[0].mxu0
        %v1565 = vadd.f32 0.0, %v1564
        %v1566 = vpop.f32.mrb[0].mxu0
        %v1567 = vadd.f32 0.0, %v1566
        %v1568 = vpop.f32.mrb[0].mxu0
        %v1569 = vadd.f32 0.0, %v1568
        %v1570 = vpop.f32.mrb[0].mxu0
        %v1571 = vadd.f32 0.0, %v1570
        %1572 = vmatprep.mubr.bf16.mxu0 %v884
        %1573 = vmatmul.mubr.bf16.gmra.mrb[0].mxu0 %v883
        %v1574 = vpop.f32.mrb[0].mxu0
        %v1575 = vadd.f32 0.0, %v1574
        %v1576 = vpop.f32.mrb[0].mxu0
        %v1577 = vadd.f32 0.0, %v1576
        %v1578 = vpop.f32.mrb[0].mxu0
        %v1579 = vadd.f32 0.0, %v1578
        %v1580 = vpop.f32.mrb[0].mxu0
        %v1581 = vadd.f32 0.0, %v1580
        %1582 = vmatprep.mubr.bf16.mxu0 %v886
        %1583 = vmatmul.mubr.bf16.gmra.mrb[0].mxu0 %v885
        %v1584 = vpop.f32.mrb[0].mxu0
        %v1585 = vadd.f32 0.0, %v1584
        %v1586 = vpop.f32.mrb[0].mxu0
        %v1587 = vadd.f32 0.0, %v1586
        %v1588 = vpop.f32.mrb[0].mxu0
        %v1589 = vadd.f32 0.0, %v1588
        %v1590 = vpop.f32.mrb[0].mxu0
        %v1591 = vadd.f32 0.0, %v1590
        %1592 = vdwg.mxu0
        %v1593 = vld [vmem:[#allocation9] sm:$0xff]
        %v1594 = vld [vmem:[#allocation9 + $0x8] sm:$0xff]
        %v1595 = vld [vmem:[#allocation9 + $0x10] sm:$0xff]
        %v1596 = vld [vmem:[#allocation9 + $0x18] sm:$0xff]
        %v1597 = vld [vmem:[#allocation9 + $0x20] sm:$0xff]
        %v1598 = vld [vmem:[#allocation9 + $0x28] sm:$0xff]
        %v1599 = vld [vmem:[#allocation9 + $0x30] sm:$0xff]
        %v1600 = vld [vmem:[#allocation9 + $0x38] sm:$0xff]
        %v1601 = vld [vmem:[#allocation9 + $0x40] sm:$0xff]
        %v1602 = vld [vmem:[#allocation9 + $0x48] sm:$0xff]
        %v1603 = vld [vmem:[#allocation9 + $0x50] sm:$0xff]
        %v1604 = vld [vmem:[#allocation9 + $0x58] sm:$0xff]
        %v1605 = vld [vmem:[#allocation9 + $0x60] sm:$0xff]
        %v1606 = vld [vmem:[#allocation9 + $0x68] sm:$0xff]
        %v1607 = vld [vmem:[#allocation9 + $0x70] sm:$0xff]
        %v1608 = vld [vmem:[#allocation9 + $0x78] sm:$0xff]
        %v1609 = vld [vmem:[#allocation9 + $0x80] sm:$0xff]
        %v1610 = vld [vmem:[#allocation9 + $0x88] sm:$0xff]
        %v1611 = vld [vmem:[#allocation9 + $0x90] sm:$0xff]
        %v1612 = vld [vmem:[#allocation9 + $0x98] sm:$0xff]
        %v1613 = vld [vmem:[#allocation9 + $0xa0] sm:$0xff]
        %v1614 = vld [vmem:[#allocation9 + $0xa8] sm:$0xff]
        %v1615 = vld [vmem:[#allocation9 + $0xb0] sm:$0xff]
        %v1616 = vld [vmem:[#allocation9 + $0xb8] sm:$0xff]
        %v1617 = vld [vmem:[#allocation9 + $0xc0] sm:$0xff]
        %v1618 = vld [vmem:[#allocation9 + $0xc8] sm:$0xff]
        %v1619 = vld [vmem:[#allocation9 + $0xd0] sm:$0xff]
        %v1620 = vld [vmem:[#allocation9 + $0xd8] sm:$0xff]
        %v1621 = vld [vmem:[#allocation9 + $0xe0] sm:$0xff]
        %v1622 = vld [vmem:[#allocation9 + $0xe8] sm:$0xff]
        %v1623 = vld [vmem:[#allocation9 + $0xf0] sm:$0xff]
        %v1624 = vld [vmem:[#allocation9 + $0xf8] sm:$0xff]
        %v1657 = vunpack.c.l.b16 %v1593
        %v1658 = vunpack.c.h.b16 %v1593
        %v1659 = vunpack.c.l.b16 %v1594
        %v1660 = vunpack.c.h.b16 %v1594
        %v1661 = vunpack.c.l.b16 %v1595
        %v1662 = vunpack.c.h.b16 %v1595
        %v1663 = vunpack.c.l.b16 %v1596
        %v1664 = vunpack.c.h.b16 %v1596
        %v1665 = vunpack.c.l.b16 %v1597
        %v1666 = vunpack.c.h.b16 %v1597
        %v1667 = vunpack.c.l.b16 %v1598
        %v1668 = vunpack.c.h.b16 %v1598
        %v1669 = vunpack.c.l.b16 %v1599
        %v1670 = vunpack.c.h.b16 %v1599
        %v1671 = vunpack.c.l.b16 %v1600
        %v1672 = vunpack.c.h.b16 %v1600
        %v1673 = vunpack.c.l.b16 %v1601
        %v1674 = vunpack.c.h.b16 %v1601
        %v1675 = vunpack.c.l.b16 %v1602
        %v1676 = vunpack.c.h.b16 %v1602
        %v1677 = vunpack.c.l.b16 %v1603
        %v1678 = vunpack.c.h.b16 %v1603
        %v1679 = vunpack.c.l.b16 %v1604
        %v1680 = vunpack.c.h.b16 %v1604
        %v1681 = vunpack.c.l.b16 %v1605
        %v1682 = vunpack.c.h.b16 %v1605
        %v1683 = vunpack.c.l.b16 %v1606
        %v1684 = vunpack.c.h.b16 %v1606
        %v1685 = vunpack.c.l.b16 %v1607
        %v1686 = vunpack.c.h.b16 %v1607
        %v1687 = vunpack.c.l.b16 %v1608
        %v1688 = vunpack.c.h.b16 %v1608
        %v1689 = vunpack.c.l.b16 %v1609
        %v1690 = vunpack.c.h.b16 %v1609
        %v1691 = vunpack.c.l.b16 %v1610
        %v1692 = vunpack.c.h.b16 %v1610
        %v1693 = vunpack.c.l.b16 %v1611
        %v1694 = vunpack.c.h.b16 %v1611
        %v1695 = vunpack.c.l.b16 %v1612
        %v1696 = vunpack.c.h.b16 %v1612
        %v1697 = vunpack.c.l.b16 %v1613
        %v1698 = vunpack.c.h.b16 %v1613
        %v1699 = vunpack.c.l.b16 %v1614
        %v1700 = vunpack.c.h.b16 %v1614
        %v1701 = vunpack.c.l.b16 %v1615
        %v1702 = vunpack.c.h.b16 %v1615
        %v1703 = vunpack.c.l.b16 %v1616
        %v1704 = vunpack.c.h.b16 %v1616
        %v1705 = vunpack.c.l.b16 %v1617
        %v1706 = vunpack.c.h.b16 %v1617
        %v1707 = vunpack.c.l.b16 %v1618
        %v1708 = vunpack.c.h.b16 %v1618
        %v1709 = vunpack.c.l.b16 %v1619
        %v1710 = vunpack.c.h.b16 %v1619
        %v1711 = vunpack.c.l.b16 %v1620
        %v1712 = vunpack.c.h.b16 %v1620
        %v1713 = vunpack.c.l.b16 %v1621
        %v1714 = vunpack.c.h.b16 %v1621
        %v1715 = vunpack.c.l.b16 %v1622
        %v1716 = vunpack.c.h.b16 %v1622
        %v1717 = vunpack.c.l.b16 %v1623
        %v1718 = vunpack.c.h.b16 %v1623
        %v1719 = vunpack.c.l.b16 %v1624
        %v1720 = vunpack.c.h.b16 %v1624
        %v1721 = vpack.c.b16 %v1659, %v1657
        %v1722 = vpack.c.b16 %v1660, %v1658
        %v1723 = vpack.c.b16 %v1663, %v1661
        %v1724 = vpack.c.b16 %v1664, %v1662
        %v1725 = vpack.c.b16 %v1667, %v1665
        %v1726 = vpack.c.b16 %v1668, %v1666
        %v1727 = vpack.c.b16 %v1671, %v1669
        %v1728 = vpack.c.b16 %v1672, %v1670
        %v1729 = vpack.c.b16 %v1675, %v1673
        %v1730 = vpack.c.b16 %v1676, %v1674
        %v1731 = vpack.c.b16 %v1679, %v1677
        %v1732 = vpack.c.b16 %v1680, %v1678
        %v1733 = vpack.c.b16 %v1683, %v1681
        %v1734 = vpack.c.b16 %v1684, %v1682
        %v1735 = vpack.c.b16 %v1687, %v1685
        %v1736 = vpack.c.b16 %v1688, %v1686
        %v1737 = vpack.c.b16 %v1691, %v1689
        %v1738 = vpack.c.b16 %v1692, %v1690
        %v1739 = vpack.c.b16 %v1695, %v1693
        %v1740 = vpack.c.b16 %v1696, %v1694
        %v1741 = vpack.c.b16 %v1699, %v1697
        %v1742 = vpack.c.b16 %v1700, %v1698
        %v1743 = vpack.c.b16 %v1703, %v1701
        %v1744 = vpack.c.b16 %v1704, %v1702
        %v1745 = vpack.c.b16 %v1707, %v1705
        %v1746 = vpack.c.b16 %v1708, %v1706
        %v1747 = vpack.c.b16 %v1711, %v1709
        %v1748 = vpack.c.b16 %v1712, %v1710
        %v1749 = vpack.c.b16 %v1715, %v1713
        %v1750 = vpack.c.b16 %v1716, %v1714
        %v1751 = vpack.c.b16 %v1719, %v1717
        %v1752 = vpack.c.b16 %v1720, %v1718
        %1785 = vmatprep.subr.bf16.mxu0 %v1722
        %1786 = vmatpush1.bf16.msra.mxu0 %v1721
        %1787 = vmatprep.subr.bf16.mxu0 %v1724
        %1788 = vmatpush1.bf16.msra.mxu0 %v1723
        %1789 = vmatprep.subr.bf16.mxu0 %v1726
        %1790 = vmatpush1.bf16.msra.mxu0 %v1725
        %1791 = vmatprep.subr.bf16.mxu0 %v1728
        %1792 = vmatpush1.bf16.msra.mxu0 %v1727
        %1793 = vmatprep.subr.bf16.mxu0 %v1730
        %1794 = vmatpush1.bf16.msra.mxu0 %v1729
        %1795 = vmatprep.subr.bf16.mxu0 %v1732
        %1796 = vmatpush1.bf16.msra.mxu0 %v1731
        %1797 = vmatprep.subr.bf16.mxu0 %v1734
        %1798 = vmatpush1.bf16.msra.mxu0 %v1733
        %1799 = vmatprep.subr.bf16.mxu0 %v1736
        %1800 = vmatpush1.bf16.msra.mxu0 %v1735
        %1801 = vmatprep.subr.bf16.mxu0 %v1738
        %1802 = vmatpush1.bf16.msra.mxu0 %v1737
        %1803 = vmatprep.subr.bf16.mxu0 %v1740
        %1804 = vmatpush1.bf16.msra.mxu0 %v1739
        %1805 = vmatprep.subr.bf16.mxu0 %v1742
        %1806 = vmatpush1.bf16.msra.mxu0 %v1741
        %1807 = vmatprep.subr.bf16.mxu0 %v1744
        %1808 = vmatpush1.bf16.msra.mxu0 %v1743
        %1809 = vmatprep.subr.bf16.mxu0 %v1746
        %1810 = vmatpush1.bf16.msra.mxu0 %v1745
        %1811 = vmatprep.subr.bf16.mxu0 %v1748
        %1812 = vmatpush1.bf16.msra.mxu0 %v1747
        %1813 = vmatprep.subr.bf16.mxu0 %v1750
        %1814 = vmatpush1.bf16.msra.mxu0 %v1749
        %1815 = vmatprep.subr.bf16.mxu0 %v1752
        %1816 = vmatpush1.bf16.msra.mxu0 %v1751
        %1817 = vmatprep.mubr.bf16.mxu0 %v872
        %1818 = vmatmul.mubr.bf16.gmra.mrb[0].mxu0 %v871
        %v1819 = vpop.f32.mrb[0].mxu0
        %v1820 = vadd.f32 0.0, %v1819
        %v1821 = vpop.f32.mrb[0].mxu0
        %v1822 = vadd.f32 0.0, %v1821
        %v1823 = vpop.f32.mrb[0].mxu0
        %v1824 = vadd.f32 0.0, %v1823
        %v1825 = vpop.f32.mrb[0].mxu0
        %v1826 = vadd.f32 0.0, %v1825
        %1827 = vmatprep.mubr.bf16.mxu0 %v874
        %1828 = vmatmul.mubr.bf16.gmra.mrb[0].mxu0 %v873
        %v1829 = vpop.f32.mrb[0].mxu0
        %v1830 = vadd.f32 0.0, %v1829
        %v1831 = vpop.f32.mrb[0].mxu0
        %v1832 = vadd.f32 0.0, %v1831
        %v1833 = vpop.f32.mrb[0].mxu0
        %v1834 = vadd.f32 0.0, %v1833
        %v1835 = vpop.f32.mrb[0].mxu0
        %v1836 = vadd.f32 0.0, %v1835
        %1837 = vmatprep.mubr.bf16.mxu0 %v876
        %1838 = vmatmul.mubr.bf16.gmra.mrb[0].mxu0 %v875
        %v1839 = vpop.f32.mrb[0].mxu0
        %v1840 = vadd.f32 0.0, %v1839
        %v1841 = vpop.f32.mrb[0].mxu0
        %v1842 = vadd.f32 0.0, %v1841
        %v1843 = vpop.f32.mrb[0].mxu0
        %v1844 = vadd.f32 0.0, %v1843
        %v1845 = vpop.f32.mrb[0].mxu0
        %v1846 = vadd.f32 0.0, %v1845
        %1847 = vmatprep.mubr.bf16.mxu0 %v878
        %1848 = vmatmul.mubr.bf16.gmra.mrb[0].mxu0 %v877
        %v1849 = vpop.f32.mrb[0].mxu0
        %v1850 = vadd.f32 0.0, %v1849
        %v1851 = vpop.f32.mrb[0].mxu0
        %v1852 = vadd.f32 0.0, %v1851
        %v1853 = vpop.f32.mrb[0].mxu0
        %v1854 = vadd.f32 0.0, %v1853
        %v1855 = vpop.f32.mrb[0].mxu0
        %v1856 = vadd.f32 0.0, %v1855
        %1857 = vmatprep.mubr.bf16.mxu0 %v880
        %1858 = vmatmul.mubr.bf16.gmra.mrb[0].mxu0 %v879
        %v1859 = vpop.f32.mrb[0].mxu0
        %v1860 = vadd.f32 0.0, %v1859
        %v1861 = vpop.f32.mrb[0].mxu0
        %v1862 = vadd.f32 0.0, %v1861
        %v1863 = vpop.f32.mrb[0].mxu0
        %v1864 = vadd.f32 0.0, %v1863
        %v1865 = vpop.f32.mrb[0].mxu0
        %v1866 = vadd.f32 0.0, %v1865
        %1867 = vmatprep.mubr.bf16.mxu0 %v882
        %1868 = vmatmul.mubr.bf16.gmra.mrb[0].mxu0 %v881
        %v1869 = vpop.f32.mrb[0].mxu0
        %v1870 = vadd.f32 0.0, %v1869
        %v1871 = vpop.f32.mrb[0].mxu0
        %v1872 = vadd.f32 0.0, %v1871
        %v1873 = vpop.f32.mrb[0].mxu0
        %v1874 = vadd.f32 0.0, %v1873
        %v1875 = vpop.f32.mrb[0].mxu0
        %v1876 = vadd.f32 0.0, %v1875
        %1877 = vmatprep.mubr.bf16.mxu0 %v884
        %1878 = vmatmul.mubr.bf16.gmra.mrb[0].mxu0 %v883
        %v1879 = vpop.f32.mrb[0].mxu0
        %v1880 = vadd.f32 0.0, %v1879
        %v1881 = vpop.f32.mrb[0].mxu0
        %v1882 = vadd.f32 0.0, %v1881
        %v1883 = vpop.f32.mrb[0].mxu0
        %v1884 = vadd.f32 0.0, %v1883
        %v1885 = vpop.f32.mrb[0].mxu0
        %v1886 = vadd.f32 0.0, %v1885
        %1887 = vmatprep.mubr.bf16.mxu0 %v886
        %1888 = vmatmul.mubr.bf16.gmra.mrb[0].mxu0 %v885
        %v1889 = vpop.f32.mrb[0].mxu0
        %v1890 = vadd.f32 0.0, %v1889
        %v1891 = vpop.f32.mrb[0].mxu0
        %v1892 = vadd.f32 0.0, %v1891
        %v1893 = vpop.f32.mrb[0].mxu0
        %v1894 = vadd.f32 0.0, %v1893
        %v1895 = vpop.f32.mrb[0].mxu0
        %v1896 = vadd.f32 0.0, %v1895
        %1897 = vdwg.mxu0
        %1898 = vrot.lane.b32.xlu0 %v1210, 127
        %v1899 = vpop.permute.xlu0 %1898
        %1900 = vrot.lane.b32.xlu0 %v1214, 127
        %v1901 = vpop.permute.xlu0 %1900
        %1902 = vrot.lane.b32.xlu0 %v1220, 127
        %v1903 = vpop.permute.xlu0 %1902
        %1904 = vrot.lane.b32.xlu0 %v1224, 127
        %v1905 = vpop.permute.xlu0 %1904
        %1906 = vrot.lane.b32.xlu0 %v1230, 127
        %v1907 = vpop.permute.xlu0 %1906
        %1908 = vrot.lane.b32.xlu0 %v1234, 127
        %v1909 = vpop.permute.xlu0 %1908
        %1910 = vrot.lane.b32.xlu0 %v1240, 127
        %v1911 = vpop.permute.xlu0 %1910
        %1912 = vrot.lane.b32.xlu0 %v1244, 127
        %v1913 = vpop.permute.xlu0 %1912
        %1914 = vrot.lane.b32.xlu0 %v1250, 127
        %v1915 = vpop.permute.xlu0 %1914
        %1916 = vrot.lane.b32.xlu0 %v1254, 127
        %v1917 = vpop.permute.xlu0 %1916
        %1918 = vrot.lane.b32.xlu0 %v1260, 127
        %v1919 = vpop.permute.xlu0 %1918
        %1920 = vrot.lane.b32.xlu0 %v1264, 127
        %v1921 = vpop.permute.xlu0 %1920
        %1922 = vrot.lane.b32.xlu0 %v1270, 127
        %v1923 = vpop.permute.xlu0 %1922
        %1924 = vrot.lane.b32.xlu0 %v1274, 127
        %v1925 = vpop.permute.xlu0 %1924
        %1926 = vrot.lane.b32.xlu0 %v1280, 127
        %v1927 = vpop.permute.xlu0 %1926
        %1928 = vrot.lane.b32.xlu0 %v1284, 127
        %v1929 = vpop.permute.xlu0 %1928
        %1930 = vrot.lane.b32.xlu0 %v1212, 127
        %v1931 = vpop.permute.xlu0 %1930
        %1932 = vrot.lane.b32.xlu0 %v1216, 127
        %v1933 = vpop.permute.xlu0 %1932
        %1934 = vrot.lane.b32.xlu0 %v1222, 127
        %v1935 = vpop.permute.xlu0 %1934
        %1936 = vrot.lane.b32.xlu0 %v1226, 127
        %v1937 = vpop.permute.xlu0 %1936
        %1938 = vrot.lane.b32.xlu0 %v1232, 127
        %v1939 = vpop.permute.xlu0 %1938
        %1940 = vrot.lane.b32.xlu0 %v1236, 127
        %v1941 = vpop.permute.xlu0 %1940
        %1942 = vrot.lane.b32.xlu0 %v1242, 127
        %v1943 = vpop.permute.xlu0 %1942
        %1944 = vrot.lane.b32.xlu0 %v1246, 127
        %v1945 = vpop.permute.xlu0 %1944
        %1946 = vrot.lane.b32.xlu0 %v1252, 127
        %v1947 = vpop.permute.xlu0 %1946
        %1948 = vrot.lane.b32.xlu0 %v1256, 127
        %v1949 = vpop.permute.xlu0 %1948
        %1950 = vrot.lane.b32.xlu0 %v1262, 127
        %v1951 = vpop.permute.xlu0 %1950
        %1952 = vrot.lane.b32.xlu0 %v1266, 127
        %v1953 = vpop.permute.xlu0 %1952
        %1954 = vrot.lane.b32.xlu0 %v1272, 127
        %v1955 = vpop.permute.xlu0 %1954
        %1956 = vrot.lane.b32.xlu0 %v1276, 127
        %v1957 = vpop.permute.xlu0 %1956
        %1958 = vrot.lane.b32.xlu0 %v1282, 127
        %v1959 = vpop.permute.xlu0 %1958
        %1960 = vrot.lane.b32.xlu0 %v1286, 127
        %v1961 = vpop.permute.xlu0 %1960
        %v1962 = vlaneseq
        %v1963 = vand.u32 %v1962, 127
        %vm1964 = vcmp.lt.s32.totalorder %v1963, 127
        %v1965 = vsel %vm1964, %v1899, %v1931
        %v1966 = vsel %vm1964, %v1901, %v1933
        %v1967 = vsel %vm1964, %v1903, %v1935
        %v1968 = vsel %vm1964, %v1905, %v1937
        %v1969 = vsel %vm1964, %v1907, %v1939
        %v1970 = vsel %vm1964, %v1909, %v1941
        %v1971 = vsel %vm1964, %v1911, %v1943
        %v1972 = vsel %vm1964, %v1913, %v1945
        %v1973 = vsel %vm1964, %v1915, %v1947
        %v1974 = vsel %vm1964, %v1917, %v1949
        %v1975 = vsel %vm1964, %v1919, %v1951
        %v1976 = vsel %vm1964, %v1921, %v1953
        %v1977 = vsel %vm1964, %v1923, %v1955
        %v1978 = vsel %vm1964, %v1925, %v1957
        %v1979 = vsel %vm1964, %v1927, %v1959
        %v1980 = vsel %vm1964, %v1929, %v1961
        %v1981 = vsel %vm1964, %v1931, %v1899
        %v1982 = vsel %vm1964, %v1933, %v1901
        %v1983 = vsel %vm1964, %v1935, %v1903
        %v1984 = vsel %vm1964, %v1937, %v1905
        %v1985 = vsel %vm1964, %v1939, %v1907
        %v1986 = vsel %vm1964, %v1941, %v1909
        %v1987 = vsel %vm1964, %v1943, %v1911
        %v1988 = vsel %vm1964, %v1945, %v1913
        %v1989 = vsel %vm1964, %v1947, %v1915
        %v1990 = vsel %vm1964, %v1949, %v1917
        %v1991 = vsel %vm1964, %v1951, %v1919
        %v1992 = vsel %vm1964, %v1953, %v1921
        %v1993 = vsel %vm1964, %v1955, %v1923
        %v1994 = vsel %vm1964, %v1957, %v1925
        %v1995 = vsel %vm1964, %v1959, %v1927
        %v1996 = vsel %vm1964, %v1961, %v1929
        %1997 = vrot.lane.b32.xlu0 %v1210, 1
        %v1998 = vpop.permute.xlu0 %1997
        %1999 = vrot.lane.b32.xlu0 %v1214, 1
        %v2000 = vpop.permute.xlu0 %1999
        %2001 = vrot.lane.b32.xlu0 %v1220, 1
        %v2002 = vpop.permute.xlu0 %2001
        %2003 = vrot.lane.b32.xlu0 %v1224, 1
        %v2004 = vpop.permute.xlu0 %2003
        %2005 = vrot.lane.b32.xlu0 %v1230, 1
        %v2006 = vpop.permute.xlu0 %2005
        %2007 = vrot.lane.b32.xlu0 %v1234, 1
        %v2008 = vpop.permute.xlu0 %2007
        %2009 = vrot.lane.b32.xlu0 %v1240, 1
        %v2010 = vpop.permute.xlu0 %2009
        %2011 = vrot.lane.b32.xlu0 %v1244, 1
        %v2012 = vpop.permute.xlu0 %2011
        %2013 = vrot.lane.b32.xlu0 %v1250, 1
        %v2014 = vpop.permute.xlu0 %2013
        %2015 = vrot.lane.b32.xlu0 %v1254, 1
        %v2016 = vpop.permute.xlu0 %2015
        %2017 = vrot.lane.b32.xlu0 %v1260, 1
        %v2018 = vpop.permute.xlu0 %2017
        %2019 = vrot.lane.b32.xlu0 %v1264, 1
        %v2020 = vpop.permute.xlu0 %2019
        %2021 = vrot.lane.b32.xlu0 %v1270, 1
        %v2022 = vpop.permute.xlu0 %2021
        %2023 = vrot.lane.b32.xlu0 %v1274, 1
        %v2024 = vpop.permute.xlu0 %2023
        %2025 = vrot.lane.b32.xlu0 %v1280, 1
        %v2026 = vpop.permute.xlu0 %2025
        %2027 = vrot.lane.b32.xlu0 %v1284, 1
        %v2028 = vpop.permute.xlu0 %2027
        %2029 = vrot.lane.b32.xlu0 %v1212, 1
        %v2030 = vpop.permute.xlu0 %2029
        %2031 = vrot.lane.b32.xlu0 %v1216, 1
        %v2032 = vpop.permute.xlu0 %2031
        %2033 = vrot.lane.b32.xlu0 %v1222, 1
        %v2034 = vpop.permute.xlu0 %2033
        %2035 = vrot.lane.b32.xlu0 %v1226, 1
        %v2036 = vpop.permute.xlu0 %2035
        %2037 = vrot.lane.b32.xlu0 %v1232, 1
        %v2038 = vpop.permute.xlu0 %2037
        %2039 = vrot.lane.b32.xlu0 %v1236, 1
        %v2040 = vpop.permute.xlu0 %2039
        %2041 = vrot.lane.b32.xlu0 %v1242, 1
        %v2042 = vpop.permute.xlu0 %2041
        %2043 = vrot.lane.b32.xlu0 %v1246, 1
        %v2044 = vpop.permute.xlu0 %2043
        %2045 = vrot.lane.b32.xlu0 %v1252, 1
        %v2046 = vpop.permute.xlu0 %2045
        %2047 = vrot.lane.b32.xlu0 %v1256, 1
        %v2048 = vpop.permute.xlu0 %2047
        %2049 = vrot.lane.b32.xlu0 %v1262, 1
        %v2050 = vpop.permute.xlu0 %2049
        %2051 = vrot.lane.b32.xlu0 %v1266, 1
        %v2052 = vpop.permute.xlu0 %2051
        %2053 = vrot.lane.b32.xlu0 %v1272, 1
        %v2054 = vpop.permute.xlu0 %2053
        %2055 = vrot.lane.b32.xlu0 %v1276, 1
        %v2056 = vpop.permute.xlu0 %2055
        %2057 = vrot.lane.b32.xlu0 %v1282, 1
        %v2058 = vpop.permute.xlu0 %2057
        %2059 = vrot.lane.b32.xlu0 %v1286, 1
        %v2060 = vpop.permute.xlu0 %2059
        %vm2061 = vcmp.lt.s32.totalorder %v1963, 1
        %v2062 = vsel %vm2061, %v1998, %v2030
        %v2063 = vsel %vm2061, %v2000, %v2032
        %v2064 = vsel %vm2061, %v2002, %v2034
        %v2065 = vsel %vm2061, %v2004, %v2036
        %v2066 = vsel %vm2061, %v2006, %v2038
        %v2067 = vsel %vm2061, %v2008, %v2040
        %v2068 = vsel %vm2061, %v2010, %v2042
        %v2069 = vsel %vm2061, %v2012, %v2044
        %v2070 = vsel %vm2061, %v2014, %v2046
        %v2071 = vsel %vm2061, %v2016, %v2048
        %v2072 = vsel %vm2061, %v2018, %v2050
        %v2073 = vsel %vm2061, %v2020, %v2052
        %v2074 = vsel %vm2061, %v2022, %v2054
        %v2075 = vsel %vm2061, %v2024, %v2056
        %v2076 = vsel %vm2061, %v2026, %v2058
        %v2077 = vsel %vm2061, %v2028, %v2060
        %v2078 = vsel %vm2061, %v2030, %v1998
        %v2079 = vsel %vm2061, %v2032, %v2000
        %v2080 = vsel %vm2061, %v2034, %v2002
        %v2081 = vsel %vm2061, %v2036, %v2004
        %v2082 = vsel %vm2061, %v2038, %v2006
        %v2083 = vsel %vm2061, %v2040, %v2008
        %v2084 = vsel %vm2061, %v2042, %v2010
        %v2085 = vsel %vm2061, %v2044, %v2012
        %v2086 = vsel %vm2061, %v2046, %v2014
        %v2087 = vsel %vm2061, %v2048, %v2016
        %v2088 = vsel %vm2061, %v2050, %v2018
        %v2089 = vsel %vm2061, %v2052, %v2020
        %v2090 = vsel %vm2061, %v2054, %v2022
        %v2091 = vsel %vm2061, %v2056, %v2024
        %v2092 = vsel %vm2061, %v2058, %v2026
        %v2093 = vsel %vm2061, %v2060, %v2028
        %v2094 = vmul.f32 %v1210, %v887
        %v2095 = vmul.f32 %v1212, %v888
        %v2096 = vmul.f32 %v1214, %v889
        %v2097 = vmul.f32 %v1216, %v890
        %v2098 = vmul.f32 %v1220, %v891
        %v2099 = vmul.f32 %v1222, %v892
        %v2100 = vmul.f32 %v1224, %v893
        %v2101 = vmul.f32 %v1226, %v894
        %v2102 = vmul.f32 %v1230, %v895
        %v2103 = vmul.f32 %v1232, %v896
        %v2104 = vmul.f32 %v1234, %v897
        %v2105 = vmul.f32 %v1236, %v898
        %v2106 = vmul.f32 %v1240, %v899
        %v2107 = vmul.f32 %v1242, %v900
        %v2108 = vmul.f32 %v1244, %v901
        %v2109 = vmul.f32 %v1246, %v902
        %v2110 = vmul.f32 %v1250, %v903
        %v2111 = vmul.f32 %v1252, %v904
        %v2112 = vmul.f32 %v1254, %v905
        %v2113 = vmul.f32 %v1256, %v906
        %v2114 = vmul.f32 %v1260, %v907
        %v2115 = vmul.f32 %v1262, %v908
        %v2116 = vmul.f32 %v1264, %v909
        %v2117 = vmul.f32 %v1266, %v910
        %v2118 = vmul.f32 %v1270, %v911
        %v2119 = vmul.f32 %v1272, %v912
        %v2120 = vmul.f32 %v1274, %v913
        %v2121 = vmul.f32 %v1276, %v914
        %v2122 = vmul.f32 %v1280, %v915
        %v2123 = vmul.f32 %v1282, %v916
        %v2124 = vmul.f32 %v1284, %v917
        %v2125 = vmul.f32 %v1286, %v918
        %v2126 = vmul.f32 %v1965, %v919
        %v2127 = vmul.f32 %v1981, %v920
        %v2128 = vmul.f32 %v1966, %v921
        %v2129 = vmul.f32 %v1982, %v922
        %v2130 = vmul.f32 %v1967, %v923
        %v2131 = vmul.f32 %v1983, %v924
        %v2132 = vmul.f32 %v1968, %v925
        %v2133 = vmul.f32 %v1984, %v926
        %v2134 = vmul.f32 %v1969, %v927
        %v2135 = vmul.f32 %v1985, %v928
        %v2136 = vmul.f32 %v1970, %v929
        %v2137 = vmul.f32 %v1986, %v930
        %v2138 = vmul.f32 %v1971, %v931
        %v2139 = vmul.f32 %v1987, %v932
        %v2140 = vmul.f32 %v1972, %v933
        %v2141 = vmul.f32 %v1988, %v934
        %v2142 = vmul.f32 %v1973, %v935
        %v2143 = vmul.f32 %v1989, %v936
        %v2144 = vmul.f32 %v1974, %v937
        %v2145 = vmul.f32 %v1990, %v938
        %v2146 = vmul.f32 %v1975, %v939
        %v2147 = vmul.f32 %v1991, %v940
        %v2148 = vmul.f32 %v1976, %v941
        %v2149 = vmul.f32 %v1992, %v942
        %v2150 = vmul.f32 %v1977, %v943
        %v2151 = vmul.f32 %v1993, %v944
        %v2152 = vmul.f32 %v1978, %v945
        %v2153 = vmul.f32 %v1994, %v946
        %v2154 = vmul.f32 %v1979, %v947
        %v2155 = vmul.f32 %v1995, %v948
        %v2156 = vmul.f32 %v1980, %v949
        %v2157 = vmul.f32 %v1996, %v950
        %v2158 = vadd.f32 %v2094, %v2126
        %v2159 = vadd.f32 %v2095, %v2127
        %v2160 = vadd.f32 %v2096, %v2128
        %v2161 = vadd.f32 %v2097, %v2129
        %v2162 = vadd.f32 %v2098, %v2130
        %v2163 = vadd.f32 %v2099, %v2131
        %v2164 = vadd.f32 %v2100, %v2132
        %v2165 = vadd.f32 %v2101, %v2133
        %v2166 = vadd.f32 %v2102, %v2134
        %v2167 = vadd.f32 %v2103, %v2135
        %v2168 = vadd.f32 %v2104, %v2136
        %v2169 = vadd.f32 %v2105, %v2137
        %v2170 = vadd.f32 %v2106, %v2138
        %v2171 = vadd.f32 %v2107, %v2139
        %v2172 = vadd.f32 %v2108, %v2140
        %v2173 = vadd.f32 %v2109, %v2141
        %v2174 = vadd.f32 %v2110, %v2142
        %v2175 = vadd.f32 %v2111, %v2143
        %v2176 = vadd.f32 %v2112, %v2144
        %v2177 = vadd.f32 %v2113, %v2145
        %v2178 = vadd.f32 %v2114, %v2146
        %v2179 = vadd.f32 %v2115, %v2147
        %v2180 = vadd.f32 %v2116, %v2148
        %v2181 = vadd.f32 %v2117, %v2149
        %v2182 = vadd.f32 %v2118, %v2150
        %v2183 = vadd.f32 %v2119, %v2151
        %v2184 = vadd.f32 %v2120, %v2152
        %v2185 = vadd.f32 %v2121, %v2153
        %v2186 = vadd.f32 %v2122, %v2154
        %v2187 = vadd.f32 %v2123, %v2155
        %v2188 = vadd.f32 %v2124, %v2156
        %v2189 = vadd.f32 %v2125, %v2157
        %v2190 = vmul.f32 %v2078, %v951
        %v2191 = vmul.f32 %v2062, %v952
        %v2192 = vmul.f32 %v2079, %v953
        %v2193 = vmul.f32 %v2063, %v954
        %v2194 = vmul.f32 %v2080, %v955
        %v2195 = vmul.f32 %v2064, %v956
        %v2196 = vmul.f32 %v2081, %v957
        %v2197 = vmul.f32 %v2065, %v958
        %v2198 = vmul.f32 %v2082, %v959
        %v2199 = vmul.f32 %v2066, %v960
        %v2200 = vmul.f32 %v2083, %v961
        %v2201 = vmul.f32 %v2067, %v962
        %v2202 = vmul.f32 %v2084, %v963
        %v2203 = vmul.f32 %v2068, %v964
        %v2204 = vmul.f32 %v2085, %v965
        %v2205 = vmul.f32 %v2069, %v966
        %v2206 = vmul.f32 %v2086, %v967
        %v2207 = vmul.f32 %v2070, %v968
        %v2208 = vmul.f32 %v2087, %v969
        %v2209 = vmul.f32 %v2071, %v970
        %v2210 = vmul.f32 %v2088, %v971
        %v2211 = vmul.f32 %v2072, %v972
        %v2212 = vmul.f32 %v2089, %v973
        %v2213 = vmul.f32 %v2073, %v974
        %v2214 = vmul.f32 %v2090, %v975
        %v2215 = vmul.f32 %v2074, %v976
        %v2216 = vmul.f32 %v2091, %v977
        %v2217 = vmul.f32 %v2075, %v978
        %v2218 = vmul.f32 %v2092, %v979
        %v2219 = vmul.f32 %v2076, %v980
        %v2220 = vmul.f32 %v2093, %v981
        %v2221 = vmul.f32 %v2077, %v982
        %v2222 = vadd.f32 %v2158, %v2190
        %v2223 = vadd.f32 %v2159, %v2191
        %v2224 = vadd.f32 %v2160, %v2192
        %v2225 = vadd.f32 %v2161, %v2193
        %v2226 = vadd.f32 %v2162, %v2194
        %v2227 = vadd.f32 %v2163, %v2195
        %v2228 = vadd.f32 %v2164, %v2196
        %v2229 = vadd.f32 %v2165, %v2197
        %v2230 = vadd.f32 %v2166, %v2198
        %v2231 = vadd.f32 %v2167, %v2199
        %v2232 = vadd.f32 %v2168, %v2200
        %v2233 = vadd.f32 %v2169, %v2201
        %v2234 = vadd.f32 %v2170, %v2202
        %v2235 = vadd.f32 %v2171, %v2203
        %v2236 = vadd.f32 %v2172, %v2204
        %v2237 = vadd.f32 %v2173, %v2205
        %v2238 = vadd.f32 %v2174, %v2206
        %v2239 = vadd.f32 %v2175, %v2207
        %v2240 = vadd.f32 %v2176, %v2208
        %v2241 = vadd.f32 %v2177, %v2209
        %v2242 = vadd.f32 %v2178, %v2210
        %v2243 = vadd.f32 %v2179, %v2211
        %v2244 = vadd.f32 %v2180, %v2212
        %v2245 = vadd.f32 %v2181, %v2213
        %v2246 = vadd.f32 %v2182, %v2214
        %v2247 = vadd.f32 %v2183, %v2215
        %v2248 = vadd.f32 %v2184, %v2216
        %v2249 = vadd.f32 %v2185, %v2217
        %v2250 = vadd.f32 %v2186, %v2218
        %v2251 = vadd.f32 %v2187, %v2219
        %v2252 = vadd.f32 %v2188, %v2220
        %v2253 = vadd.f32 %v2189, %v2221
        %v2254 = vpack.c.bf16 %v2224, %v2222
        %v2255 = vpack.c.bf16 %v2225, %v2223
        %v2256 = vpack.c.bf16 %v2228, %v2226
        %v2257 = vpack.c.bf16 %v2229, %v2227
        %v2258 = vpack.c.bf16 %v2232, %v2230
        %v2259 = vpack.c.bf16 %v2233, %v2231
        %v2260 = vpack.c.bf16 %v2236, %v2234
        %v2261 = vpack.c.bf16 %v2237, %v2235
        %v2262 = vpack.c.bf16 %v2240, %v2238
        %v2263 = vpack.c.bf16 %v2241, %v2239
        %v2264 = vpack.c.bf16 %v2244, %v2242
        %v2265 = vpack.c.bf16 %v2245, %v2243
        %v2266 = vpack.c.bf16 %v2248, %v2246
        %v2267 = vpack.c.bf16 %v2249, %v2247
        %v2268 = vpack.c.bf16 %v2252, %v2250
        %v2269 = vpack.c.bf16 %v2253, %v2251
        %v2286 = vunpack.c.l.b16 %v2254
        %v2287 = vunpack.c.l.b16 %v2255
        %v2288 = vunpack.c.h.b16 %v2254
        %v2289 = vunpack.c.h.b16 %v2255
        %v2290 = vunpack.c.l.b16 %v2256
        %v2291 = vunpack.c.l.b16 %v2257
        %v2292 = vunpack.c.h.b16 %v2256
        %v2293 = vunpack.c.h.b16 %v2257
        %v2294 = vunpack.c.l.b16 %v2258
        %v2295 = vunpack.c.l.b16 %v2259
        %v2296 = vunpack.c.h.b16 %v2258
        %v2297 = vunpack.c.h.b16 %v2259
        %v2298 = vunpack.c.l.b16 %v2260
        %v2299 = vunpack.c.l.b16 %v2261
        %v2300 = vunpack.c.h.b16 %v2260
        %v2301 = vunpack.c.h.b16 %v2261
        %v2302 = vunpack.c.l.b16 %v2262
        %v2303 = vunpack.c.l.b16 %v2263
        %v2304 = vunpack.c.h.b16 %v2262
        %v2305 = vunpack.c.h.b16 %v2263
        %v2306 = vunpack.c.l.b16 %v2264
        %v2307 = vunpack.c.l.b16 %v2265
        %v2308 = vunpack.c.h.b16 %v2264
        %v2309 = vunpack.c.h.b16 %v2265
        %v2310 = vunpack.c.l.b16 %v2266
        %v2311 = vunpack.c.l.b16 %v2267
        %v2312 = vunpack.c.h.b16 %v2266
        %v2313 = vunpack.c.h.b16 %v2267
        %v2314 = vunpack.c.l.b16 %v2268
        %v2315 = vunpack.c.l.b16 %v2269
        %v2316 = vunpack.c.h.b16 %v2268
        %v2317 = vunpack.c.h.b16 %v2269
        %v2318 = vpack.c.b16 %v2287, %v2286
        %v2319 = vpack.c.b16 %v2289, %v2288
        %v2320 = vpack.c.b16 %v2291, %v2290
        %v2321 = vpack.c.b16 %v2293, %v2292
        %v2322 = vpack.c.b16 %v2295, %v2294
        %v2323 = vpack.c.b16 %v2297, %v2296
        %v2324 = vpack.c.b16 %v2299, %v2298
        %v2325 = vpack.c.b16 %v2301, %v2300
        %v2326 = vpack.c.b16 %v2303, %v2302
        %v2327 = vpack.c.b16 %v2305, %v2304
        %v2328 = vpack.c.b16 %v2307, %v2306
        %v2329 = vpack.c.b16 %v2309, %v2308
        %v2330 = vpack.c.b16 %v2311, %v2310
        %v2331 = vpack.c.b16 %v2313, %v2312
        %v2332 = vpack.c.b16 %v2315, %v2314
        %v2333 = vpack.c.b16 %v2317, %v2316
        %2350 = vst [vmem:[%s567] sm:$0xff] %v2318
        %2351 = vst [vmem:[%s567 + $0x8] sm:$0xff] %v2319
        %2352 = vst [vmem:[%s567 + $0x10] sm:$0xff] %v2320
        %2353 = vst [vmem:[%s567 + $0x18] sm:$0xff] %v2321
        %2354 = vst [vmem:[%s567 + $0x20] sm:$0xff] %v2322
        %2355 = vst [vmem:[%s567 + $0x28] sm:$0xff] %v2323
        %2356 = vst [vmem:[%s567 + $0x30] sm:$0xff] %v2324
        %2357 = vst [vmem:[%s567 + $0x38] sm:$0xff] %v2325
        %2358 = vst [vmem:[%s567 + $0x40] sm:$0xff] %v2326
        %2359 = vst [vmem:[%s567 + $0x48] sm:$0xff] %v2327
        %2360 = vst [vmem:[%s567 + $0x50] sm:$0xff] %v2328
        %2361 = vst [vmem:[%s567 + $0x58] sm:$0xff] %v2329
        %2362 = vst [vmem:[%s567 + $0x60] sm:$0xff] %v2330
        %2363 = vst [vmem:[%s567 + $0x68] sm:$0xff] %v2331
        %2364 = vst [vmem:[%s567 + $0x70] sm:$0xff] %v2332
        %2365 = vst [vmem:[%s567 + $0x78] sm:$0xff] %v2333
        %2366 = vrot.lane.b32.xlu0 %v1515, 127
        %v2367 = vpop.permute.xlu0 %2366
        %2368 = vrot.lane.b32.xlu0 %v1519, 127
        %v2369 = vpop.permute.xlu0 %2368
        %2370 = vrot.lane.b32.xlu0 %v1525, 127
        %v2371 = vpop.permute.xlu0 %2370
        %2372 = vrot.lane.b32.xlu0 %v1529, 127
        %v2373 = vpop.permute.xlu0 %2372
        %2374 = vrot.lane.b32.xlu0 %v1535, 127
        %v2375 = vpop.permute.xlu0 %2374
        %2376 = vrot.lane.b32.xlu0 %v1539, 127
        %v2377 = vpop.permute.xlu0 %2376
        %2378 = vrot.lane.b32.xlu0 %v1545, 127
        %v2379 = vpop.permute.xlu0 %2378
        %2380 = vrot.lane.b32.xlu0 %v1549, 127
        %v2381 = vpop.permute.xlu0 %2380
        %2382 = vrot.lane.b32.xlu0 %v1555, 127
        %v2383 = vpop.permute.xlu0 %2382
        %2384 = vrot.lane.b32.xlu0 %v1559, 127
        %v2385 = vpop.permute.xlu0 %2384
        %2386 = vrot.lane.b32.xlu0 %v1565, 127
        %v2387 = vpop.permute.xlu0 %2386
        %2388 = vrot.lane.b32.xlu0 %v1569, 127
        %v2389 = vpop.permute.xlu0 %2388
        %2390 = vrot.lane.b32.xlu0 %v1575, 127
        %v2391 = vpop.permute.xlu0 %2390
        %2392 = vrot.lane.b32.xlu0 %v1579, 127
        %v2393 = vpop.permute.xlu0 %2392
        %2394 = vrot.lane.b32.xlu0 %v1585, 127
        %v2395 = vpop.permute.xlu0 %2394
        %2396 = vrot.lane.b32.xlu0 %v1589, 127
        %v2397 = vpop.permute.xlu0 %2396
        %2398 = vrot.lane.b32.xlu0 %v1517, 127
        %v2399 = vpop.permute.xlu0 %2398
        %2400 = vrot.lane.b32.xlu0 %v1521, 127
        %v2401 = vpop.permute.xlu0 %2400
        %2402 = vrot.lane.b32.xlu0 %v1527, 127
        %v2403 = vpop.permute.xlu0 %2402
        %2404 = vrot.lane.b32.xlu0 %v1531, 127
        %v2405 = vpop.permute.xlu0 %2404
        %2406 = vrot.lane.b32.xlu0 %v1537, 127
        %v2407 = vpop.permute.xlu0 %2406
        %2408 = vrot.lane.b32.xlu0 %v1541, 127
        %v2409 = vpop.permute.xlu0 %2408
        %2410 = vrot.lane.b32.xlu0 %v1547, 127
        %v2411 = vpop.permute.xlu0 %2410
        %2412 = vrot.lane.b32.xlu0 %v1551, 127
        %v2413 = vpop.permute.xlu0 %2412
        %2414 = vrot.lane.b32.xlu0 %v1557, 127
        %v2415 = vpop.permute.xlu0 %2414
        %2416 = vrot.lane.b32.xlu0 %v1561, 127
        %v2417 = vpop.permute.xlu0 %2416
        %2418 = vrot.lane.b32.xlu0 %v1567, 127
        %v2419 = vpop.permute.xlu0 %2418
        %2420 = vrot.lane.b32.xlu0 %v1571, 127
        %v2421 = vpop.permute.xlu0 %2420
        %2422 = vrot.lane.b32.xlu0 %v1577, 127
        %v2423 = vpop.permute.xlu0 %2422
        %2424 = vrot.lane.b32.xlu0 %v1581, 127
        %v2425 = vpop.permute.xlu0 %2424
        %2426 = vrot.lane.b32.xlu0 %v1587, 127
        %v2427 = vpop.permute.xlu0 %2426
        %2428 = vrot.lane.b32.xlu0 %v1591, 127
        %v2429 = vpop.permute.xlu0 %2428
        %v2430 = vsel %vm1964, %v2367, %v2399
        %v2431 = vsel %vm1964, %v2369, %v2401
        %v2432 = vsel %vm1964, %v2371, %v2403
        %v2433 = vsel %vm1964, %v2373, %v2405
        %v2434 = vsel %vm1964, %v2375, %v2407
        %v2435 = vsel %vm1964, %v2377, %v2409
        %v2436 = vsel %vm1964, %v2379, %v2411
        %v2437 = vsel %vm1964, %v2381, %v2413
        %v2438 = vsel %vm1964, %v2383, %v2415
        %v2439 = vsel %vm1964, %v2385, %v2417
        %v2440 = vsel %vm1964, %v2387, %v2419
        %v2441 = vsel %vm1964, %v2389, %v2421
        %v2442 = vsel %vm1964, %v2391, %v2423
        %v2443 = vsel %vm1964, %v2393, %v2425
        %v2444 = vsel %vm1964, %v2395, %v2427
        %v2445 = vsel %vm1964, %v2397, %v2429
        %v2446 = vsel %vm1964, %v2399, %v2367
        %v2447 = vsel %vm1964, %v2401, %v2369
        %v2448 = vsel %vm1964, %v2403, %v2371
        %v2449 = vsel %vm1964, %v2405, %v2373
        %v2450 = vsel %vm1964, %v2407, %v2375
        %v2451 = vsel %vm1964, %v2409, %v2377
        %v2452 = vsel %vm1964, %v2411, %v2379
        %v2453 = vsel %vm1964, %v2413, %v2381
        %v2454 = vsel %vm1964, %v2415, %v2383
        %v2455 = vsel %vm1964, %v2417, %v2385
        %v2456 = vsel %vm1964, %v2419, %v2387
        %v2457 = vsel %vm1964, %v2421, %v2389
        %v2458 = vsel %vm1964, %v2423, %v2391
        %v2459 = vsel %vm1964, %v2425, %v2393
        %v2460 = vsel %vm1964, %v2427, %v2395
        %v2461 = vsel %vm1964, %v2429, %v2397
        %2462 = vrot.lane.b32.xlu0 %v1515, 1
        %v2463 = vpop.permute.xlu0 %2462
        %2464 = vrot.lane.b32.xlu0 %v1519, 1
        %v2465 = vpop.permute.xlu0 %2464
        %2466 = vrot.lane.b32.xlu0 %v1525, 1
        %v2467 = vpop.permute.xlu0 %2466
        %2468 = vrot.lane.b32.xlu0 %v1529, 1
        %v2469 = vpop.permute.xlu0 %2468
        %2470 = vrot.lane.b32.xlu0 %v1535, 1
        %v2471 = vpop.permute.xlu0 %2470
        %2472 = vrot.lane.b32.xlu0 %v1539, 1
        %v2473 = vpop.permute.xlu0 %2472
        %2474 = vrot.lane.b32.xlu0 %v1545, 1
        %v2475 = vpop.permute.xlu0 %2474
        %2476 = vrot.lane.b32.xlu0 %v1549, 1
        %v2477 = vpop.permute.xlu0 %2476
        %2478 = vrot.lane.b32.xlu0 %v1555, 1
        %v2479 = vpop.permute.xlu0 %2478
        %2480 = vrot.lane.b32.xlu0 %v1559, 1
        %v2481 = vpop.permute.xlu0 %2480
        %2482 = vrot.lane.b32.xlu0 %v1565, 1
        %v2483 = vpop.permute.xlu0 %2482
        %2484 = vrot.lane.b32.xlu0 %v1569, 1
        %v2485 = vpop.permute.xlu0 %2484
        %2486 = vrot.lane.b32.xlu0 %v1575, 1
        %v2487 = vpop.permute.xlu0 %2486
        %2488 = vrot.lane.b32.xlu0 %v1579, 1
        %v2489 = vpop.permute.xlu0 %2488
        %2490 = vrot.lane.b32.xlu0 %v1585, 1
        %v2491 = vpop.permute.xlu0 %2490
        %2492 = vrot.lane.b32.xlu0 %v1589, 1
        %v2493 = vpop.permute.xlu0 %2492
        %2494 = vrot.lane.b32.xlu0 %v1517, 1
        %v2495 = vpop.permute.xlu0 %2494
        %2496 = vrot.lane.b32.xlu0 %v1521, 1
        %v2497 = vpop.permute.xlu0 %2496
        %2498 = vrot.lane.b32.xlu0 %v1527, 1
        %v2499 = vpop.permute.xlu0 %2498
        %2500 = vrot.lane.b32.xlu0 %v1531, 1
        %v2501 = vpop.permute.xlu0 %2500
        %2502 = vrot.lane.b32.xlu0 %v1537, 1
        %v2503 = vpop.permute.xlu0 %2502
        %2504 = vrot.lane.b32.xlu0 %v1541, 1
        %v2505 = vpop.permute.xlu0 %2504
        %2506 = vrot.lane.b32.xlu0 %v1547, 1
        %v2507 = vpop.permute.xlu0 %2506
        %2508 = vrot.lane.b32.xlu0 %v1551, 1
        %v2509 = vpop.permute.xlu0 %2508
        %2510 = vrot.lane.b32.xlu0 %v1557, 1
        %v2511 = vpop.permute.xlu0 %2510
        %2512 = vrot.lane.b32.xlu0 %v1561, 1
        %v2513 = vpop.permute.xlu0 %2512
        %2514 = vrot.lane.b32.xlu0 %v1567, 1
        %v2515 = vpop.permute.xlu0 %2514
        %2516 = vrot.lane.b32.xlu0 %v1571, 1
        %v2517 = vpop.permute.xlu0 %2516
        %2518 = vrot.lane.b32.xlu0 %v1577, 1
        %v2519 = vpop.permute.xlu0 %2518
        %2520 = vrot.lane.b32.xlu0 %v1581, 1
        %v2521 = vpop.permute.xlu0 %2520
        %2522 = vrot.lane.b32.xlu0 %v1587, 1
        %v2523 = vpop.permute.xlu0 %2522
        %2524 = vrot.lane.b32.xlu0 %v1591, 1
        %v2525 = vpop.permute.xlu0 %2524
        %v2526 = vsel %vm2061, %v2463, %v2495
        %v2527 = vsel %vm2061, %v2465, %v2497
        %v2528 = vsel %vm2061, %v2467, %v2499
        %v2529 = vsel %vm2061, %v2469, %v2501
        %v2530 = vsel %vm2061, %v2471, %v2503
        %v2531 = vsel %vm2061, %v2473, %v2505
        %v2532 = vsel %vm2061, %v2475, %v2507
        %v2533 = vsel %vm2061, %v2477, %v2509
        %v2534 = vsel %vm2061, %v2479, %v2511
        %v2535 = vsel %vm2061, %v2481, %v2513
        %v2536 = vsel %vm2061, %v2483, %v2515
        %v2537 = vsel %vm2061, %v2485, %v2517
        %v2538 = vsel %vm2061, %v2487, %v2519
        %v2539 = vsel %vm2061, %v2489, %v2521
        %v2540 = vsel %vm2061, %v2491, %v2523
        %v2541 = vsel %vm2061, %v2493, %v2525
        %v2542 = vsel %vm2061, %v2495, %v2463
        %v2543 = vsel %vm2061, %v2497, %v2465
        %v2544 = vsel %vm2061, %v2499, %v2467
        %v2545 = vsel %vm2061, %v2501, %v2469
        %v2546 = vsel %vm2061, %v2503, %v2471
        %v2547 = vsel %vm2061, %v2505, %v2473
        %v2548 = vsel %vm2061, %v2507, %v2475
        %v2549 = vsel %vm2061, %v2509, %v2477
        %v2550 = vsel %vm2061, %v2511, %v2479
        %v2551 = vsel %vm2061, %v2513, %v2481
        %v2552 = vsel %vm2061, %v2515, %v2483
        %v2553 = vsel %vm2061, %v2517, %v2485
        %v2554 = vsel %vm2061, %v2519, %v2487
        %v2555 = vsel %vm2061, %v2521, %v2489
        %v2556 = vsel %vm2061, %v2523, %v2491
        %v2557 = vsel %vm2061, %v2525, %v2493
        %v2558 = vmul.f32 %v1515, %v887
        %v2559 = vmul.f32 %v1517, %v888
        %v2560 = vmul.f32 %v1519, %v889
        %v2561 = vmul.f32 %v1521, %v890
        %v2562 = vmul.f32 %v1525, %v891
        %v2563 = vmul.f32 %v1527, %v892
        %v2564 = vmul.f32 %v1529, %v893
        %v2565 = vmul.f32 %v1531, %v894
        %v2566 = vmul.f32 %v1535, %v895
        %v2567 = vmul.f32 %v1537, %v896
        %v2568 = vmul.f32 %v1539, %v897
        %v2569 = vmul.f32 %v1541, %v898
        %v2570 = vmul.f32 %v1545, %v899
        %v2571 = vmul.f32 %v1547, %v900
        %v2572 = vmul.f32 %v1549, %v901
        %v2573 = vmul.f32 %v1551, %v902
        %v2574 = vmul.f32 %v1555, %v903
        %v2575 = vmul.f32 %v1557, %v904
        %v2576 = vmul.f32 %v1559, %v905
        %v2577 = vmul.f32 %v1561, %v906
        %v2578 = vmul.f32 %v1565, %v907
        %v2579 = vmul.f32 %v1567, %v908
        %v2580 = vmul.f32 %v1569, %v909
        %v2581 = vmul.f32 %v1571, %v910
        %v2582 = vmul.f32 %v1575, %v911
        %v2583 = vmul.f32 %v1577, %v912
        %v2584 = vmul.f32 %v1579, %v913
        %v2585 = vmul.f32 %v1581, %v914
        %v2586 = vmul.f32 %v1585, %v915
        %v2587 = vmul.f32 %v1587, %v916
        %v2588 = vmul.f32 %v1589, %v917
        %v2589 = vmul.f32 %v1591, %v918
        %v2590 = vmul.f32 %v2430, %v919
        %v2591 = vmul.f32 %v2446, %v920
        %v2592 = vmul.f32 %v2431, %v921
        %v2593 = vmul.f32 %v2447, %v922
        %v2594 = vmul.f32 %v2432, %v923
        %v2595 = vmul.f32 %v2448, %v924
        %v2596 = vmul.f32 %v2433, %v925
        %v2597 = vmul.f32 %v2449, %v926
        %v2598 = vmul.f32 %v2434, %v927
        %v2599 = vmul.f32 %v2450, %v928
        %v2600 = vmul.f32 %v2435, %v929
        %v2601 = vmul.f32 %v2451, %v930
        %v2602 = vmul.f32 %v2436, %v931
        %v2603 = vmul.f32 %v2452, %v932
        %v2604 = vmul.f32 %v2437, %v933
        %v2605 = vmul.f32 %v2453, %v934
        %v2606 = vmul.f32 %v2438, %v935
        %v2607 = vmul.f32 %v2454, %v936
        %v2608 = vmul.f32 %v2439, %v937
        %v2609 = vmul.f32 %v2455, %v938
        %v2610 = vmul.f32 %v2440, %v939
        %v2611 = vmul.f32 %v2456, %v940
        %v2612 = vmul.f32 %v2441, %v941
        %v2613 = vmul.f32 %v2457, %v942
        %v2614 = vmul.f32 %v2442, %v943
        %v2615 = vmul.f32 %v2458, %v944
        %v2616 = vmul.f32 %v2443, %v945
        %v2617 = vmul.f32 %v2459, %v946
        %v2618 = vmul.f32 %v2444, %v947
        %v2619 = vmul.f32 %v2460, %v948
        %v2620 = vmul.f32 %v2445, %v949
        %v2621 = vmul.f32 %v2461, %v950
        %v2622 = vadd.f32 %v2558, %v2590
        %v2623 = vadd.f32 %v2559, %v2591
        %v2624 = vadd.f32 %v2560, %v2592
        %v2625 = vadd.f32 %v2561, %v2593
        %v2626 = vadd.f32 %v2562, %v2594
        %v2627 = vadd.f32 %v2563, %v2595
        %v2628 = vadd.f32 %v2564, %v2596
        %v2629 = vadd.f32 %v2565, %v2597
        %v2630 = vadd.f32 %v2566, %v2598
        %v2631 = vadd.f32 %v2567, %v2599
        %v2632 = vadd.f32 %v2568, %v2600
        %v2633 = vadd.f32 %v2569, %v2601
        %v2634 = vadd.f32 %v2570, %v2602
        %v2635 = vadd.f32 %v2571, %v2603
        %v2636 = vadd.f32 %v2572, %v2604
        %v2637 = vadd.f32 %v2573, %v2605
        %v2638 = vadd.f32 %v2574, %v2606
        %v2639 = vadd.f32 %v2575, %v2607
        %v2640 = vadd.f32 %v2576, %v2608
        %v2641 = vadd.f32 %v2577, %v2609
        %v2642 = vadd.f32 %v2578, %v2610
        %v2643 = vadd.f32 %v2579, %v2611
        %v2644 = vadd.f32 %v2580, %v2612
        %v2645 = vadd.f32 %v2581, %v2613
        %v2646 = vadd.f32 %v2582, %v2614
        %v2647 = vadd.f32 %v2583, %v2615
        %v2648 = vadd.f32 %v2584, %v2616
        %v2649 = vadd.f32 %v2585, %v2617
        %v2650 = vadd.f32 %v2586, %v2618
        %v2651 = vadd.f32 %v2587, %v2619
        %v2652 = vadd.f32 %v2588, %v2620
        %v2653 = vadd.f32 %v2589, %v2621
        %v2654 = vmul.f32 %v2542, %v951
        %v2655 = vmul.f32 %v2526, %v952
        %v2656 = vmul.f32 %v2543, %v953
        %v2657 = vmul.f32 %v2527, %v954
        %v2658 = vmul.f32 %v2544, %v955
        %v2659 = vmul.f32 %v2528, %v956
        %v2660 = vmul.f32 %v2545, %v957
        %v2661 = vmul.f32 %v2529, %v958
        %v2662 = vmul.f32 %v2546, %v959
        %v2663 = vmul.f32 %v2530, %v960
        %v2664 = vmul.f32 %v2547, %v961
        %v2665 = vmul.f32 %v2531, %v962
        %v2666 = vmul.f32 %v2548, %v963
        %v2667 = vmul.f32 %v2532, %v964
        %v2668 = vmul.f32 %v2549, %v965
        %v2669 = vmul.f32 %v2533, %v966
        %v2670 = vmul.f32 %v2550, %v967
        %v2671 = vmul.f32 %v2534, %v968
        %v2672 = vmul.f32 %v2551, %v969
        %v2673 = vmul.f32 %v2535, %v970
        %v2674 = vmul.f32 %v2552, %v971
        %v2675 = vmul.f32 %v2536, %v972
        %v2676 = vmul.f32 %v2553, %v973
        %v2677 = vmul.f32 %v2537, %v974
        %v2678 = vmul.f32 %v2554, %v975
        %v2679 = vmul.f32 %v2538, %v976
        %v2680 = vmul.f32 %v2555, %v977
        %v2681 = vmul.f32 %v2539, %v978
        %v2682 = vmul.f32 %v2556, %v979
        %v2683 = vmul.f32 %v2540, %v980
        %v2684 = vmul.f32 %v2557, %v981
        %v2685 = vmul.f32 %v2541, %v982
        %v2686 = vadd.f32 %v2622, %v2654
        %v2687 = vadd.f32 %v2623, %v2655
        %v2688 = vadd.f32 %v2624, %v2656
        %v2689 = vadd.f32 %v2625, %v2657
        %v2690 = vadd.f32 %v2626, %v2658
        %v2691 = vadd.f32 %v2627, %v2659
        %v2692 = vadd.f32 %v2628, %v2660
        %v2693 = vadd.f32 %v2629, %v2661
        %v2694 = vadd.f32 %v2630, %v2662
        %v2695 = vadd.f32 %v2631, %v2663
        %v2696 = vadd.f32 %v2632, %v2664
        %v2697 = vadd.f32 %v2633, %v2665
        %v2698 = vadd.f32 %v2634, %v2666
        %v2699 = vadd.f32 %v2635, %v2667
        %v2700 = vadd.f32 %v2636, %v2668
        %v2701 = vadd.f32 %v2637, %v2669
        %v2702 = vadd.f32 %v2638, %v2670
        %v2703 = vadd.f32 %v2639, %v2671
        %v2704 = vadd.f32 %v2640, %v2672
        %v2705 = vadd.f32 %v2641, %v2673
        %v2706 = vadd.f32 %v2642, %v2674
        %v2707 = vadd.f32 %v2643, %v2675
        %v2708 = vadd.f32 %v2644, %v2676
        %v2709 = vadd.f32 %v2645, %v2677
        %v2710 = vadd.f32 %v2646, %v2678
        %v2711 = vadd.f32 %v2647, %v2679
        %v2712 = vadd.f32 %v2648, %v2680
        %v2713 = vadd.f32 %v2649, %v2681
        %v2714 = vadd.f32 %v2650, %v2682
        %v2715 = vadd.f32 %v2651, %v2683
        %v2716 = vadd.f32 %v2652, %v2684
        %v2717 = vadd.f32 %v2653, %v2685
        %v2718 = vpack.c.bf16 %v2688, %v2686
        %v2719 = vpack.c.bf16 %v2689, %v2687
        %v2720 = vpack.c.bf16 %v2692, %v2690
        %v2721 = vpack.c.bf16 %v2693, %v2691
        %v2722 = vpack.c.bf16 %v2696, %v2694
        %v2723 = vpack.c.bf16 %v2697, %v2695
        %v2724 = vpack.c.bf16 %v2700, %v2698
        %v2725 = vpack.c.bf16 %v2701, %v2699
        %v2726 = vpack.c.bf16 %v2704, %v2702
        %v2727 = vpack.c.bf16 %v2705, %v2703
        %v2728 = vpack.c.bf16 %v2708, %v2706
        %v2729 = vpack.c.bf16 %v2709, %v2707
        %v2730 = vpack.c.bf16 %v2712, %v2710
        %v2731 = vpack.c.bf16 %v2713, %v2711
        %v2732 = vpack.c.bf16 %v2716, %v2714
        %v2733 = vpack.c.bf16 %v2717, %v2715
        %v2750 = vunpack.c.l.b16 %v2718
        %v2751 = vunpack.c.l.b16 %v2719
        %v2752 = vunpack.c.h.b16 %v2718
        %v2753 = vunpack.c.h.b16 %v2719
        %v2754 = vunpack.c.l.b16 %v2720
        %v2755 = vunpack.c.l.b16 %v2721
        %v2756 = vunpack.c.h.b16 %v2720
        %v2757 = vunpack.c.h.b16 %v2721
        %v2758 = vunpack.c.l.b16 %v2722
        %v2759 = vunpack.c.l.b16 %v2723
        %v2760 = vunpack.c.h.b16 %v2722
        %v2761 = vunpack.c.h.b16 %v2723
        %v2762 = vunpack.c.l.b16 %v2724
        %v2763 = vunpack.c.l.b16 %v2725
        %v2764 = vunpack.c.h.b16 %v2724
        %v2765 = vunpack.c.h.b16 %v2725
        %v2766 = vunpack.c.l.b16 %v2726
        %v2767 = vunpack.c.l.b16 %v2727
        %v2768 = vunpack.c.h.b16 %v2726
        %v2769 = vunpack.c.h.b16 %v2727
        %v2770 = vunpack.c.l.b16 %v2728
        %v2771 = vunpack.c.l.b16 %v2729
        %v2772 = vunpack.c.h.b16 %v2728
        %v2773 = vunpack.c.h.b16 %v2729
        %v2774 = vunpack.c.l.b16 %v2730
        %v2775 = vunpack.c.l.b16 %v2731
        %v2776 = vunpack.c.h.b16 %v2730
        %v2777 = vunpack.c.h.b16 %v2731
        %v2778 = vunpack.c.l.b16 %v2732
        %v2779 = vunpack.c.l.b16 %v2733
        %v2780 = vunpack.c.h.b16 %v2732
        %v2781 = vunpack.c.h.b16 %v2733
        %v2782 = vpack.c.b16 %v2751, %v2750
        %v2783 = vpack.c.b16 %v2753, %v2752
        %v2784 = vpack.c.b16 %v2755, %v2754
        %v2785 = vpack.c.b16 %v2757, %v2756
        %v2786 = vpack.c.b16 %v2759, %v2758
        %v2787 = vpack.c.b16 %v2761, %v2760
        %v2788 = vpack.c.b16 %v2763, %v2762
        %v2789 = vpack.c.b16 %v2765, %v2764
        %v2790 = vpack.c.b16 %v2767, %v2766
        %v2791 = vpack.c.b16 %v2769, %v2768
        %v2792 = vpack.c.b16 %v2771, %v2770
        %v2793 = vpack.c.b16 %v2773, %v2772
        %v2794 = vpack.c.b16 %v2775, %v2774
        %v2795 = vpack.c.b16 %v2777, %v2776
        %v2796 = vpack.c.b16 %v2779, %v2778
        %v2797 = vpack.c.b16 %v2781, %v2780
        %2814 = vst [vmem:[%s574] sm:$0xff] %v2782
        %2815 = vst [vmem:[%s574 + $0x8] sm:$0xff] %v2783
        %2816 = vst [vmem:[%s574 + $0x10] sm:$0xff] %v2784
        %2817 = vst [vmem:[%s574 + $0x18] sm:$0xff] %v2785
        %2818 = vst [vmem:[%s574 + $0x20] sm:$0xff] %v2786
        %2819 = vst [vmem:[%s574 + $0x28] sm:$0xff] %v2787
        %2820 = vst [vmem:[%s574 + $0x30] sm:$0xff] %v2788
        %2821 = vst [vmem:[%s574 + $0x38] sm:$0xff] %v2789
        %2822 = vst [vmem:[%s574 + $0x40] sm:$0xff] %v2790
        %2823 = vst [vmem:[%s574 + $0x48] sm:$0xff] %v2791
        %2824 = vst [vmem:[%s574 + $0x50] sm:$0xff] %v2792
        %2825 = vst [vmem:[%s574 + $0x58] sm:$0xff] %v2793
        %2826 = vst [vmem:[%s574 + $0x60] sm:$0xff] %v2794
        %2827 = vst [vmem:[%s574 + $0x68] sm:$0xff] %v2795
        %2828 = vst [vmem:[%s574 + $0x70] sm:$0xff] %v2796
        %2829 = vst [vmem:[%s574 + $0x78] sm:$0xff] %v2797
        %v2830 = vpack.c.bf16 %v1824, %v1820
        %v2831 = vpack.c.bf16 %v1826, %v1822
        %v2832 = vpack.c.bf16 %v1834, %v1830
        %v2833 = vpack.c.bf16 %v1836, %v1832
        %v2834 = vpack.c.bf16 %v1844, %v1840
        %v2835 = vpack.c.bf16 %v1846, %v1842
        %v2836 = vpack.c.bf16 %v1854, %v1850
        %v2837 = vpack.c.bf16 %v1856, %v1852
        %v2838 = vpack.c.bf16 %v1864, %v1860
        %v2839 = vpack.c.bf16 %v1866, %v1862
        %v2840 = vpack.c.bf16 %v1874, %v1870
        %v2841 = vpack.c.bf16 %v1876, %v1872
        %v2842 = vpack.c.bf16 %v1884, %v1880
        %v2843 = vpack.c.bf16 %v1886, %v1882
        %v2844 = vpack.c.bf16 %v1894, %v1890
        %v2845 = vpack.c.bf16 %v1896, %v1892
        %v2862 = vunpack.c.l.b16 %v2830
        %v2863 = vunpack.c.l.b16 %v2831
        %v2864 = vunpack.c.h.b16 %v2830
        %v2865 = vunpack.c.h.b16 %v2831
        %v2866 = vunpack.c.l.b16 %v2832
        %v2867 = vunpack.c.l.b16 %v2833
        %v2868 = vunpack.c.h.b16 %v2832
        %v2869 = vunpack.c.h.b16 %v2833
        %v2870 = vunpack.c.l.b16 %v2834
        %v2871 = vunpack.c.l.b16 %v2835
        %v2872 = vunpack.c.h.b16 %v2834
        %v2873 = vunpack.c.h.b16 %v2835
        %v2874 = vunpack.c.l.b16 %v2836
        %v2875 = vunpack.c.l.b16 %v2837
        %v2876 = vunpack.c.h.b16 %v2836
        %v2877 = vunpack.c.h.b16 %v2837
        %v2878 = vunpack.c.l.b16 %v2838
        %v2879 = vunpack.c.l.b16 %v2839
        %v2880 = vunpack.c.h.b16 %v2838
        %v2881 = vunpack.c.h.b16 %v2839
        %v2882 = vunpack.c.l.b16 %v2840
        %v2883 = vunpack.c.l.b16 %v2841
        %v2884 = vunpack.c.h.b16 %v2840
        %v2885 = vunpack.c.h.b16 %v2841
        %v2886 = vunpack.c.l.b16 %v2842
        %v2887 = vunpack.c.l.b16 %v2843
        %v2888 = vunpack.c.h.b16 %v2842
        %v2889 = vunpack.c.h.b16 %v2843
        %v2890 = vunpack.c.l.b16 %v2844
        %v2891 = vunpack.c.l.b16 %v2845
        %v2892 = vunpack.c.h.b16 %v2844
        %v2893 = vunpack.c.h.b16 %v2845
        %v2894 = vpack.c.b16 %v2863, %v2862
        %v2895 = vpack.c.b16 %v2865, %v2864
        %v2896 = vpack.c.b16 %v2867, %v2866
        %v2897 = vpack.c.b16 %v2869, %v2868
        %v2898 = vpack.c.b16 %v2871, %v2870
        %v2899 = vpack.c.b16 %v2873, %v2872
        %v2900 = vpack.c.b16 %v2875, %v2874
        %v2901 = vpack.c.b16 %v2877, %v2876
        %v2902 = vpack.c.b16 %v2879, %v2878
        %v2903 = vpack.c.b16 %v2881, %v2880
        %v2904 = vpack.c.b16 %v2883, %v2882
        %v2905 = vpack.c.b16 %v2885, %v2884
        %v2906 = vpack.c.b16 %v2887, %v2886
        %v2907 = vpack.c.b16 %v2889, %v2888
        %v2908 = vpack.c.b16 %v2891, %v2890
        %v2909 = vpack.c.b16 %v2893, %v2892
        %2926 = vst [vmem:[%s581] sm:$0xff] %v2894
        %2927 = vst [vmem:[%s581 + $0x8] sm:$0xff] %v2895
        %2928 = vst [vmem:[%s581 + $0x10] sm:$0xff] %v2896
        %2929 = vst [vmem:[%s581 + $0x18] sm:$0xff] %v2897
        %2930 = vst [vmem:[%s581 + $0x20] sm:$0xff] %v2898
        %2931 = vst [vmem:[%s581 + $0x28] sm:$0xff] %v2899
        %2932 = vst [vmem:[%s581 + $0x30] sm:$0xff] %v2900
        %2933 = vst [vmem:[%s581 + $0x38] sm:$0xff] %v2901
        %2934 = vst [vmem:[%s581 + $0x40] sm:$0xff] %v2902
        %2935 = vst [vmem:[%s581 + $0x48] sm:$0xff] %v2903
        %2936 = vst [vmem:[%s581 + $0x50] sm:$0xff] %v2904
        %2937 = vst [vmem:[%s581 + $0x58] sm:$0xff] %v2905
        %2938 = vst [vmem:[%s581 + $0x60] sm:$0xff] %v2906
        %2939 = vst [vmem:[%s581 + $0x68] sm:$0xff] %v2907
        %2940 = vst [vmem:[%s581 + $0x70] sm:$0xff] %v2908
        %2941 = vst [vmem:[%s581 + $0x78] sm:$0xff] %v2909
        %s2942 = sand.u32 %s276, 1
        %s2943 = scalar_lea.sflag [#allocation5], %s2942
        %s2944 = sand.u32 %s276, 1
        %s2945 = smul.addr %s2944, 128
        %s2946 = scalar_lea.vmem [#allocation15], %s2945
        %s2947 = sand.u32 %s34, 1
        %s2948 = scalar_lea.sflag [#allocation17], %s2947
        %s2949 = sand.u32 %s306, 1
        %s2950 = smul.addr %s2949, 128
        %s2951 = scalar_lea.vmem [#allocation16], %s2950
        %s2952 = sand.u32 %s34, 1
        %s2953 = scalar_lea.sflag [#allocation17], %s2952
        %s2954 = sand.u32 %s336, 1
        %s2955 = smul.addr %s2954, 128
        %s2956 = scalar_lea.vmem [#allocation18], %s2955
        // Predicated region
        $region85: #{tpu_custom_call.1} parent=51 // pred_check
          %p2957 = pneg %p286
        $region86: #{tpu_custom_call.1} parent=51 // pred_check_branch
          %2959 = sbr.rel (%p2957) target = $region88
        $region87: #{tpu_custom_call.1} parent=51 // pred_region
          %s2960 = smul.u32 16, %s40
          %s2961 = smul.u32 2, %s41
          %s2963 = ssub.s32 2048, 2048
          %2964 = vsyncadd %s2943, %s2963
          %s2965 = smul.addr %s2960, 2
          %s2966 = sadd.s32 %s2961, %s2965
          %s2967 = smul.addr %s39, 32
          %s2968 = sadd.s32 %s2966, %s2967
          %s2969 = smul.addr %s2968, 64
          %s2970 = scalar_lea.hbm %s8, %s2969
          %s2971 = sshll.u32 %s2946, 4
          %s2972 = int_to_ptr.vmem [resolvable:$true] %s2971
          %2977 = dma.vmem_to_hbm [thread:$0]  %s2972, 2048, %s2970, %s2943, 128, 128, 8
        $region88: #{tpu_custom_call.1} parent=51 // pred_fallthru
          _
        // Predicated region
        $region89: #{tpu_custom_call.1} parent=51 // pred_check
          %p2978 = pneg %p316
        $region90: #{tpu_custom_call.1} parent=51 // pred_check_branch
          %2980 = sbr.rel (%p2978) target = $region92
        $region91: #{tpu_custom_call.1} parent=51 // pred_region
          %s2981 = smul.u32 16, %s40
          %s2982 = smul.u32 2, %s41
          %s2984 = ssub.s32 2048, 2048
          %2985 = vsyncadd %s2948, %s2984
          %s2986 = smul.addr %s2981, 2
          %s2987 = sadd.s32 %s2982, %s2986
          %s2988 = smul.addr %s39, 32
          %s2989 = sadd.s32 %s2987, %s2988
          %s2990 = smul.addr %s2989, 64
          %s2991 = scalar_lea.hbm %s9, %s2990
          %s2992 = sshll.u32 %s2951, 4
          %s2993 = int_to_ptr.vmem [resolvable:$true] %s2992
          %2998 = dma.vmem_to_hbm [thread:$0]  %s2993, 2048, %s2991, %s2948, 128, 128, 8
        $region92: #{tpu_custom_call.1} parent=51 // pred_fallthru
          _
        // Predicated region
        $region93: #{tpu_custom_call.1} parent=51 // pred_check
          %p2999 = pneg %p346
        $region94: #{tpu_custom_call.1} parent=51 // pred_check_branch
          %3001 = sbr.rel (%p2999) target = $region96
        $region95: #{tpu_custom_call.1} parent=51 // pred_region
          %s3002 = smul.u32 16, %s40
          %s3003 = smul.u32 2, %s41
          %s3005 = ssub.s32 2048, 2048
          %3006 = vsyncadd %s2953, %s3005
          %s3007 = smul.addr %s3002, 2
          %s3008 = sadd.s32 %s3003, %s3007
          %s3009 = smul.addr %s39, 32
          %s3010 = sadd.s32 %s3008, %s3009
          %s3011 = smul.addr %s3010, 64
          %s3012 = scalar_lea.hbm %s10, %s3011
          %s3013 = sshll.u32 %s2956, 4
          %s3014 = int_to_ptr.vmem [resolvable:$true] %s3013
          %3019 = dma.vmem_to_hbm [thread:$0]  %s3014, 2048, %s3012, %s2953, 128, 128, 8
        $region96: #{tpu_custom_call.1} parent=51 // pred_fallthru
          _
      $region52: #{tpu_custom_call.1} parent=5 // pred_fallthru
        _
      %p3020 = scmp.le.s32.totalorder 2, %s29
      // Predicated region
      $region97: #{tpu_custom_call.1} parent=5 // pred_check
        %p3021 = pneg %p3020
      $region98: #{tpu_custom_call.1} parent=5 // pred_check_branch
        %3023 = sbr.rel (%p3021) target = $region100
      $region99: #{tpu_custom_call.1} parent=5 // pred_region
        %s3024 = ssub.s32 %s29, 2
        // Predicated region
        $region101: #{tpu_custom_call.1} parent=99 // pred_check
          %p3025 = pneg %p292
        $region102: #{tpu_custom_call.1} parent=99 // pred_check_branch
          %3027 = sbr.rel (%p3025) target = $region104
        $region103: #{tpu_custom_call.1} parent=99 // pred_region
          %s3028 = sand.u32 %s277, 1
          %s3029 = scalar_lea.sflag [#allocation5], %s3028
          %s3030 = sand.u32 %s277, 1
          %s3031 = smul.addr %s3030, 128
          %s3032 = scalar_lea.vmem [#allocation15], %s3031
          %3033 = dma.done %s3029, 2048
        $region104: #{tpu_custom_call.1} parent=99 // pred_fallthru
          _
        // Predicated region
        $region105: #{tpu_custom_call.1} parent=99 // pred_check
          %p3034 = pneg %p322
        $region106: #{tpu_custom_call.1} parent=99 // pred_check_branch
          %3036 = sbr.rel (%p3034) target = $region108
        $region107: #{tpu_custom_call.1} parent=99 // pred_region
          %s3037 = sand.u32 %s35, 1
          %s3038 = scalar_lea.sflag [#allocation17], %s3037
          %s3039 = sand.u32 %s307, 1
          %s3040 = smul.addr %s3039, 128
          %s3041 = scalar_lea.vmem [#allocation16], %s3040
          %3042 = dma.done %s3038, 2048
        $region108: #{tpu_custom_call.1} parent=99 // pred_fallthru
          _
        // Predicated region
        $region109: #{tpu_custom_call.1} parent=99 // pred_check
          %p3043 = pneg %p352
        $region110: #{tpu_custom_call.1} parent=99 // pred_check_branch
          %3045 = sbr.rel (%p3043) target = $region112
        $region111: #{tpu_custom_call.1} parent=99 // pred_region
          %s3046 = sand.u32 %s35, 1
          %s3047 = scalar_lea.sflag [#allocation17], %s3046
          %s3048 = sand.u32 %s337, 1
          %s3049 = smul.addr %s3048, 128
          %s3050 = scalar_lea.vmem [#allocation18], %s3049
          %3051 = dma.done %s3047, 2048
        $region112: #{tpu_custom_call.1} parent=99 // pred_fallthru
          _
      $region100: #{tpu_custom_call.1} parent=5 // pred_fallthru
        _
    $region6: #{tpu_custom_call.1} parent=1 // loop_footer
      %s33 = sadd.s32 1, %s29
    $region7: #{tpu_custom_call.1} parent=1 // loop_footer_branch
      %28 = sbr.rel target = $region3
    $region8: #{tpu_custom_call.1} parent=1 // loop_exit
      _
    %3052 = vsyncpa [#allocation4], 1
    %s3053 = scalar_lea.sflag [#allocation4], 1
    %3054 = vsyncpa %s3053, 1
    %3055 = vsyncpa [#allocation7], 1
    %3056 = vsyncpa [#allocation10], 1
    %3057 = vsyncpa [#allocation13], 1
    %3058 = vsyncpa [#allocation5], 1
    %s3059 = scalar_lea.sflag [#allocation5], 1
    %3060 = vsyncpa %s3059, 1
    %3061 = vsyncpa [#allocation17], 1
    %s3062 = scalar_lea.sflag [#allocation17], 1
    %3063 = vsyncpa %s3062, 1

</llo_original>
